<compile_context>
chip_gen: v5e
topology: v5e:2x2
jax: 0.10.0
libtpu: 0.0.40
codegen_flags: <defaults>
</compile_context>

<pallas_src>
import functools
import math

import jax
import jax.numpy as jnp
from jax.experimental import pallas as pl
from jax.experimental.pallas import tpu as pltpu


def _round_up(a, b):
    return ((a + b - 1) // b) * b


# ---------------------------------------------------------------------------
# Pallas kernel: fused im2col + GEMM (+ optional bias) for one
# (image, OC tile, OH tile) grid step.
# ---------------------------------------------------------------------------
def _conv_kernel(*refs, KH, KW, C, dil, t_oh, OW, tn, add_bias, x_tiled):
    # refs (in order): x_ref  (Hblk, Wp, C)  bf16  whole padded image, or
    #                          (t_oh, OW, C) bf16  when x_tiled (1x1 conv),
    #                  w_ref  (KH*KW*C, tn)  bf16,
    #                  [b_ref (1, tn) f32    if add_bias],
    #                  o_ref  (t_m, tn)      f32
    if add_bias:
        x_ref, w_ref, b_ref, o_ref = refs
    else:
        x_ref, w_ref, o_ref = refs
        b_ref = None

    t_m = t_oh * OW

    if x_tiled:
        oh0 = 0                              # ref already IS the OH tile
    else:
        it = pl.program_id(2)                # OH tile index
        oh0 = it * t_oh                      # first output row of this tile
        pow2 = t_oh & (-t_oh)                # largest power of two dividing t_oh
        if pow2 > 1:
            oh0 = pl.multiple_of(oh0, pow2)  # alignment hint for pl.ds start

    # Bias folded into the accumulator init (saves one (t_m, tn) VPU pass).
    if add_bias:
        acc = jnp.broadcast_to(b_ref[...], (t_m, tn)).astype(jnp.float32)
    else:
        acc = jnp.zeros((t_m, tn), jnp.float32)

    # K reduction: KH*KW shifted activation slabs, each contracted over C on
    # the MXU with f32 accumulation.  Static python loop -> fully unrolled.
    for i in range(KH):
        for j in range(KW):
            sub = x_ref[pl.ds(oh0 + i * dil, t_oh), pl.ds(j * dil, OW), :]
            a = sub.reshape(t_m, C)                       # fused im2col (VMEM)
            w_ij = w_ref[(i * KW + j) * C:(i * KW + j + 1) * C, :]
            acc = acc + jnp.dot(a, w_ij, preferred_element_type=jnp.float32)

    o_ref[...] = acc.astype(o_ref.dtype)


def _conv_pallas(xp, w_mat, bias_vec, *, KH, KW, dil, OH, OW, OC_pad,
                 out_dtype=jnp.float32):
    """xp: (N, Hblk, Wp, C) bf16 padded NHWC activations (or patch tensor with
    KH=KW=1).  w_mat: (KH*KW*C, OC_pad) bf16.  bias_vec: (1, OC_pad) f32 or
    None.  Returns (N, OH_pad*OW, OC_pad) with OH_pad a whole number of tiles.
    """
    N, Hblk, Wp, C = xp.shape
    K = KH * KW * C
    assert w_mat.shape == (K, OC_pad)

    # --- tile selection ------------------------------------------------------
    tn = 256 if OC_pad % 256 == 0 else 128              # lane-dense OC tile
    sub_mult = 8 // math.gcd(OW, 8)                     # keep t_oh*OW % 8 == 0
    t_oh = max(1, min(OH, max(1, 512 // max(OW, 1))))   # target ~512 GEMM rows
    t_oh = _round_up(t_oh, sub_mult)
    n_oh = pl.cdiv(OH, t_oh)
    OH_pad = n_oh * t_oh
    t_m = t_oh * OW

    # 1x1 conv (patch-tensor fallback): no row overlap between OH tiles, so
    # the activation block can be tiled along OH as well -> less VMEM per
    # step and DMA/compute overlap across the fast OH grid axis.
    x_tiled = (KH == 1 and KW == 1 and dil == 1)

    # Pad the image height so padded OH tiles never read out of bounds.
    need_h = OH_pad + (KH - 1) * dil
    if need_h > Hblk:
        xp = jnp.pad(xp, ((0, 0), (0, need_h - Hblk), (0, 0), (0, 0)))
        Hblk = need_h

    add_bias = bias_vec is not None
    grid = (N, OC_pad // tn, n_oh)

    if x_tiled:
        x_spec = pl.BlockSpec((None, t_oh, OW, C), lambda n, j, i: (n, i, 0, 0))
    else:
        # Whole padded image; index depends only on n, so it is DMA'd once per
        # image and stays resident across the inner (OC, OH) grid axes.
        x_spec = pl.BlockSpec((None, Hblk, Wp, C), lambda n, j, i: (n, 0, 0, 0))

    in_specs = [
        x_spec,
        # Full-K, OC-tiled weight slab (re-used across the fast OH axis).
        pl.BlockSpec((K, tn), lambda n, j, i: (0, j)),
    ]
    inputs = [xp, w_mat]
    if add_bias:
        in_specs.append(pl.BlockSpec((1, tn), lambda n, j, i: (0, j)))
        inputs.append(bias_vec)

    kernel = functools.partial(
        _conv_kernel, KH=KH, KW=KW, C=C, dil=dil, t_oh=t_oh, OW=OW, tn=tn,
        add_bias=add_bias, x_tiled=x_tiled)

    out_bytes = N * OH_pad * OW * OC_pad * 4
    cost = pl.CostEstimate(
        flops=int(2 * N * OH_pad * OW * K * OC_pad),
        transcendentals=0,
        bytes_accessed=int(xp.size * 2 + N * w_mat.size * 2
                           + (bias_vec.size * 4 if add_bias else 0)
                           + out_bytes))

    return pl.pallas_call(
        kernel,
        out_shape=jax.ShapeDtypeStruct((N, OH_pad * OW, OC_pad), out_dtype),
        grid_spec=pltpu.PrefetchScalarGridSpec(
            num_scalar_prefetch=0,
            grid=grid,
            in_specs=in_specs,
            out_specs=pl.BlockSpec((None, t_m, tn), lambda n, j, i: (n, i, j)),
        ),
        compiler_params=pltpu.CompilerParams(
            dimension_semantics=("parallel", "parallel", "parallel"),
            vmem_limit_bytes=64 * 1024 * 1024),
        cost_estimate=cost,
    )(*inputs)


# ---------------------------------------------------------------------------
# JAX glue: stride>1 fallback patch extraction (bf16, NHWC, no transpose).
# ---------------------------------------------------------------------------
def _extract_patches(x_nhwc, KH, KW, stride, padding, dilation):
    """(N, H, W, C) -> (N, OH, OW, KH*KW*C), column order (kh, kw, c)."""
    N, H, W, C = x_nhwc.shape
    xp = jnp.pad(x_nhwc, ((0, 0), (padding, padding), (padding, padding), (0, 0)))
    OH = (H + 2 * padding - dilation * (KH - 1) - 1) // stride + 1
    OW = (W + 2 * padding - dilation * (KW - 1) - 1) // stride + 1
    slabs = []
    for i in range(KH):
        for j in range(KW):
            di, dj = i * dilation, j * dilation
            slabs.append(xp[:, di:di + stride * (OH - 1) + 1:stride,
                            dj:dj + stride * (OW - 1) + 1:stride, :])
    return jnp.concatenate(slabs, axis=-1), OH, OW


class Conv2dPallas:
    """Single-device equivalent of axonn.intra_layer.Conv2d (forward only)."""

    def __init__(self, in_channels, out_channels, kernel_size, *,
                 bias=True, skip_bias_add=False,
                 stride=1, padding=0, dilation=1, groups=1, key=None):
        assert groups == 1, "groups != 1 not implemented"
        # TODO(synk): tensor-parallel Drop/Gather/AllReduce/ForwardGather are
        # identities at world size 1; multi-chip RDMA variants not implemented.
        self.in_channels = in_channels
        self.out_channels = out_channels
        self.kernel_size = kernel_size
        self.stride = stride
        self.padding = padding
        self.dilation = dilation
        self.skip_bias_add = skip_bias_add

        key = jax.random.PRNGKey(0) if key is None else key
        # kaiming_uniform_(a=sqrt(5)): bound = 1 / sqrt(fan_in)
        fan_in = in_channels * kernel_size * kernel_size
        bound = 1.0 / math.sqrt(fan_in)
        self.weight = jax.random.uniform(
            key, (out_channels, in_channels, kernel_size, kernel_size),
            dtype=jnp.float32, minval=-bound, maxval=bound)
        self.bias = jnp.zeros((out_channels,), jnp.float32) if bias else None

    def __call__(self, x, out_layout="NCHW"):
        N, C, H, W = x.shape
        assert C == self.in_channels
        KH = KW = self.kernel_size
        OC = self.out_channels
        s, p, d = self.stride, self.padding, self.dilation
        OC_pad = _round_up(OC, 128)

        # NCHW -> NHWC (channels minor = GEMM contraction minor), bf16 inputs.
        x_nhwc = jnp.transpose(x, (0, 2, 3, 1))
        w4 = jnp.transpose(self.weight, (2, 3, 1, 0))       # (KH, KW, C, OC)

        if s == 1:
            # Fused-im2col path: only the (padded) activations hit HBM.
            C_pad = _round_up(C, 8)
            xp = jnp.pad(x_nhwc, ((0, 0), (p, p), (p, p), (0, C_pad - C)))
            xp = xp.astype(jnp.bfloat16)
            OH = (H + 2 * p - d * (KH - 1) - 1) // 1 + 1
            OW = (W + 2 * p - d * (KW - 1) - 1) // 1 + 1
            kh, kw, de = KH, KW, d
            w_mat = jnp.pad(w4, ((0, 0), (0, 0), (0, C_pad - C),
                                 (0, OC_pad - OC)))
            w_mat = w_mat.reshape(KH * KW * C_pad, OC_pad).astype(jnp.bfloat16)
        else:
            # TODO(synk): strided convs fall back to JAX-side patch extraction
            # feeding the same kernel as a 1x1 conv; fusing strided slab
            # gathers needs manual DMA (memory_space=pl.ANY + make_async_copy).
            patches, OH, OW = _extract_patches(x_nhwc, KH, KW, s, p, d)
            K = KH * KW * C
            K_pad = _round_up(K, 8)
            xp = jnp.pad(patches, ((0, 0), (0, 0), (0, 0), (0, K_pad - K)))
            xp = xp.astype(jnp.bfloat16)
            kh, kw, de = 1, 1, 1
            w_mat = jnp.pad(w4.reshape(K, OC),
                            ((0, K_pad - K), (0, OC_pad - OC)))
            w_mat = w_mat.astype(jnp.bfloat16)

        if self.bias is not None and not self.skip_bias_add:
            bias_vec = jnp.pad(self.bias, (0, OC_pad - OC)).reshape(1, OC_pad)
            bias_vec = bias_vec.astype(jnp.float32)
        else:
            bias_vec = None       # bias add is compiled out of the kernel

        out = _conv_pallas(xp, w_mat, bias_vec, KH=kh, KW=kw, dil=de,
                           OH=OH, OW=OW, OC_pad=OC_pad,
                           out_dtype=jnp.float32)
        OH_pad = out.shape[1] // OW
        h = out.reshape(N, OH_pad, OW, OC_pad)[:, :OH, :, :OC]   # NHWC
        if out_layout == "NCHW":
            # NHWC consumers can pass out_layout="NHWC" and skip this pass.
            h = jnp.transpose(h, (0, 3, 1, 2))

        if self.bias is not None and self.skip_bias_add:
            return h, self.bias
        return h


# ---------------------------------------------------------------------------
# Demo / self-check
# ---------------------------------------------------------------------------
if __name__ == "__main__":
    key = jax.random.PRNGKey(0)
    kx, kw, kb = jax.random.split(key, 3)

    N, C, H, W = 2, 4, 16, 16
    OC, KS = 8, 3
    stride, padding, dilation = 1, 1, 1

    x = jax.random.normal(kx, (N, C, H, W), jnp.float32)

    conv = Conv2dPallas(C, OC, KS, bias=True, stride=stride,
                        padding=padding, dilation=dilation, key=kw)
    # non-zero bias so the in-kernel bias path is actually exercised
    conv.bias = 0.1 * jax.random.normal(kb, (OC,), jnp.float32)

    h = jax.block_until_ready(conv(x))

    # Reference with the same bf16 input/weight quantization, f32 accumulation.
    xq = x.astype(jnp.bfloat16).astype(jnp.float32)
    wq = conv.weight.astype(jnp.bfloat16).astype(jnp.float32)
    ref = jax.lax.conv_general_dilated(
        xq, wq,
        window_strides=(stride, stride),
        padding=[(padding, padding), (padding, padding)],
        rhs_dilation=(dilation, dilation),
        dimension_numbers=("NCHW", "OIHW", "NCHW"),
    ) + conv.bias.reshape(1, -1, 1, 1)

    assert h.shape == (N, OC, H, W), h.shape
    err = float(jnp.max(jnp.abs(h - ref)))
    assert err < 2e-3, err
    print("KERNEL_OK")
</pallas_src>

<mosaic_0001>
module attributes {stable_mosaic.version = 11 : i64} {
  func.func @_conv_kernel(%arg0: i32, %arg1: i32, %arg2: i32, %arg3: memref<1x18x18x8xbf16, #tpu.memory_space<vmem>>, %arg4: memref<72x128xbf16, #tpu.memory_space<vmem>>, %arg5: memref<1x128xf32, #tpu.memory_space<vmem>>, %arg6: memref<1x256x128xf32, #tpu.memory_space<vmem>>) attributes {dimension_semantics = [#tpu.dimension_semantics<parallel>, #tpu.dimension_semantics<parallel>, #tpu.dimension_semantics<parallel>], iteration_bounds = array<i64: 2, 1, 1>, scalar_prefetch = 0 : i64, scratch_operands = 0 : i64, tpu.core_type = #tpu.core_type<tc>, window_params = [{transform_indices = @transform_0, window_bounds = array<i64: 1, 18, 18, 8>}, {transform_indices = @transform_1, window_bounds = array<i64: 72, 128>}, {transform_indices = @transform_2, window_bounds = array<i64: 1, 128>}, {transform_indices = @transform_3, window_bounds = array<i64: 1, 256, 128>}]} {
    %c16_i32 = arith.constant 16 : i32
    %0 = arith.muli %arg2, %c16_i32 : i32
    %1 = tpu.assume_multiple %0, 16 : i32
    %c0 = arith.constant 0 : index
    %c0_0 = arith.constant 0 : index
    %2 = vector.load %arg5[%c0, %c0_0] : memref<1x128xf32, #tpu.memory_space<vmem>>, vector<1x128xf32>
    %3 = vector.shape_cast %2 : vector<1x128xf32> to vector<1x128xf32>
    %4 = vector.broadcast %3 : vector<1x128xf32> to vector<256x128xf32>
    %c0_i32 = arith.constant 0 : i32
    %5 = arith.addi %1, %c0_i32 : i32
    %c0_1 = arith.constant 0 : index
    %6 = arith.index_cast %5 : i32 to index
    %c0_2 = arith.constant 0 : index
    %c0_3 = arith.constant 0 : index
    %7 = vector.load %arg3[%c0_1, %6, %c0_2, %c0_3] : memref<1x18x18x8xbf16, #tpu.memory_space<vmem>>, vector<1x16x16x8xbf16>
    %8 = vector.shape_cast %7 : vector<1x16x16x8xbf16> to vector<16x16x8xbf16>
    %9 = vector.shape_cast %8 : vector<16x16x8xbf16> to vector<256x8xbf16>
    %c0_4 = arith.constant 0 : index
    %c0_5 = arith.constant 0 : index
    %10 = vector.load %arg4[%c0_4, %c0_5] : memref<72x128xbf16, #tpu.memory_space<vmem>>, vector<8x128xbf16>
    %cst = arith.constant dense<0.000000e+00> : vector<256x128xf32>
    %11 = tpu.matmul %9, %10, %cst {dimension_numbers = #tpu.dot_dimension_numbers<[1], [0], [0], [1], [0, 0, 1, 1], [], []>} : vector<256x8xbf16>, vector<8x128xbf16>, vector<256x128xf32> -> vector<256x128xf32>
    %12 = arith.addf %4, %11 : vector<256x128xf32>
    %c0_i32_6 = arith.constant 0 : i32
    %13 = arith.addi %1, %c0_i32_6 : i32
    %c0_7 = arith.constant 0 : index
    %14 = arith.index_cast %13 : i32 to index
    %c1 = arith.constant 1 : index
    %c0_8 = arith.constant 0 : index
    %15 = vector.load %arg3[%c0_7, %14, %c1, %c0_8] : memref<1x18x18x8xbf16, #tpu.memory_space<vmem>>, vector<1x16x16x8xbf16>
    %16 = vector.shape_cast %15 : vector<1x16x16x8xbf16> to vector<16x16x8xbf16>
    %17 = vector.shape_cast %16 : vector<16x16x8xbf16> to vector<256x8xbf16>
    %c8 = arith.constant 8 : index
    %c0_9 = arith.constant 0 : index
    %18 = vector.load %arg4[%c8, %c0_9] : memref<72x128xbf16, #tpu.memory_space<vmem>>, vector<8x128xbf16>
    %cst_10 = arith.constant dense<0.000000e+00> : vector<256x128xf32>
    %19 = tpu.matmul %17, %18, %cst_10 {dimension_numbers = #tpu.dot_dimension_numbers<[1], [0], [0], [1], [0, 0, 1, 1], [], []>} : vector<256x8xbf16>, vector<8x128xbf16>, vector<256x128xf32> -> vector<256x128xf32>
    %20 = arith.addf %12, %19 : vector<256x128xf32>
    %c0_i32_11 = arith.constant 0 : i32
    %21 = arith.addi %1, %c0_i32_11 : i32
    %c0_12 = arith.constant 0 : index
    %22 = arith.index_cast %21 : i32 to index
    %c2 = arith.constant 2 : index
    %c0_13 = arith.constant 0 : index
    %23 = vector.load %arg3[%c0_12, %22, %c2, %c0_13] : memref<1x18x18x8xbf16, #tpu.memory_space<vmem>>, vector<1x16x16x8xbf16>
    %24 = vector.shape_cast %23 : vector<1x16x16x8xbf16> to vector<16x16x8xbf16>
    %25 = vector.shape_cast %24 : vector<16x16x8xbf16> to vector<256x8xbf16>
    %c16 = arith.constant 16 : index
    %c0_14 = arith.constant 0 : index
    %26 = vector.load %arg4[%c16, %c0_14] : memref<72x128xbf16, #tpu.memory_space<vmem>>, vector<8x128xbf16>
    %cst_15 = arith.constant dense<0.000000e+00> : vector<256x128xf32>
    %27 = tpu.matmul %25, %26, %cst_15 {dimension_numbers = #tpu.dot_dimension_numbers<[1], [0], [0], [1], [0, 0, 1, 1], [], []>} : vector<256x8xbf16>, vector<8x128xbf16>, vector<256x128xf32> -> vector<256x128xf32>
    %28 = arith.addf %20, %27 : vector<256x128xf32>
    %c1_i32 = arith.constant 1 : i32
    %29 = arith.addi %1, %c1_i32 : i32
    %c0_16 = arith.constant 0 : index
    %30 = arith.index_cast %29 : i32 to index
    %c0_17 = arith.constant 0 : index
    %c0_18 = arith.constant 0 : index
    %31 = vector.load %arg3[%c0_16, %30, %c0_17, %c0_18] : memref<1x18x18x8xbf16, #tpu.memory_space<vmem>>, vector<1x16x16x8xbf16>
    %32 = vector.shape_cast %31 : vector<1x16x16x8xbf16> to vector<16x16x8xbf16>
    %33 = vector.shape_cast %32 : vector<16x16x8xbf16> to vector<256x8xbf16>
    %c24 = arith.constant 24 : index
    %c0_19 = arith.constant 0 : index
    %34 = vector.load %arg4[%c24, %c0_19] : memref<72x128xbf16, #tpu.memory_space<vmem>>, vector<8x128xbf16>
    %cst_20 = arith.constant dense<0.000000e+00> : vector<256x128xf32>
    %35 = tpu.matmul %33, %34, %cst_20 {dimension_numbers = #tpu.dot_dimension_numbers<[1], [0], [0], [1], [0, 0, 1, 1], [], []>} : vector<256x8xbf16>, vector<8x128xbf16>, vector<256x128xf32> -> vector<256x128xf32>
    %36 = arith.addf %28, %35 : vector<256x128xf32>
    %c1_i32_21 = arith.constant 1 : i32
    %37 = arith.addi %1, %c1_i32_21 : i32
    %c0_22 = arith.constant 0 : index
    %38 = arith.index_cast %37 : i32 to index
    %c1_23 = arith.constant 1 : index
    %c0_24 = arith.constant 0 : index
    %39 = vector.load %arg3[%c0_22, %38, %c1_23, %c0_24] : memref<1x18x18x8xbf16, #tpu.memory_space<vmem>>, vector<1x16x16x8xbf16>
    %40 = vector.shape_cast %39 : vector<1x16x16x8xbf16> to vector<16x16x8xbf16>
    %41 = vector.shape_cast %40 : vector<16x16x8xbf16> to vector<256x8xbf16>
    %c32 = arith.constant 32 : index
    %c0_25 = arith.constant 0 : index
    %42 = vector.load %arg4[%c32, %c0_25] : memref<72x128xbf16, #tpu.memory_space<vmem>>, vector<8x128xbf16>
    %cst_26 = arith.constant dense<0.000000e+00> : vector<256x128xf32>
    %43 = tpu.matmul %41, %42, %cst_26 {dimension_numbers = #tpu.dot_dimension_numbers<[1], [0], [0], [1], [0, 0, 1, 1], [], []>} : vector<256x8xbf16>, vector<8x128xbf16>, vector<256x128xf32> -> vector<256x128xf32>
    %44 = arith.addf %36, %43 : vector<256x128xf32>
    %c1_i32_27 = arith.constant 1 : i32
    %45 = arith.addi %1, %c1_i32_27 : i32
    %c0_28 = arith.constant 0 : index
    %46 = arith.index_cast %45 : i32 to index
    %c2_29 = arith.constant 2 : index
    %c0_30 = arith.constant 0 : index
    %47 = vector.load %arg3[%c0_28, %46, %c2_29, %c0_30] : memref<1x18x18x8xbf16, #tpu.memory_space<vmem>>, vector<1x16x16x8xbf16>
    %48 = vector.shape_cast %47 : vector<1x16x16x8xbf16> to vector<16x16x8xbf16>
    %49 = vector.shape_cast %48 : vector<16x16x8xbf16> to vector<256x8xbf16>
    %c40 = arith.constant 40 : index
    %c0_31 = arith.constant 0 : index
    %50 = vector.load %arg4[%c40, %c0_31] : memref<72x128xbf16, #tpu.memory_space<vmem>>, vector<8x128xbf16>
    %cst_32 = arith.constant dense<0.000000e+00> : vector<256x128xf32>
    %51 = tpu.matmul %49, %50, %cst_32 {dimension_numbers = #tpu.dot_dimension_numbers<[1], [0], [0], [1], [0, 0, 1, 1], [], []>} : vector<256x8xbf16>, vector<8x128xbf16>, vector<256x128xf32> -> vector<256x128xf32>
    %52 = arith.addf %44, %51 : vector<256x128xf32>
    %c2_i32 = arith.constant 2 : i32
    %53 = arith.addi %1, %c2_i32 : i32
    %c0_33 = arith.constant 0 : index
    %54 = arith.index_cast %53 : i32 to index
    %c0_34 = arith.constant 0 : index
    %c0_35 = arith.constant 0 : index
    %55 = vector.load %arg3[%c0_33, %54, %c0_34, %c0_35] : memref<1x18x18x8xbf16, #tpu.memory_space<vmem>>, vector<1x16x16x8xbf16>
    %56 = vector.shape_cast %55 : vector<1x16x16x8xbf16> to vector<16x16x8xbf16>
    %57 = vector.shape_cast %56 : vector<16x16x8xbf16> to vector<256x8xbf16>
    %c48 = arith.constant 48 : index
    %c0_36 = arith.constant 0 : index
    %58 = vector.load %arg4[%c48, %c0_36] : memref<72x128xbf16, #tpu.memory_space<vmem>>, vector<8x128xbf16>
    %cst_37 = arith.constant dense<0.000000e+00> : vector<256x128xf32>
    %59 = tpu.matmul %57, %58, %cst_37 {dimension_numbers = #tpu.dot_dimension_numbers<[1], [0], [0], [1], [0, 0, 1, 1], [], []>} : vector<256x8xbf16>, vector<8x128xbf16>, vector<256x128xf32> -> vector<256x128xf32>
    %60 = arith.addf %52, %59 : vector<256x128xf32>
    %c2_i32_38 = arith.constant 2 : i32
    %61 = arith.addi %1, %c2_i32_38 : i32
    %c0_39 = arith.constant 0 : index
    %62 = arith.index_cast %61 : i32 to index
    %c1_40 = arith.constant 1 : index
    %c0_41 = arith.constant 0 : index
    %63 = vector.load %arg3[%c0_39, %62, %c1_40, %c0_41] : memref<1x18x18x8xbf16, #tpu.memory_space<vmem>>, vector<1x16x16x8xbf16>
    %64 = vector.shape_cast %63 : vector<1x16x16x8xbf16> to vector<16x16x8xbf16>
    %65 = vector.shape_cast %64 : vector<16x16x8xbf16> to vector<256x8xbf16>
    %c56 = arith.constant 56 : index
    %c0_42 = arith.constant 0 : index
    %66 = vector.load %arg4[%c56, %c0_42] : memref<72x128xbf16, #tpu.memory_space<vmem>>, vector<8x128xbf16>
    %cst_43 = arith.constant dense<0.000000e+00> : vector<256x128xf32>
    %67 = tpu.matmul %65, %66, %cst_43 {dimension_numbers = #tpu.dot_dimension_numbers<[1], [0], [0], [1], [0, 0, 1, 1], [], []>} : vector<256x8xbf16>, vector<8x128xbf16>, vector<256x128xf32> -> vector<256x128xf32>
    %68 = arith.addf %60, %67 : vector<256x128xf32>
    %c2_i32_44 = arith.constant 2 : i32
    %69 = arith.addi %1, %c2_i32_44 : i32
    %c0_45 = arith.constant 0 : index
    %70 = arith.index_cast %69 : i32 to index
    %c2_46 = arith.constant 2 : index
    %c0_47 = arith.constant 0 : index
    %71 = vector.load %arg3[%c0_45, %70, %c2_46, %c0_47] : memref<1x18x18x8xbf16, #tpu.memory_space<vmem>>, vector<1x16x16x8xbf16>
    %72 = vector.shape_cast %71 : vector<1x16x16x8xbf16> to vector<16x16x8xbf16>
    %73 = vector.shape_cast %72 : vector<16x16x8xbf16> to vector<256x8xbf16>
    %c64 = arith.constant 64 : index
    %c0_48 = arith.constant 0 : index
    %74 = vector.load %arg4[%c64, %c0_48] : memref<72x128xbf16, #tpu.memory_space<vmem>>, vector<8x128xbf16>
    %cst_49 = arith.constant dense<0.000000e+00> : vector<256x128xf32>
    %75 = tpu.matmul %73, %74, %cst_49 {dimension_numbers = #tpu.dot_dimension_numbers<[1], [0], [0], [1], [0, 0, 1, 1], [], []>} : vector<256x8xbf16>, vector<8x128xbf16>, vector<256x128xf32> -> vector<256x128xf32>
    %76 = arith.addf %68, %75 : vector<256x128xf32>
    %c0_50 = arith.constant 0 : index
    %c0_51 = arith.constant 0 : index
    %c0_52 = arith.constant 0 : index
    %77 = vector.load %arg6[%c0_50, %c0_51, %c0_52] : memref<1x256x128xf32, #tpu.memory_space<vmem>>, vector<1x256x128xf32>
    %78 = vector.shape_cast %77 : vector<1x256x128xf32> to vector<256x128xf32>
    %79 = vector.shape_cast %76 : vector<256x128xf32> to vector<1x256x128xf32>
    tpu.vector_store %arg6[%c0_50, %c0_51, %c0_52], %79 {strides = array<i32>} : memref<1x256x128xf32, #tpu.memory_space<vmem>>, vector<1x256x128xf32>,
    return
  }
  func.func @transform_0(%arg0: i32, %arg1: i32, %arg2: i32) -> (i32, i32, i32, i32) {
    %c0_i32 = arith.constant 0 : i32
    %c0_i32_0 = arith.constant 0 : i32
    %c0_i32_1 = arith.constant 0 : i32
    %c0_i32_2 = arith.constant 0 : i32
    return %arg0, %c0_i32, %c0_i32_0, %c0_i32_1 : i32, i32, i32, i32
  }
  func.func @transform_1(%arg0: i32, %arg1: i32, %arg2: i32) -> (i32, i32) {
    %c0_i32 = arith.constant 0 : i32
    %c0_i32_0 = arith.constant 0 : i32
    return %c0_i32, %arg1 : i32, i32
  }
  func.func @transform_2(%arg0: i32, %arg1: i32, %arg2: i32) -> (i32, i32) {
    %c0_i32 = arith.constant 0 : i32
    %c0_i32_0 = arith.constant 0 : i32
    return %c0_i32, %arg1 : i32, i32
  }
  func.func @transform_3(%arg0: i32, %arg1: i32, %arg2: i32) -> (i32, i32, i32) {
    %c0_i32 = arith.constant 0 : i32
    return %arg0, %arg2, %arg1 : i32, i32, i32
  }
}

</mosaic_0001>

<llo_original>
// kernel: tpu_custom_call.1
$region0: #{tpu_custom_call.1}
  #allocation0 [shape = 'u32[]', space=smem, size = 0x4, offset = 0x4, fixed_abs, tag = 'smem constant byte address 0x4 - core index']
  #allocation1 [shape = 'u32[72,128]{1,0:T(1,128)}', space=vmem, size = 0x9000, scoped, tag = 'internal scratch']
  %s0 = inlined_call_operand.vmem [shape: bf16[2,18,18,8], index: 0, kind: input, shape index: {}]
  %s1 = inlined_call_operand.vmem [shape: bf16[72,128], index: 1, kind: input, shape index: {}]
  %s2 = inlined_call_operand.vmem [shape: f32[1,128], index: 2, kind: input, shape index: {}]
  %s3 = inlined_call_operand.hbm [shape: f32[2,256,128], index: 3, kind: output, shape index: {}]
  %s4 = sld [smem:[#allocation0]]
  $region45: #{tpu_custom_call.1} parent=0
    _
  %s6 = ssub.s32 1, %s4
  %s7 = scalar_select 0, %s6, %s4
  $region1: #{tpu_custom_call.1} parent=0
    #allocation2 [shape = 'u8[262144]{0}', space=vmem, size = 0x40000, scoped, tag = 'output window, operand 0']
    #allocation3 [shape = 's32[2]{0}', space=sflag, size = 0x8, scoped, tag = 'scoped memory for tpu_custom_call.1']
    %8 = vsyncpa [#allocation3], 0
    %s9 = scalar_lea.sflag [#allocation3], 1
    %10 = vsyncpa %s9, 0
    loop: start=0, step=1, limit=4
    $region2: #{tpu_custom_call.1} parent=1 // loop_pre_header
      _
    $region3: #{tpu_custom_call.1} parent=1 // loop_header
      %s12 = sphi 0, %s16
      %p13 = scmp.ge.s32.totalorder %s12, 4
      %s19 = sphi 0, %s38
      %s20 = sphi 0, %s34
      %s21 = sphi 0, %s30
      %s22 = sphi 0, %s19
      %s23 = sphi 0, %s20
      %s24 = sphi 0, %s21
      %s25 = sphi 0, %s22
      %s26 = sphi 0, %s23
      %s27 = sphi 0, %s24
      %s41 = sphi 0, %s43
      %s44 = sphi 0, %s41
      %s45 = sphi 0, %s44
      %s61 = sphi 0, %s45
      %s67 = sphi 0, %s69
      %s70 = sphi 0, %s67
      %s71 = sphi 0, %s70
      %s87 = sphi 0, %s71
      %s93 = sphi 0, %s95
      %s96 = sphi 0, %s93
      %s97 = sphi 0, %s96
      %s113 = sphi 0, %s97
      %s123 = sphi 0, %s125
      %s126 = sphi 0, %s123
      %s127 = sphi 0, %s126
      %s143 = sphi 0, %s127
    $region4: #{tpu_custom_call.1} parent=1 // loop_header_branch
      %15 = sbr.rel (%p13) target = $region8
    $region5: #{tpu_custom_call.1} parent=1 // loop_body
      %s17 = ssub.s32 %s12, 1
      %s18 = ssub.s32 %s12, 2
      %s28 = sadd.s32 1, %s21
      %p29 = scmp.ge.s32.totalorder %s28, 1
      %s30 = scalar_select %p29, 0, %s28
      %s31 = sadd.s32 1, %s20
      %s32 = scalar_select %p29, %s31, %s20
      %p33 = scmp.ge.s32.totalorder %s32, 1
      %s34 = scalar_select %p33, 0, %s32
      %s35 = sadd.s32 1, %s19
      %s36 = scalar_select %p33, %s35, %s19
      %p37 = scmp.ge.s32.totalorder %s36, 2
      %s38 = scalar_select %p37, 0, %s36
      %s39 = ssub.s32 %s19, %s38
      %p40 = scmp.eq.s32.totalorder %s39, 0
      %s42 = sadd.s32 %s41, 1
      %s43 = scalar_select %p40, %s41, %s42
      %p46 = pneg %p40
      %p47 = scmp.eq.s32.totalorder %s12, 1
      %p48 = por %p46, %p47
      %p49 = scmp.ne.s32.totalorder %s41, %s44
      %p50 = scmp.eq.s32.totalorder %s12, 0
      %p51 = por %p49, %p50
      %p52 = scmp.ne.s32.totalorder %s41, %s44
      %p53 = scmp.eq.s32.totalorder %s17, 1
      %p54 = por %p52, %p53
      %p55 = scmp.ne.s32.totalorder %s44, %s45
      %p56 = scmp.eq.s32.totalorder %s17, 0
      %p57 = por %p55, %p56
      %p58 = scmp.ne.s32.totalorder %s44, %s45
      %p59 = scmp.eq.s32.totalorder %s18, 1
      %p60 = por %p58, %p59
      %p62 = scmp.ne.s32.totalorder %s45, %s61
      %p63 = scmp.eq.s32.totalorder %s18, 0
      %p64 = por %p62, %p63
      %s65 = ssub.s32 %s20, %s34
      %p66 = scmp.eq.s32.totalorder %s65, 0
      %s68 = sadd.s32 %s67, 1
      %s69 = scalar_select %p66, %s67, %s68
      %p72 = pneg %p66
      %p73 = scmp.eq.s32.totalorder %s12, 1
      %p74 = por %p72, %p73
      %p75 = scmp.ne.s32.totalorder %s67, %s70
      %p76 = scmp.eq.s32.totalorder %s12, 0
      %p77 = por %p75, %p76
      %p78 = scmp.ne.s32.totalorder %s67, %s70
      %p79 = scmp.eq.s32.totalorder %s17, 1
      %p80 = por %p78, %p79
      %p81 = scmp.ne.s32.totalorder %s70, %s71
      %p82 = scmp.eq.s32.totalorder %s17, 0
      %p83 = por %p81, %p82
      %p84 = scmp.ne.s32.totalorder %s70, %s71
      %p85 = scmp.eq.s32.totalorder %s18, 1
      %p86 = por %p84, %p85
      %p88 = scmp.ne.s32.totalorder %s71, %s87
      %p89 = scmp.eq.s32.totalorder %s18, 0
      %p90 = por %p88, %p89
      %s91 = ssub.s32 %s20, %s34
      %p92 = scmp.eq.s32.totalorder %s91, 0
      %s94 = sadd.s32 %s93, 1
      %s95 = scalar_select %p92, %s93, %s94
      %p98 = pneg %p92
      %p99 = scmp.eq.s32.totalorder %s12, 1
      %p100 = por %p98, %p99
      %p101 = scmp.ne.s32.totalorder %s93, %s96
      %p102 = scmp.eq.s32.totalorder %s12, 0
      %p103 = por %p101, %p102
      %p104 = scmp.ne.s32.totalorder %s93, %s96
      %p105 = scmp.eq.s32.totalorder %s17, 1
      %p106 = por %p104, %p105
      %p107 = scmp.ne.s32.totalorder %s96, %s97
      %p108 = scmp.eq.s32.totalorder %s17, 0
      %p109 = por %p107, %p108
      %p110 = scmp.ne.s32.totalorder %s96, %s97
      %p111 = scmp.eq.s32.totalorder %s18, 1
      %p112 = por %p110, %p111
      %p114 = scmp.ne.s32.totalorder %s97, %s113
      %p115 = scmp.eq.s32.totalorder %s18, 0
      %p116 = por %p114, %p115
      %s117 = ssub.s32 %s19, %s38
      %s118 = ssub.s32 %s21, %s30
      %s119 = sor.u32 %s117, %s118
      %s120 = ssub.s32 %s20, %s34
      %s121 = sor.u32 %s119, %s120
      %p122 = scmp.eq.s32.totalorder %s121, 0
      %s124 = sadd.s32 %s123, 1
      %s125 = scalar_select %p122, %s123, %s124
      %p128 = pneg %p122
      %p129 = scmp.eq.s32.totalorder %s12, 1
      %p130 = por %p128, %p129
      %p131 = scmp.ne.s32.totalorder %s123, %s126
      %p132 = scmp.eq.s32.totalorder %s12, 0
      %p133 = por %p131, %p132
      %p134 = scmp.ne.s32.totalorder %s123, %s126
      %p135 = scmp.eq.s32.totalorder %s17, 1
      %p136 = por %p134, %p135
      %p137 = scmp.ne.s32.totalorder %s126, %s127
      %p138 = scmp.eq.s32.totalorder %s17, 0
      %p139 = por %p137, %p138
      %p140 = scmp.ne.s32.totalorder %s126, %s127
      %p141 = scmp.eq.s32.totalorder %s18, 1
      %p142 = por %p140, %p141
      %p144 = scmp.ne.s32.totalorder %s127, %s143
      %p145 = scmp.eq.s32.totalorder %s18, 0
      %p146 = por %p144, %p145
      %p147 = scmp.le.s32.totalorder 1, %s12
      %p148 = scmp.lt.s32.totalorder %s12, 3
      %p149 = pnand %p147, %p148
      %p150 = pneg %p149
      // Predicated region
      $region9: #{tpu_custom_call.1} parent=5 // pred_check
        _
      $region10: #{tpu_custom_call.1} parent=5 // pred_check_branch
        %152 = sbr.rel (%p149) target = $region12
      $region11: #{tpu_custom_call.1} parent=5 // pred_region
        %s153 = ssub.s32 %s12, 1
        // Predicated region
        $region13: #{tpu_custom_call.1} parent=11 // pred_check
          %p154 = pneg %p83
        $region14: #{tpu_custom_call.1} parent=11 // pred_check_branch
          %156 = sbr.rel (%p154) target = $region16
        $region15: #{tpu_custom_call.1} parent=11 // pred_region
          %p157 = scmp.lt.s32.totalorder %s23, 0
          %s158 = scalar_select %p157, %s23, 0
          %s159 = smul.addr %s158, 4
          %s160 = scalar_lea.vmem %s1, %s159
        $region16: #{tpu_custom_call.1} parent=11 // pred_fallthru
          _
        // Predicated region
        $region17: #{tpu_custom_call.1} parent=11 // pred_check
          %p161 = pneg %p109
        $region18: #{tpu_custom_call.1} parent=11 // pred_check_branch
          %163 = sbr.rel (%p161) target = $region20
        $region19: #{tpu_custom_call.1} parent=11 // pred_region
          %p164 = scmp.lt.s32.totalorder %s23, 0
          %s165 = scalar_select %p164, %s23, 0
          %s166 = scalar_lea.vmem %s2, %s165
        $region20: #{tpu_custom_call.1} parent=11 // pred_fallthru
          _
      $region12: #{tpu_custom_call.1} parent=5 // pred_fallthru
        _
      %p167 = scmp.lt.s32.totalorder %s12, 2
      // Predicated region
      $region21: #{tpu_custom_call.1} parent=5 // pred_check
        %p168 = pneg %p167
      $region22: #{tpu_custom_call.1} parent=5 // pred_check_branch
        %170 = sbr.rel (%p168) target = $region24
      $region23: #{tpu_custom_call.1} parent=5 // pred_region
        // Predicated region
        $region25: #{tpu_custom_call.1} parent=23 // pred_check
          %p171 = pneg %p51
        $region26: #{tpu_custom_call.1} parent=23 // pred_check_branch
          %173 = sbr.rel (%p171) target = $region28
        $region27: #{tpu_custom_call.1} parent=23 // pred_region
          %p174 = scmp.lt.s32.totalorder %s19, 1
          %s175 = scalar_select %p174, %s19, 1
          %s176 = smul.addr %s175, 54
          %s177 = smul.addr %s176, 4
          %s178 = scalar_lea.vmem %s0, %s177
        $region28: #{tpu_custom_call.1} parent=23 // pred_fallthru
          _
      $region24: #{tpu_custom_call.1} parent=5 // pred_fallthru
        _
      %p179 = scmp.le.s32.totalorder 1, %s12
      %p180 = scmp.lt.s32.totalorder %s12, 3
      %p181 = pnand %p179, %p180
      %p182 = pneg %p181
      // Predicated region
      $region29: #{tpu_custom_call.1} parent=5 // pred_check
        _
      $region30: #{tpu_custom_call.1} parent=5 // pred_check_branch
        %184 = sbr.rel (%p181) target = $region32
      $region31: #{tpu_custom_call.1} parent=5 // pred_region
        %s185 = ssub.s32 %s12, 1
        %p186 = scmp.lt.s32.totalorder %s22, 1
        %s187 = scalar_select %p186, %s22, 1
        %s188 = smul.addr %s187, 54
        %s189 = smul.addr %s188, 4
        %s190 = scalar_lea.vmem %s0, %s189
        %p191 = pneg %p57
        %p192 = pneg %p54
        %p193 = scmp.lt.s32.totalorder %s23, 0
        %s194 = scalar_select %p193, %s23, 0
        %s195 = smul.addr %s194, 4
        %s196 = scalar_lea.vmem %s1, %s195
        %p197 = pneg %p83
        %p198 = pneg %p80
        %p199 = scmp.lt.s32.totalorder %s23, 0
        %s200 = scalar_select %p199, %s23, 0
        %s201 = scalar_lea.vmem %s2, %s200
        %p202 = pneg %p109
        %p203 = pneg %p106
        %p204 = pneg %p139
        %p205 = pneg %p136
        %s206 = sand.u32 %s126, 1
        %s207 = scalar_lea.sflag [#allocation3], %s206
        %s208 = sand.u32 %s126, 1
        %s209 = smul.addr %s208, 256
        %s210 = scalar_lea.vmem [#allocation2], %s209
        %p211 = scmp.lt.s32.totalorder %s22, 1
        %s212 = scalar_select %p211, %s22, 1
        %s213 = smul.addr %s212, 54
        %s214 = smul.addr %s213, 4
        %s215 = scalar_lea.vmem %s0, %s214
        %p216 = scmp.lt.s32.totalorder %s23, 0
        %s217 = scalar_select %p216, %s23, 0
        %s218 = smul.addr %s217, 4
        %s219 = scalar_lea.vmem %s1, %s218
        %p220 = scmp.lt.s32.totalorder %s23, 0
        %s221 = scalar_select %p220, %s23, 0
        %s222 = scalar_lea.vmem %s2, %s221
        %s223 = smul.u32 32, %s24
        %s225 = smul.u32 %s24, 16
        %v226 = vld [vmem:[%s222] sm:$0x1]
        %v228 = vperm.slane %v226, 0
        %s230 = smul.u32 %s225, 3
        %s231 = smul.addr %s230, 4
        %s232 = scalar_lea.vmem %s215, %s231
        %v233 = vld [vmem:[%s232] sm:$0xf]
        %v234 = vld [vmem:[%s232 + $0x4] sm:$0xf]
        %v235 = vld [vmem:[%s232 + $0xc] sm:$0xf]
        %v236 = vld [vmem:[%s232 + $0x10] sm:$0xf]
        %v237 = vld [vmem:[%s232 + $0x18] sm:$0xf]
        %v238 = vld [vmem:[%s232 + $0x1c] sm:$0xf]
        %v239 = vld [vmem:[%s232 + $0x24] sm:$0xf]
        %v240 = vld [vmem:[%s232 + $0x28] sm:$0xf]
        %v241 = vld [vmem:[%s232 + $0x30] sm:$0xf]
        %v242 = vld [vmem:[%s232 + $0x34] sm:$0xf]
        %v243 = vld [vmem:[%s232 + $0x3c] sm:$0xf]
        %v244 = vld [vmem:[%s232 + $0x40] sm:$0xf]
        %v245 = vld [vmem:[%s232 + $0x48] sm:$0xf]
        %v246 = vld [vmem:[%s232 + $0x4c] sm:$0xf]
        %v247 = vld [vmem:[%s232 + $0x54] sm:$0xf]
        %v248 = vld [vmem:[%s232 + $0x58] sm:$0xf]
        %v249 = vld [vmem:[%s232 + $0x60] sm:$0xf]
        %v250 = vld [vmem:[%s232 + $0x64] sm:$0xf]
        %v251 = vld [vmem:[%s232 + $0x6c] sm:$0xf]
        %v252 = vld [vmem:[%s232 + $0x70] sm:$0xf]
        %v253 = vld [vmem:[%s232 + $0x78] sm:$0xf]
        %v254 = vld [vmem:[%s232 + $0x7c] sm:$0xf]
        %v255 = vld [vmem:[%s232 + $0x84] sm:$0xf]
        %v256 = vld [vmem:[%s232 + $0x88] sm:$0xf]
        %v257 = vld [vmem:[%s232 + $0x90] sm:$0xf]
        %v258 = vld [vmem:[%s232 + $0x94] sm:$0xf]
        %v259 = vld [vmem:[%s232 + $0x9c] sm:$0xf]
        %v260 = vld [vmem:[%s232 + $0xa0] sm:$0xf]
        %v261 = vld [vmem:[%s232 + $0xa8] sm:$0xf]
        %v262 = vld [vmem:[%s232 + $0xac] sm:$0xf]
        %v263 = vld [vmem:[%s232 + $0xb4] sm:$0xf]
        %v264 = vld [vmem:[%s232 + $0xb8] sm:$0xf]
        %v265 = vld [vmem:[%s219] sm:$0xf]
        %v298 = vunpack.c.l.b16 %v233
        %v299 = vunpack.c.l.b16 %v234
        %v300 = vunpack.c.l.b16 %v235
        %v301 = vunpack.c.l.b16 %v236
        %v302 = vunpack.c.l.b16 %v237
        %v303 = vunpack.c.l.b16 %v238
        %v304 = vunpack.c.l.b16 %v239
        %v305 = vunpack.c.l.b16 %v240
        %v306 = vunpack.c.l.b16 %v241
        %v307 = vunpack.c.l.b16 %v242
        %v308 = vunpack.c.l.b16 %v243
        %v309 = vunpack.c.l.b16 %v244
        %v310 = vunpack.c.l.b16 %v245
        %v311 = vunpack.c.l.b16 %v246
        %v312 = vunpack.c.l.b16 %v247
        %v313 = vunpack.c.l.b16 %v248
        %v314 = vunpack.c.l.b16 %v249
        %v315 = vunpack.c.l.b16 %v250
        %v316 = vunpack.c.l.b16 %v251
        %v317 = vunpack.c.l.b16 %v252
        %v318 = vunpack.c.l.b16 %v253
        %v319 = vunpack.c.l.b16 %v254
        %v320 = vunpack.c.l.b16 %v255
        %v321 = vunpack.c.l.b16 %v256
        %v322 = vunpack.c.l.b16 %v257
        %v323 = vunpack.c.l.b16 %v258
        %v324 = vunpack.c.l.b16 %v259
        %v325 = vunpack.c.l.b16 %v260
        %v326 = vunpack.c.l.b16 %v261
        %v327 = vunpack.c.l.b16 %v262
        %v328 = vunpack.c.l.b16 %v263
        %v329 = vunpack.c.l.b16 %v264
        %v330 = vpack.c.b16 %v299, %v298
        %v331 = vpack.c.b16 %v301, %v300
        %v332 = vpack.c.b16 %v303, %v302
        %v333 = vpack.c.b16 %v305, %v304
        %v334 = vpack.c.b16 %v307, %v306
        %v335 = vpack.c.b16 %v309, %v308
        %v336 = vpack.c.b16 %v311, %v310
        %v337 = vpack.c.b16 %v313, %v312
        %v338 = vpack.c.b16 %v315, %v314
        %v339 = vpack.c.b16 %v317, %v316
        %v340 = vpack.c.b16 %v319, %v318
        %v341 = vpack.c.b16 %v321, %v320
        %v342 = vpack.c.b16 %v323, %v322
        %v343 = vpack.c.b16 %v325, %v324
        %v344 = vpack.c.b16 %v327, %v326
        %v345 = vpack.c.b16 %v329, %v328
        %vm346 = vcmask 64512
        %v348 = vsel %vm346, %v330, 0
        %v351 = vsel %vm346, %v331, 0
        %v354 = vsel %vm346, %v332, 0
        %v357 = vsel %vm346, %v333, 0
        %v360 = vsel %vm346, %v334, 0
        %v363 = vsel %vm346, %v335, 0
        %v366 = vsel %vm346, %v336, 0
        %v369 = vsel %vm346, %v337, 0
        %v372 = vsel %vm346, %v338, 0
        %v375 = vsel %vm346, %v339, 0
        %v378 = vsel %vm346, %v340, 0
        %v381 = vsel %vm346, %v341, 0
        %v384 = vsel %vm346, %v342, 0
        %v387 = vsel %vm346, %v343, 0
        %v390 = vsel %vm346, %v344, 0
        %v393 = vsel %vm346, %v345, 0
        %vm395 = vcmask 1043456
        %v397 = vsel %vm395, %v265, 0
        %399 = vmatpush.bf16.msra.mxu0 0
        %400 = vmatpush.bf16.msra.mxu0 0
        %401 = vmatpush.bf16.msra.mxu0 0
        %402 = vmatpush.bf16.msra.mxu0 0
        %403 = vmatpush.bf16.msra.mxu0 0
        %404 = vmatpush.bf16.msra.mxu0 0
        %405 = vmatpush.bf16.msra.mxu0 0
        %406 = vmatpush.bf16.msra.mxu0 %v397
        %407 = vmatmul.bf16.gmra.mxu0 %v348
        %v408 = vpop.f32.mrf.mxu0
        %v409 = vadd.f32 0.0, %v408
        %v410 = vpop.f32.mrf.mxu0
        %v411 = vadd.f32 0.0, %v410
        %412 = vmatmul.bf16.gmra.mxu0 %v351
        %v413 = vpop.f32.mrf.mxu0
        %v414 = vadd.f32 0.0, %v413
        %v415 = vpop.f32.mrf.mxu0
        %v416 = vadd.f32 0.0, %v415
        %417 = vmatmul.bf16.gmra.mxu0 %v354
        %v418 = vpop.f32.mrf.mxu0
        %v419 = vadd.f32 0.0, %v418
        %v420 = vpop.f32.mrf.mxu0
        %v421 = vadd.f32 0.0, %v420
        %422 = vmatmul.bf16.gmra.mxu0 %v357
        %v423 = vpop.f32.mrf.mxu0
        %v424 = vadd.f32 0.0, %v423
        %v425 = vpop.f32.mrf.mxu0
        %v426 = vadd.f32 0.0, %v425
        %427 = vmatmul.bf16.gmra.mxu0 %v360
        %v428 = vpop.f32.mrf.mxu0
        %v429 = vadd.f32 0.0, %v428
        %v430 = vpop.f32.mrf.mxu0
        %v431 = vadd.f32 0.0, %v430
        %432 = vmatmul.bf16.gmra.mxu0 %v363
        %v433 = vpop.f32.mrf.mxu0
        %v434 = vadd.f32 0.0, %v433
        %v435 = vpop.f32.mrf.mxu0
        %v436 = vadd.f32 0.0, %v435
        %437 = vmatmul.bf16.gmra.mxu0 %v366
        %v438 = vpop.f32.mrf.mxu0
        %v439 = vadd.f32 0.0, %v438
        %v440 = vpop.f32.mrf.mxu0
        %v441 = vadd.f32 0.0, %v440
        %442 = vmatmul.bf16.gmra.mxu0 %v369
        %v443 = vpop.f32.mrf.mxu0
        %v444 = vadd.f32 0.0, %v443
        %v445 = vpop.f32.mrf.mxu0
        %v446 = vadd.f32 0.0, %v445
        %447 = vmatmul.bf16.gmra.mxu0 %v372
        %v448 = vpop.f32.mrf.mxu0
        %v449 = vadd.f32 0.0, %v448
        %v450 = vpop.f32.mrf.mxu0
        %v451 = vadd.f32 0.0, %v450
        %452 = vmatmul.bf16.gmra.mxu0 %v375
        %v453 = vpop.f32.mrf.mxu0
        %v454 = vadd.f32 0.0, %v453
        %v455 = vpop.f32.mrf.mxu0
        %v456 = vadd.f32 0.0, %v455
        %457 = vmatmul.bf16.gmra.mxu0 %v378
        %v458 = vpop.f32.mrf.mxu0
        %v459 = vadd.f32 0.0, %v458
        %v460 = vpop.f32.mrf.mxu0
        %v461 = vadd.f32 0.0, %v460
        %462 = vmatmul.bf16.gmra.mxu0 %v381
        %v463 = vpop.f32.mrf.mxu0
        %v464 = vadd.f32 0.0, %v463
        %v465 = vpop.f32.mrf.mxu0
        %v466 = vadd.f32 0.0, %v465
        %467 = vmatmul.bf16.gmra.mxu0 %v384
        %v468 = vpop.f32.mrf.mxu0
        %v469 = vadd.f32 0.0, %v468
        %v470 = vpop.f32.mrf.mxu0
        %v471 = vadd.f32 0.0, %v470
        %472 = vmatmul.bf16.gmra.mxu0 %v387
        %v473 = vpop.f32.mrf.mxu0
        %v474 = vadd.f32 0.0, %v473
        %v475 = vpop.f32.mrf.mxu0
        %v476 = vadd.f32 0.0, %v475
        %477 = vmatmul.bf16.gmra.mxu0 %v390
        %v478 = vpop.f32.mrf.mxu0
        %v479 = vadd.f32 0.0, %v478
        %v480 = vpop.f32.mrf.mxu0
        %v481 = vadd.f32 0.0, %v480
        %482 = vmatmul.bf16.gmra.mxu0 %v393
        %v483 = vpop.f32.mrf.mxu0
        %v484 = vadd.f32 0.0, %v483
        %v485 = vpop.f32.mrf.mxu0
        %v486 = vadd.f32 0.0, %v485
        %487 = vdwg.mxu0
        %v488 = vadd.f32 %v228, %v409
        %v489 = vadd.f32 %v228, %v411
        %v490 = vadd.f32 %v228, %v414
        %v491 = vadd.f32 %v228, %v416
        %v492 = vadd.f32 %v228, %v419
        %v493 = vadd.f32 %v228, %v421
        %v494 = vadd.f32 %v228, %v424
        %v495 = vadd.f32 %v228, %v426
        %v496 = vadd.f32 %v228, %v429
        %v497 = vadd.f32 %v228, %v431
        %v498 = vadd.f32 %v228, %v434
        %v499 = vadd.f32 %v228, %v436
        %v500 = vadd.f32 %v228, %v439
        %v501 = vadd.f32 %v228, %v441
        %v502 = vadd.f32 %v228, %v444
        %v503 = vadd.f32 %v228, %v446
        %v504 = vadd.f32 %v228, %v449
        %v505 = vadd.f32 %v228, %v451
        %v506 = vadd.f32 %v228, %v454
        %v507 = vadd.f32 %v228, %v456
        %v508 = vadd.f32 %v228, %v459
        %v509 = vadd.f32 %v228, %v461
        %v510 = vadd.f32 %v228, %v464
        %v511 = vadd.f32 %v228, %v466
        %v512 = vadd.f32 %v228, %v469
        %v513 = vadd.f32 %v228, %v471
        %v514 = vadd.f32 %v228, %v474
        %v515 = vadd.f32 %v228, %v476
        %v516 = vadd.f32 %v228, %v479
        %v517 = vadd.f32 %v228, %v481
        %v518 = vadd.f32 %v228, %v484
        %v519 = vadd.f32 %v228, %v486
        %v520 = vld [vmem:[%s232] sm:$0xf]
        %v521 = vld [vmem:[%s232 + $0x4] sm:$0xf]
        %v522 = vld [vmem:[%s232 + $0x8] sm:$0x1]
        %v523 = vld [vmem:[%s232 + $0xc] sm:$0xf]
        %v524 = vld [vmem:[%s232 + $0x10] sm:$0xf]
        %v525 = vld [vmem:[%s232 + $0x14] sm:$0x1]
        %v526 = vld [vmem:[%s232 + $0x18] sm:$0xf]
        %v527 = vld [vmem:[%s232 + $0x1c] sm:$0xf]
        %v528 = vld [vmem:[%s232 + $0x20] sm:$0x1]
        %v529 = vld [vmem:[%s232 + $0x24] sm:$0xf]
        %v530 = vld [vmem:[%s232 + $0x28] sm:$0xf]
        %v531 = vld [vmem:[%s232 + $0x2c] sm:$0x1]
        %v532 = vld [vmem:[%s232 + $0x30] sm:$0xf]
        %v533 = vld [vmem:[%s232 + $0x34] sm:$0xf]
        %v534 = vld [vmem:[%s232 + $0x38] sm:$0x1]
        %v535 = vld [vmem:[%s232 + $0x3c] sm:$0xf]
        %v536 = vld [vmem:[%s232 + $0x40] sm:$0xf]
        %v537 = vld [vmem:[%s232 + $0x44] sm:$0x1]
        %v538 = vld [vmem:[%s232 + $0x48] sm:$0xf]
        %v539 = vld [vmem:[%s232 + $0x4c] sm:$0xf]
        %v540 = vld [vmem:[%s232 + $0x50] sm:$0x1]
        %v541 = vld [vmem:[%s232 + $0x54] sm:$0xf]
        %v542 = vld [vmem:[%s232 + $0x58] sm:$0xf]
        %v543 = vld [vmem:[%s232 + $0x5c] sm:$0x1]
        %v544 = vld [vmem:[%s232 + $0x60] sm:$0xf]
        %v545 = vld [vmem:[%s232 + $0x64] sm:$0xf]
        %v546 = vld [vmem:[%s232 + $0x68] sm:$0x1]
        %v547 = vld [vmem:[%s232 + $0x6c] sm:$0xf]
        %v548 = vld [vmem:[%s232 + $0x70] sm:$0xf]
        %v549 = vld [vmem:[%s232 + $0x74] sm:$0x1]
        %v550 = vld [vmem:[%s232 + $0x78] sm:$0xf]
        %v551 = vld [vmem:[%s232 + $0x7c] sm:$0xf]
        %v552 = vld [vmem:[%s232 + $0x80] sm:$0x1]
        %v553 = vld [vmem:[%s232 + $0x84] sm:$0xf]
        %v554 = vld [vmem:[%s232 + $0x88] sm:$0xf]
        %v555 = vld [vmem:[%s232 + $0x8c] sm:$0x1]
        %v556 = vld [vmem:[%s232 + $0x90] sm:$0xf]
        %v557 = vld [vmem:[%s232 + $0x94] sm:$0xf]
        %v558 = vld [vmem:[%s232 + $0x98] sm:$0x1]
        %v559 = vld [vmem:[%s232 + $0x9c] sm:$0xf]
        %v560 = vld [vmem:[%s232 + $0xa0] sm:$0xf]
        %v561 = vld [vmem:[%s232 + $0xa4] sm:$0x1]
        %v562 = vld [vmem:[%s232 + $0xa8] sm:$0xf]
        %v563 = vld [vmem:[%s232 + $0xac] sm:$0xf]
        %v564 = vld [vmem:[%s232 + $0xb0] sm:$0x1]
        %v565 = vld [vmem:[%s232 + $0xb4] sm:$0xf]
        %v566 = vld [vmem:[%s232 + $0xb8] sm:$0xf]
        %v567 = vld [vmem:[%s232 + $0xbc] sm:$0x1]
        %vm568 = vsmask.f32 3328
        %vm569 = vsmask.f32 7440
        %vm570 = vmor %vm568, %vm569
        %v572 = vshrl.u32 %v520, 16
        %v574 = vrot.slane %v572, 4
        %v575 = vshll.u32 %v520, 16
        %v577 = vrot.slane %v575, 5
        %v578 = vor.u32 %v574, %v577
        %v579 = vrot.slane %v578, 4
        %v581 = vshll.u32 %v521, 16
        %v583 = vrot.slane %v581, 5
        %v584 = vsel %vm570, %v579, %v583
        %v585 = vshrl.u32 %v521, 16
        %v587 = vrot.slane %v585, 4
        %v588 = vor.u32 %v587, %v583
        %v589 = vrot.slane %v588, 4
        %v591 = vshll.u32 %v522, 16
        %v593 = vrot.slane %v591, 5
        %v594 = vsel %vm570, %v589, %v593
        %v596 = vshrl.u32 %v523, 16
        %v598 = vrot.slane %v596, 4
        %v599 = vshll.u32 %v523, 16
        %v601 = vrot.slane %v599, 5
        %v602 = vor.u32 %v598, %v601
        %v603 = vrot.slane %v602, 4
        %v605 = vshll.u32 %v524, 16
        %v607 = vrot.slane %v605, 5
        %v608 = vsel %vm570, %v603, %v607
        %v609 = vshrl.u32 %v524, 16
        %v611 = vrot.slane %v609, 4
        %v612 = vor.u32 %v611, %v607
        %v613 = vrot.slane %v612, 4
        %v615 = vshll.u32 %v525, 16
        %v617 = vrot.slane %v615, 5
        %v618 = vsel %vm570, %v613, %v617
        %v620 = vshrl.u32 %v526, 16
        %v622 = vrot.slane %v620, 4
        %v623 = vshll.u32 %v526, 16
        %v625 = vrot.slane %v623, 5
        %v626 = vor.u32 %v622, %v625
        %v627 = vrot.slane %v626, 4
        %v629 = vshll.u32 %v527, 16
        %v631 = vrot.slane %v629, 5
        %v632 = vsel %vm570, %v627, %v631
        %v633 = vshrl.u32 %v527, 16
        %v635 = vrot.slane %v633, 4
        %v636 = vor.u32 %v635, %v631
        %v637 = vrot.slane %v636, 4
        %v639 = vshll.u32 %v528, 16
        %v641 = vrot.slane %v639, 5
        %v642 = vsel %vm570, %v637, %v641
        %v644 = vshrl.u32 %v529, 16
        %v646 = vrot.slane %v644, 4
        %v647 = vshll.u32 %v529, 16
        %v649 = vrot.slane %v647, 5
        %v650 = vor.u32 %v646, %v649
        %v651 = vrot.slane %v650, 4
        %v653 = vshll.u32 %v530, 16
        %v655 = vrot.slane %v653, 5
        %v656 = vsel %vm570, %v651, %v655
        %v657 = vshrl.u32 %v530, 16
        %v659 = vrot.slane %v657, 4
        %v660 = vor.u32 %v659, %v655
        %v661 = vrot.slane %v660, 4
        %v663 = vshll.u32 %v531, 16
        %v665 = vrot.slane %v663, 5
        %v666 = vsel %vm570, %v661, %v665
        %v668 = vshrl.u32 %v532, 16
        %v670 = vrot.slane %v668, 4
        %v671 = vshll.u32 %v532, 16
        %v673 = vrot.slane %v671, 5
        %v674 = vor.u32 %v670, %v673
        %v675 = vrot.slane %v674, 4
        %v677 = vshll.u32 %v533, 16
        %v679 = vrot.slane %v677, 5
        %v680 = vsel %vm570, %v675, %v679
        %v681 = vshrl.u32 %v533, 16
        %v683 = vrot.slane %v681, 4
        %v684 = vor.u32 %v683, %v679
        %v685 = vrot.slane %v684, 4
        %v687 = vshll.u32 %v534, 16
        %v689 = vrot.slane %v687, 5
        %v690 = vsel %vm570, %v685, %v689
        %v692 = vshrl.u32 %v535, 16
        %v694 = vrot.slane %v692, 4
        %v695 = vshll.u32 %v535, 16
        %v697 = vrot.slane %v695, 5
        %v698 = vor.u32 %v694, %v697
        %v699 = vrot.slane %v698, 4
        %v701 = vshll.u32 %v536, 16
        %v703 = vrot.slane %v701, 5
        %v704 = vsel %vm570, %v699, %v703
        %v705 = vshrl.u32 %v536, 16
        %v707 = vrot.slane %v705, 4
        %v708 = vor.u32 %v707, %v703
        %v709 = vrot.slane %v708, 4
        %v711 = vshll.u32 %v537, 16
        %v713 = vrot.slane %v711, 5
        %v714 = vsel %vm570, %v709, %v713
        %v716 = vshrl.u32 %v538, 16
        %v718 = vrot.slane %v716, 4
        %v719 = vshll.u32 %v538, 16
        %v721 = vrot.slane %v719, 5
        %v722 = vor.u32 %v718, %v721
        %v723 = vrot.slane %v722, 4
        %v725 = vshll.u32 %v539, 16
        %v727 = vrot.slane %v725, 5
        %v728 = vsel %vm570, %v723, %v727
        %v729 = vshrl.u32 %v539, 16
        %v731 = vrot.slane %v729, 4
        %v732 = vor.u32 %v731, %v727
        %v733 = vrot.slane %v732, 4
        %v735 = vshll.u32 %v540, 16
        %v737 = vrot.slane %v735, 5
        %v738 = vsel %vm570, %v733, %v737
        %v740 = vshrl.u32 %v541, 16
        %v742 = vrot.slane %v740, 4
        %v743 = vshll.u32 %v541, 16
        %v745 = vrot.slane %v743, 5
        %v746 = vor.u32 %v742, %v745
        %v747 = vrot.slane %v746, 4
        %v749 = vshll.u32 %v542, 16
        %v751 = vrot.slane %v749, 5
        %v752 = vsel %vm570, %v747, %v751
        %v753 = vshrl.u32 %v542, 16
        %v755 = vrot.slane %v753, 4
        %v756 = vor.u32 %v755, %v751
        %v757 = vrot.slane %v756, 4
        %v759 = vshll.u32 %v543, 16
        %v761 = vrot.slane %v759, 5
        %v762 = vsel %vm570, %v757, %v761
        %v764 = vshrl.u32 %v544, 16
        %v766 = vrot.slane %v764, 4
        %v767 = vshll.u32 %v544, 16
        %v769 = vrot.slane %v767, 5
        %v770 = vor.u32 %v766, %v769
        %v771 = vrot.slane %v770, 4
        %v773 = vshll.u32 %v545, 16
        %v775 = vrot.slane %v773, 5
        %v776 = vsel %vm570, %v771, %v775
        %v777 = vshrl.u32 %v545, 16
        %v779 = vrot.slane %v777, 4
        %v780 = vor.u32 %v779, %v775
        %v781 = vrot.slane %v780, 4
        %v783 = vshll.u32 %v546, 16
        %v785 = vrot.slane %v783, 5
        %v786 = vsel %vm570, %v781, %v785
        %v788 = vshrl.u32 %v547, 16
        %v790 = vrot.slane %v788, 4
        %v791 = vshll.u32 %v547, 16
        %v793 = vrot.slane %v791, 5
        %v794 = vor.u32 %v790, %v793
        %v795 = vrot.slane %v794, 4
        %v797 = vshll.u32 %v548, 16
        %v799 = vrot.slane %v797, 5
        %v800 = vsel %vm570, %v795, %v799
        %v801 = vshrl.u32 %v548, 16
        %v803 = vrot.slane %v801, 4
        %v804 = vor.u32 %v803, %v799
        %v805 = vrot.slane %v804, 4
        %v807 = vshll.u32 %v549, 16
        %v809 = vrot.slane %v807, 5
        %v810 = vsel %vm570, %v805, %v809
        %v812 = vshrl.u32 %v550, 16
        %v814 = vrot.slane %v812, 4
        %v815 = vshll.u32 %v550, 16
        %v817 = vrot.slane %v815, 5
        %v818 = vor.u32 %v814, %v817
        %v819 = vrot.slane %v818, 4
        %v821 = vshll.u32 %v551, 16
        %v823 = vrot.slane %v821, 5
        %v824 = vsel %vm570, %v819, %v823
        %v825 = vshrl.u32 %v551, 16
        %v827 = vrot.slane %v825, 4
        %v828 = vor.u32 %v827, %v823
        %v829 = vrot.slane %v828, 4
        %v831 = vshll.u32 %v552, 16
        %v833 = vrot.slane %v831, 5
        %v834 = vsel %vm570, %v829, %v833
        %v836 = vshrl.u32 %v553, 16
        %v838 = vrot.slane %v836, 4
        %v839 = vshll.u32 %v553, 16
        %v841 = vrot.slane %v839, 5
        %v842 = vor.u32 %v838, %v841
        %v843 = vrot.slane %v842, 4
        %v845 = vshll.u32 %v554, 16
        %v847 = vrot.slane %v845, 5
        %v848 = vsel %vm570, %v843, %v847
        %v849 = vshrl.u32 %v554, 16
        %v851 = vrot.slane %v849, 4
        %v852 = vor.u32 %v851, %v847
        %v853 = vrot.slane %v852, 4
        %v855 = vshll.u32 %v555, 16
        %v857 = vrot.slane %v855, 5
        %v858 = vsel %vm570, %v853, %v857
        %v860 = vshrl.u32 %v556, 16
        %v862 = vrot.slane %v860, 4
        %v863 = vshll.u32 %v556, 16
        %v865 = vrot.slane %v863, 5
        %v866 = vor.u32 %v862, %v865
        %v867 = vrot.slane %v866, 4
        %v869 = vshll.u32 %v557, 16
        %v871 = vrot.slane %v869, 5
        %v872 = vsel %vm570, %v867, %v871
        %v873 = vshrl.u32 %v557, 16
        %v875 = vrot.slane %v873, 4
        %v876 = vor.u32 %v875, %v871
        %v877 = vrot.slane %v876, 4
        %v879 = vshll.u32 %v558, 16
        %v881 = vrot.slane %v879, 5
        %v882 = vsel %vm570, %v877, %v881
        %v884 = vshrl.u32 %v559, 16
        %v886 = vrot.slane %v884, 4
        %v887 = vshll.u32 %v559, 16
        %v889 = vrot.slane %v887, 5
        %v890 = vor.u32 %v886, %v889
        %v891 = vrot.slane %v890, 4
        %v893 = vshll.u32 %v560, 16
        %v895 = vrot.slane %v893, 5
        %v896 = vsel %vm570, %v891, %v895
        %v897 = vshrl.u32 %v560, 16
        %v899 = vrot.slane %v897, 4
        %v900 = vor.u32 %v899, %v895
        %v901 = vrot.slane %v900, 4
        %v903 = vshll.u32 %v561, 16
        %v905 = vrot.slane %v903, 5
        %v906 = vsel %vm570, %v901, %v905
        %v908 = vshrl.u32 %v562, 16
        %v910 = vrot.slane %v908, 4
        %v911 = vshll.u32 %v562, 16
        %v913 = vrot.slane %v911, 5
        %v914 = vor.u32 %v910, %v913
        %v915 = vrot.slane %v914, 4
        %v917 = vshll.u32 %v563, 16
        %v919 = vrot.slane %v917, 5
        %v920 = vsel %vm570, %v915, %v919
        %v921 = vshrl.u32 %v563, 16
        %v923 = vrot.slane %v921, 4
        %v924 = vor.u32 %v923, %v919
        %v925 = vrot.slane %v924, 4
        %v927 = vshll.u32 %v564, 16
        %v929 = vrot.slane %v927, 5
        %v930 = vsel %vm570, %v925, %v929
        %v932 = vshrl.u32 %v565, 16
        %v934 = vrot.slane %v932, 4
        %v935 = vshll.u32 %v565, 16
        %v937 = vrot.slane %v935, 5
        %v938 = vor.u32 %v934, %v937
        %v939 = vrot.slane %v938, 4
        %v941 = vshll.u32 %v566, 16
        %v943 = vrot.slane %v941, 5
        %v944 = vsel %vm570, %v939, %v943
        %v945 = vshrl.u32 %v566, 16
        %v947 = vrot.slane %v945, 4
        %v948 = vor.u32 %v947, %v943
        %v949 = vrot.slane %v948, 4
        %v951 = vshll.u32 %v567, 16
        %v953 = vrot.slane %v951, 5
        %v954 = vsel %vm570, %v949, %v953
        %v955 = vld [vmem:[%s219 + $0x4] sm:$0xf]
        %v956 = vunpack.c.l.b16 %v584
        %v957 = vunpack.c.l.b16 %v594
        %v958 = vunpack.c.l.b16 %v608
        %v959 = vunpack.c.l.b16 %v618
        %v960 = vunpack.c.l.b16 %v632
        %v961 = vunpack.c.l.b16 %v642
        %v962 = vunpack.c.l.b16 %v656
        %v963 = vunpack.c.l.b16 %v666
        %v964 = vunpack.c.l.b16 %v680
        %v965 = vunpack.c.l.b16 %v690
        %v966 = vunpack.c.l.b16 %v704
        %v967 = vunpack.c.l.b16 %v714
        %v968 = vunpack.c.l.b16 %v728
        %v969 = vunpack.c.l.b16 %v738
        %v970 = vunpack.c.l.b16 %v752
        %v971 = vunpack.c.l.b16 %v762
        %v972 = vunpack.c.l.b16 %v776
        %v973 = vunpack.c.l.b16 %v786
        %v974 = vunpack.c.l.b16 %v800
        %v975 = vunpack.c.l.b16 %v810
        %v976 = vunpack.c.l.b16 %v824
        %v977 = vunpack.c.l.b16 %v834
        %v978 = vunpack.c.l.b16 %v848
        %v979 = vunpack.c.l.b16 %v858
        %v980 = vunpack.c.l.b16 %v872
        %v981 = vunpack.c.l.b16 %v882
        %v982 = vunpack.c.l.b16 %v896
        %v983 = vunpack.c.l.b16 %v906
        %v984 = vunpack.c.l.b16 %v920
        %v985 = vunpack.c.l.b16 %v930
        %v986 = vunpack.c.l.b16 %v944
        %v987 = vunpack.c.l.b16 %v954
        %v988 = vpack.c.b16 %v957, %v956
        %v989 = vpack.c.b16 %v959, %v958
        %v990 = vpack.c.b16 %v961, %v960
        %v991 = vpack.c.b16 %v963, %v962
        %v992 = vpack.c.b16 %v965, %v964
        %v993 = vpack.c.b16 %v967, %v966
        %v994 = vpack.c.b16 %v969, %v968
        %v995 = vpack.c.b16 %v971, %v970
        %v996 = vpack.c.b16 %v973, %v972
        %v997 = vpack.c.b16 %v975, %v974
        %v998 = vpack.c.b16 %v977, %v976
        %v999 = vpack.c.b16 %v979, %v978
        %v1000 = vpack.c.b16 %v981, %v980
        %v1001 = vpack.c.b16 %v983, %v982
        %v1002 = vpack.c.b16 %v985, %v984
        %v1003 = vpack.c.b16 %v987, %v986
        %v1005 = vsel %vm346, %v988, 0
        %v1008 = vsel %vm346, %v989, 0
        %v1011 = vsel %vm346, %v990, 0
        %v1014 = vsel %vm346, %v991, 0
        %v1017 = vsel %vm346, %v992, 0
        %v1020 = vsel %vm346, %v993, 0
        %v1023 = vsel %vm346, %v994, 0
        %v1026 = vsel %vm346, %v995, 0
        %v1029 = vsel %vm346, %v996, 0
        %v1032 = vsel %vm346, %v997, 0
        %v1035 = vsel %vm346, %v998, 0
        %v1038 = vsel %vm346, %v999, 0
        %v1041 = vsel %vm346, %v1000, 0
        %v1044 = vsel %vm346, %v1001, 0
        %v1047 = vsel %vm346, %v1002, 0
        %v1050 = vsel %vm346, %v1003, 0
        %v1053 = vsel %vm395, %v955, 0
        %1055 = vmatpush.bf16.msra.mxu0 0
        %1056 = vmatpush.bf16.msra.mxu0 0
        %1057 = vmatpush.bf16.msra.mxu0 0
        %1058 = vmatpush.bf16.msra.mxu0 0
        %1059 = vmatpush.bf16.msra.mxu0 0
        %1060 = vmatpush.bf16.msra.mxu0 0
        %1061 = vmatpush.bf16.msra.mxu0 0
        %1062 = vmatpush.bf16.msra.mxu0 %v1053
        %1063 = vmatmul.bf16.gmra.mxu0 %v1005
        %v1064 = vpop.f32.mrf.mxu0
        %v1065 = vadd.f32 0.0, %v1064
        %v1066 = vpop.f32.mrf.mxu0
        %v1067 = vadd.f32 0.0, %v1066
        %1068 = vmatmul.bf16.gmra.mxu0 %v1008
        %v1069 = vpop.f32.mrf.mxu0
        %v1070 = vadd.f32 0.0, %v1069
        %v1071 = vpop.f32.mrf.mxu0
        %v1072 = vadd.f32 0.0, %v1071
        %1073 = vmatmul.bf16.gmra.mxu0 %v1011
        %v1074 = vpop.f32.mrf.mxu0
        %v1075 = vadd.f32 0.0, %v1074
        %v1076 = vpop.f32.mrf.mxu0
        %v1077 = vadd.f32 0.0, %v1076
        %1078 = vmatmul.bf16.gmra.mxu0 %v1014
        %v1079 = vpop.f32.mrf.mxu0
        %v1080 = vadd.f32 0.0, %v1079
        %v1081 = vpop.f32.mrf.mxu0
        %v1082 = vadd.f32 0.0, %v1081
        %1083 = vmatmul.bf16.gmra.mxu0 %v1017
        %v1084 = vpop.f32.mrf.mxu0
        %v1085 = vadd.f32 0.0, %v1084
        %v1086 = vpop.f32.mrf.mxu0
        %v1087 = vadd.f32 0.0, %v1086
        %1088 = vmatmul.bf16.gmra.mxu0 %v1020
        %v1089 = vpop.f32.mrf.mxu0
        %v1090 = vadd.f32 0.0, %v1089
        %v1091 = vpop.f32.mrf.mxu0
        %v1092 = vadd.f32 0.0, %v1091
        %1093 = vmatmul.bf16.gmra.mxu0 %v1023
        %v1094 = vpop.f32.mrf.mxu0
        %v1095 = vadd.f32 0.0, %v1094
        %v1096 = vpop.f32.mrf.mxu0
        %v1097 = vadd.f32 0.0, %v1096
        %1098 = vmatmul.bf16.gmra.mxu0 %v1026
        %v1099 = vpop.f32.mrf.mxu0
        %v1100 = vadd.f32 0.0, %v1099
        %v1101 = vpop.f32.mrf.mxu0
        %v1102 = vadd.f32 0.0, %v1101
        %1103 = vmatmul.bf16.gmra.mxu0 %v1029
        %v1104 = vpop.f32.mrf.mxu0
        %v1105 = vadd.f32 0.0, %v1104
        %v1106 = vpop.f32.mrf.mxu0
        %v1107 = vadd.f32 0.0, %v1106
        %1108 = vmatmul.bf16.gmra.mxu0 %v1032
        %v1109 = vpop.f32.mrf.mxu0
        %v1110 = vadd.f32 0.0, %v1109
        %v1111 = vpop.f32.mrf.mxu0
        %v1112 = vadd.f32 0.0, %v1111
        %1113 = vmatmul.bf16.gmra.mxu0 %v1035
        %v1114 = vpop.f32.mrf.mxu0
        %v1115 = vadd.f32 0.0, %v1114
        %v1116 = vpop.f32.mrf.mxu0
        %v1117 = vadd.f32 0.0, %v1116
        %1118 = vmatmul.bf16.gmra.mxu0 %v1038
        %v1119 = vpop.f32.mrf.mxu0
        %v1120 = vadd.f32 0.0, %v1119
        %v1121 = vpop.f32.mrf.mxu0
        %v1122 = vadd.f32 0.0, %v1121
        %1123 = vmatmul.bf16.gmra.mxu0 %v1041
        %v1124 = vpop.f32.mrf.mxu0
        %v1125 = vadd.f32 0.0, %v1124
        %v1126 = vpop.f32.mrf.mxu0
        %v1127 = vadd.f32 0.0, %v1126
        %1128 = vmatmul.bf16.gmra.mxu0 %v1044
        %v1129 = vpop.f32.mrf.mxu0
        %v1130 = vadd.f32 0.0, %v1129
        %v1131 = vpop.f32.mrf.mxu0
        %v1132 = vadd.f32 0.0, %v1131
        %1133 = vmatmul.bf16.gmra.mxu0 %v1047
        %v1134 = vpop.f32.mrf.mxu0
        %v1135 = vadd.f32 0.0, %v1134
        %v1136 = vpop.f32.mrf.mxu0
        %v1137 = vadd.f32 0.0, %v1136
        %1138 = vmatmul.bf16.gmra.mxu0 %v1050
        %v1139 = vpop.f32.mrf.mxu0
        %v1140 = vadd.f32 0.0, %v1139
        %v1141 = vpop.f32.mrf.mxu0
        %v1142 = vadd.f32 0.0, %v1141
        %1143 = vdwg.mxu0
        %v1144 = vadd.f32 %v488, %v1065
        %v1145 = vadd.f32 %v489, %v1067
        %v1146 = vadd.f32 %v490, %v1070
        %v1147 = vadd.f32 %v491, %v1072
        %v1148 = vadd.f32 %v492, %v1075
        %v1149 = vadd.f32 %v493, %v1077
        %v1150 = vadd.f32 %v494, %v1080
        %v1151 = vadd.f32 %v495, %v1082
        %v1152 = vadd.f32 %v496, %v1085
        %v1153 = vadd.f32 %v497, %v1087
        %v1154 = vadd.f32 %v498, %v1090
        %v1155 = vadd.f32 %v499, %v1092
        %v1156 = vadd.f32 %v500, %v1095
        %v1157 = vadd.f32 %v501, %v1097
        %v1158 = vadd.f32 %v502, %v1100
        %v1159 = vadd.f32 %v503, %v1102
        %v1160 = vadd.f32 %v504, %v1105
        %v1161 = vadd.f32 %v505, %v1107
        %v1162 = vadd.f32 %v506, %v1110
        %v1163 = vadd.f32 %v507, %v1112
        %v1164 = vadd.f32 %v508, %v1115
        %v1165 = vadd.f32 %v509, %v1117
        %v1166 = vadd.f32 %v510, %v1120
        %v1167 = vadd.f32 %v511, %v1122
        %v1168 = vadd.f32 %v512, %v1125
        %v1169 = vadd.f32 %v513, %v1127
        %v1170 = vadd.f32 %v514, %v1130
        %v1171 = vadd.f32 %v515, %v1132
        %v1172 = vadd.f32 %v516, %v1135
        %v1173 = vadd.f32 %v517, %v1137
        %v1174 = vadd.f32 %v518, %v1140
        %v1175 = vadd.f32 %v519, %v1142
        %v1176 = vld [vmem:[%s232] sm:$0xe]
        %v1177 = vld [vmem:[%s232 + $0xc] sm:$0xe]
        %v1178 = vld [vmem:[%s232 + $0x18] sm:$0xe]
        %v1179 = vld [vmem:[%s232 + $0x24] sm:$0xe]
        %v1180 = vld [vmem:[%s232 + $0x30] sm:$0xe]
        %v1181 = vld [vmem:[%s232 + $0x3c] sm:$0xe]
        %v1182 = vld [vmem:[%s232 + $0x48] sm:$0xe]
        %v1183 = vld [vmem:[%s232 + $0x54] sm:$0xe]
        %v1184 = vld [vmem:[%s232 + $0x60] sm:$0xe]
        %v1185 = vld [vmem:[%s232 + $0x6c] sm:$0xe]
        %v1186 = vld [vmem:[%s232 + $0x78] sm:$0xe]
        %v1187 = vld [vmem:[%s232 + $0x84] sm:$0xe]
        %v1188 = vld [vmem:[%s232 + $0x90] sm:$0xe]
        %v1189 = vld [vmem:[%s232 + $0x9c] sm:$0xe]
        %v1190 = vld [vmem:[%s232 + $0xa8] sm:$0xe]
        %v1191 = vld [vmem:[%s232 + $0xb4] sm:$0xe]
        %vm1240 = vcmask 1042432
        %vm1241 = vcmask 1046532
        %vm1242 = vmor %vm1240, %vm1241
        %v1243 = vrot.slane %v1176, 5
        %v1244 = vrot.slane %v1243, 4
        %v1245 = vrot.slane %v521, 5
        %v1246 = vsel %vm1242, %v1244, %v1245
        %v1247 = vrot.slane %v1245, 4
        %v1248 = vrot.slane %v522, 5
        %v1249 = vsel %vm1242, %v1247, %v1248
        %v1250 = vrot.slane %v1177, 5
        %v1251 = vrot.slane %v1250, 4
        %v1252 = vrot.slane %v524, 5
        %v1253 = vsel %vm1242, %v1251, %v1252
        %v1254 = vrot.slane %v1252, 4
        %v1255 = vrot.slane %v525, 5
        %v1256 = vsel %vm1242, %v1254, %v1255
        %v1257 = vrot.slane %v1178, 5
        %v1258 = vrot.slane %v1257, 4
        %v1259 = vrot.slane %v527, 5
        %v1260 = vsel %vm1242, %v1258, %v1259
        %v1261 = vrot.slane %v1259, 4
        %v1262 = vrot.slane %v528, 5
        %v1263 = vsel %vm1242, %v1261, %v1262
        %v1264 = vrot.slane %v1179, 5
        %v1265 = vrot.slane %v1264, 4
        %v1266 = vrot.slane %v530, 5
        %v1267 = vsel %vm1242, %v1265, %v1266
        %v1268 = vrot.slane %v1266, 4
        %v1269 = vrot.slane %v531, 5
        %v1270 = vsel %vm1242, %v1268, %v1269
        %v1271 = vrot.slane %v1180, 5
        %v1272 = vrot.slane %v1271, 4
        %v1273 = vrot.slane %v533, 5
        %v1274 = vsel %vm1242, %v1272, %v1273
        %v1275 = vrot.slane %v1273, 4
        %v1276 = vrot.slane %v534, 5
        %v1277 = vsel %vm1242, %v1275, %v1276
        %v1278 = vrot.slane %v1181, 5
        %v1279 = vrot.slane %v1278, 4
        %v1280 = vrot.slane %v536, 5
        %v1281 = vsel %vm1242, %v1279, %v1280
        %v1282 = vrot.slane %v1280, 4
        %v1283 = vrot.slane %v537, 5
        %v1284 = vsel %vm1242, %v1282, %v1283
        %v1285 = vrot.slane %v1182, 5
        %v1286 = vrot.slane %v1285, 4
        %v1287 = vrot.slane %v539, 5
        %v1288 = vsel %vm1242, %v1286, %v1287
        %v1289 = vrot.slane %v1287, 4
        %v1290 = vrot.slane %v540, 5
        %v1291 = vsel %vm1242, %v1289, %v1290
        %v1292 = vrot.slane %v1183, 5
        %v1293 = vrot.slane %v1292, 4
        %v1294 = vrot.slane %v542, 5
        %v1295 = vsel %vm1242, %v1293, %v1294
        %v1296 = vrot.slane %v1294, 4
        %v1297 = vrot.slane %v543, 5
        %v1298 = vsel %vm1242, %v1296, %v1297
        %v1299 = vrot.slane %v1184, 5
        %v1300 = vrot.slane %v1299, 4
        %v1301 = vrot.slane %v545, 5
        %v1302 = vsel %vm1242, %v1300, %v1301
        %v1303 = vrot.slane %v1301, 4
        %v1304 = vrot.slane %v546, 5
        %v1305 = vsel %vm1242, %v1303, %v1304
        %v1306 = vrot.slane %v1185, 5
        %v1307 = vrot.slane %v1306, 4
        %v1308 = vrot.slane %v548, 5
        %v1309 = vsel %vm1242, %v1307, %v1308
        %v1310 = vrot.slane %v1308, 4
        %v1311 = vrot.slane %v549, 5
        %v1312 = vsel %vm1242, %v1310, %v1311
        %v1313 = vrot.slane %v1186, 5
        %v1314 = vrot.slane %v1313, 4
        %v1315 = vrot.slane %v551, 5
        %v1316 = vsel %vm1242, %v1314, %v1315
        %v1317 = vrot.slane %v1315, 4
        %v1318 = vrot.slane %v552, 5
        %v1319 = vsel %vm1242, %v1317, %v1318
        %v1320 = vrot.slane %v1187, 5
        %v1321 = vrot.slane %v1320, 4
        %v1322 = vrot.slane %v554, 5
        %v1323 = vsel %vm1242, %v1321, %v1322
        %v1324 = vrot.slane %v1322, 4
        %v1325 = vrot.slane %v555, 5
        %v1326 = vsel %vm1242, %v1324, %v1325
        %v1327 = vrot.slane %v1188, 5
        %v1328 = vrot.slane %v1327, 4
        %v1329 = vrot.slane %v557, 5
        %v1330 = vsel %vm1242, %v1328, %v1329
        %v1331 = vrot.slane %v1329, 4
        %v1332 = vrot.slane %v558, 5
        %v1333 = vsel %vm1242, %v1331, %v1332
        %v1334 = vrot.slane %v1189, 5
        %v1335 = vrot.slane %v1334, 4
        %v1336 = vrot.slane %v560, 5
        %v1337 = vsel %vm1242, %v1335, %v1336
        %v1338 = vrot.slane %v1336, 4
        %v1339 = vrot.slane %v561, 5
        %v1340 = vsel %vm1242, %v1338, %v1339
        %v1341 = vrot.slane %v1190, 5
        %v1342 = vrot.slane %v1341, 4
        %v1343 = vrot.slane %v563, 5
        %v1344 = vsel %vm1242, %v1342, %v1343
        %v1345 = vrot.slane %v1343, 4
        %v1346 = vrot.slane %v564, 5
        %v1347 = vsel %vm1242, %v1345, %v1346
        %v1348 = vrot.slane %v1191, 5
        %v1349 = vrot.slane %v1348, 4
        %v1350 = vrot.slane %v566, 5
        %v1351 = vsel %vm1242, %v1349, %v1350
        %v1352 = vrot.slane %v1350, 4
        %v1353 = vrot.slane %v567, 5
        %v1354 = vsel %vm1242, %v1352, %v1353
        %v1355 = vld [vmem:[%s219 + $0x8] sm:$0xf]
        %v1356 = vunpack.c.l.b16 %v1246
        %v1357 = vunpack.c.l.b16 %v1249
        %v1358 = vunpack.c.l.b16 %v1253
        %v1359 = vunpack.c.l.b16 %v1256
        %v1360 = vunpack.c.l.b16 %v1260
        %v1361 = vunpack.c.l.b16 %v1263
        %v1362 = vunpack.c.l.b16 %v1267
        %v1363 = vunpack.c.l.b16 %v1270
        %v1364 = vunpack.c.l.b16 %v1274
        %v1365 = vunpack.c.l.b16 %v1277
        %v1366 = vunpack.c.l.b16 %v1281
        %v1367 = vunpack.c.l.b16 %v1284
        %v1368 = vunpack.c.l.b16 %v1288
        %v1369 = vunpack.c.l.b16 %v1291
        %v1370 = vunpack.c.l.b16 %v1295
        %v1371 = vunpack.c.l.b16 %v1298
        %v1372 = vunpack.c.l.b16 %v1302
        %v1373 = vunpack.c.l.b16 %v1305
        %v1374 = vunpack.c.l.b16 %v1309
        %v1375 = vunpack.c.l.b16 %v1312
        %v1376 = vunpack.c.l.b16 %v1316
        %v1377 = vunpack.c.l.b16 %v1319
        %v1378 = vunpack.c.l.b16 %v1323
        %v1379 = vunpack.c.l.b16 %v1326
        %v1380 = vunpack.c.l.b16 %v1330
        %v1381 = vunpack.c.l.b16 %v1333
        %v1382 = vunpack.c.l.b16 %v1337
        %v1383 = vunpack.c.l.b16 %v1340
        %v1384 = vunpack.c.l.b16 %v1344
        %v1385 = vunpack.c.l.b16 %v1347
        %v1386 = vunpack.c.l.b16 %v1351
        %v1387 = vunpack.c.l.b16 %v1354
        %v1388 = vpack.c.b16 %v1357, %v1356
        %v1389 = vpack.c.b16 %v1359, %v1358
        %v1390 = vpack.c.b16 %v1361, %v1360
        %v1391 = vpack.c.b16 %v1363, %v1362
        %v1392 = vpack.c.b16 %v1365, %v1364
        %v1393 = vpack.c.b16 %v1367, %v1366
        %v1394 = vpack.c.b16 %v1369, %v1368
        %v1395 = vpack.c.b16 %v1371, %v1370
        %v1396 = vpack.c.b16 %v1373, %v1372
        %v1397 = vpack.c.b16 %v1375, %v1374
        %v1398 = vpack.c.b16 %v1377, %v1376
        %v1399 = vpack.c.b16 %v1379, %v1378
        %v1400 = vpack.c.b16 %v1381, %v1380
        %v1401 = vpack.c.b16 %v1383, %v1382
        %v1402 = vpack.c.b16 %v1385, %v1384
        %v1403 = vpack.c.b16 %v1387, %v1386
        %v1405 = vsel %vm346, %v1388, 0
        %v1408 = vsel %vm346, %v1389, 0
        %v1411 = vsel %vm346, %v1390, 0
        %v1414 = vsel %vm346, %v1391, 0
        %v1417 = vsel %vm346, %v1392, 0
        %v1420 = vsel %vm346, %v1393, 0
        %v1423 = vsel %vm346, %v1394, 0
        %v1426 = vsel %vm346, %v1395, 0
        %v1429 = vsel %vm346, %v1396, 0
        %v1432 = vsel %vm346, %v1397, 0
        %v1435 = vsel %vm346, %v1398, 0
        %v1438 = vsel %vm346, %v1399, 0
        %v1441 = vsel %vm346, %v1400, 0
        %v1444 = vsel %vm346, %v1401, 0
        %v1447 = vsel %vm346, %v1402, 0
        %v1450 = vsel %vm346, %v1403, 0
        %v1453 = vsel %vm395, %v1355, 0
        %1455 = vmatpush.bf16.msra.mxu0 0
        %1456 = vmatpush.bf16.msra.mxu0 0
        %1457 = vmatpush.bf16.msra.mxu0 0
        %1458 = vmatpush.bf16.msra.mxu0 0
        %1459 = vmatpush.bf16.msra.mxu0 0
        %1460 = vmatpush.bf16.msra.mxu0 0
        %1461 = vmatpush.bf16.msra.mxu0 0
        %1462 = vmatpush.bf16.msra.mxu0 %v1453
        %1463 = vmatmul.bf16.gmra.mxu0 %v1405
        %v1464 = vpop.f32.mrf.mxu0
        %v1465 = vadd.f32 0.0, %v1464
        %v1466 = vpop.f32.mrf.mxu0
        %v1467 = vadd.f32 0.0, %v1466
        %1468 = vmatmul.bf16.gmra.mxu0 %v1408
        %v1469 = vpop.f32.mrf.mxu0
        %v1470 = vadd.f32 0.0, %v1469
        %v1471 = vpop.f32.mrf.mxu0
        %v1472 = vadd.f32 0.0, %v1471
        %1473 = vmatmul.bf16.gmra.mxu0 %v1411
        %v1474 = vpop.f32.mrf.mxu0
        %v1475 = vadd.f32 0.0, %v1474
        %v1476 = vpop.f32.mrf.mxu0
        %v1477 = vadd.f32 0.0, %v1476
        %1478 = vmatmul.bf16.gmra.mxu0 %v1414
        %v1479 = vpop.f32.mrf.mxu0
        %v1480 = vadd.f32 0.0, %v1479
        %v1481 = vpop.f32.mrf.mxu0
        %v1482 = vadd.f32 0.0, %v1481
        %1483 = vmatmul.bf16.gmra.mxu0 %v1417
        %v1484 = vpop.f32.mrf.mxu0
        %v1485 = vadd.f32 0.0, %v1484
        %v1486 = vpop.f32.mrf.mxu0
        %v1487 = vadd.f32 0.0, %v1486
        %1488 = vmatmul.bf16.gmra.mxu0 %v1420
        %v1489 = vpop.f32.mrf.mxu0
        %v1490 = vadd.f32 0.0, %v1489
        %v1491 = vpop.f32.mrf.mxu0
        %v1492 = vadd.f32 0.0, %v1491
        %1493 = vmatmul.bf16.gmra.mxu0 %v1423
        %v1494 = vpop.f32.mrf.mxu0
        %v1495 = vadd.f32 0.0, %v1494
        %v1496 = vpop.f32.mrf.mxu0
        %v1497 = vadd.f32 0.0, %v1496
        %1498 = vmatmul.bf16.gmra.mxu0 %v1426
        %v1499 = vpop.f32.mrf.mxu0
        %v1500 = vadd.f32 0.0, %v1499
        %v1501 = vpop.f32.mrf.mxu0
        %v1502 = vadd.f32 0.0, %v1501
        %1503 = vmatmul.bf16.gmra.mxu0 %v1429
        %v1504 = vpop.f32.mrf.mxu0
        %v1505 = vadd.f32 0.0, %v1504
        %v1506 = vpop.f32.mrf.mxu0
        %v1507 = vadd.f32 0.0, %v1506
        %1508 = vmatmul.bf16.gmra.mxu0 %v1432
        %v1509 = vpop.f32.mrf.mxu0
        %v1510 = vadd.f32 0.0, %v1509
        %v1511 = vpop.f32.mrf.mxu0
        %v1512 = vadd.f32 0.0, %v1511
        %1513 = vmatmul.bf16.gmra.mxu0 %v1435
        %v1514 = vpop.f32.mrf.mxu0
        %v1515 = vadd.f32 0.0, %v1514
        %v1516 = vpop.f32.mrf.mxu0
        %v1517 = vadd.f32 0.0, %v1516
        %1518 = vmatmul.bf16.gmra.mxu0 %v1438
        %v1519 = vpop.f32.mrf.mxu0
        %v1520 = vadd.f32 0.0, %v1519
        %v1521 = vpop.f32.mrf.mxu0
        %v1522 = vadd.f32 0.0, %v1521
        %1523 = vmatmul.bf16.gmra.mxu0 %v1441
        %v1524 = vpop.f32.mrf.mxu0
        %v1525 = vadd.f32 0.0, %v1524
        %v1526 = vpop.f32.mrf.mxu0
        %v1527 = vadd.f32 0.0, %v1526
        %1528 = vmatmul.bf16.gmra.mxu0 %v1444
        %v1529 = vpop.f32.mrf.mxu0
        %v1530 = vadd.f32 0.0, %v1529
        %v1531 = vpop.f32.mrf.mxu0
        %v1532 = vadd.f32 0.0, %v1531
        %1533 = vmatmul.bf16.gmra.mxu0 %v1447
        %v1534 = vpop.f32.mrf.mxu0
        %v1535 = vadd.f32 0.0, %v1534
        %v1536 = vpop.f32.mrf.mxu0
        %v1537 = vadd.f32 0.0, %v1536
        %1538 = vmatmul.bf16.gmra.mxu0 %v1450
        %v1539 = vpop.f32.mrf.mxu0
        %v1540 = vadd.f32 0.0, %v1539
        %v1541 = vpop.f32.mrf.mxu0
        %v1542 = vadd.f32 0.0, %v1541
        %1543 = vdwg.mxu0
        %v1544 = vadd.f32 %v1144, %v1465
        %v1545 = vadd.f32 %v1145, %v1467
        %v1546 = vadd.f32 %v1146, %v1470
        %v1547 = vadd.f32 %v1147, %v1472
        %v1548 = vadd.f32 %v1148, %v1475
        %v1549 = vadd.f32 %v1149, %v1477
        %v1550 = vadd.f32 %v1150, %v1480
        %v1551 = vadd.f32 %v1151, %v1482
        %v1552 = vadd.f32 %v1152, %v1485
        %v1553 = vadd.f32 %v1153, %v1487
        %v1554 = vadd.f32 %v1154, %v1490
        %v1555 = vadd.f32 %v1155, %v1492
        %v1556 = vadd.f32 %v1156, %v1495
        %v1557 = vadd.f32 %v1157, %v1497
        %v1558 = vadd.f32 %v1158, %v1500
        %v1559 = vadd.f32 %v1159, %v1502
        %v1560 = vadd.f32 %v1160, %v1505
        %v1561 = vadd.f32 %v1161, %v1507
        %v1562 = vadd.f32 %v1162, %v1510
        %v1563 = vadd.f32 %v1163, %v1512
        %v1564 = vadd.f32 %v1164, %v1515
        %v1565 = vadd.f32 %v1165, %v1517
        %v1566 = vadd.f32 %v1166, %v1520
        %v1567 = vadd.f32 %v1167, %v1522
        %v1568 = vadd.f32 %v1168, %v1525
        %v1569 = vadd.f32 %v1169, %v1527
        %v1570 = vadd.f32 %v1170, %v1530
        %v1571 = vadd.f32 %v1171, %v1532
        %v1572 = vadd.f32 %v1172, %v1535
        %v1573 = vadd.f32 %v1173, %v1537
        %v1574 = vadd.f32 %v1174, %v1540
        %v1575 = vadd.f32 %v1175, %v1542
        %s1576 = sadd.s32 %s225, 1
        %s1577 = smul.u32 %s1576, 3
        %s1578 = smul.addr %s1577, 4
        %s1579 = scalar_lea.vmem %s215, %s1578
        %v1580 = vld [vmem:[%s1579] sm:$0xf]
        %v1581 = vld [vmem:[%s1579 + $0x4] sm:$0xf]
        %v1582 = vld [vmem:[%s1579 + $0xc] sm:$0xf]
        %v1583 = vld [vmem:[%s1579 + $0x10] sm:$0xf]
        %v1584 = vld [vmem:[%s1579 + $0x18] sm:$0xf]
        %v1585 = vld [vmem:[%s1579 + $0x1c] sm:$0xf]
        %v1586 = vld [vmem:[%s1579 + $0x24] sm:$0xf]
        %v1587 = vld [vmem:[%s1579 + $0x28] sm:$0xf]
        %v1588 = vld [vmem:[%s1579 + $0x30] sm:$0xf]
        %v1589 = vld [vmem:[%s1579 + $0x34] sm:$0xf]
        %v1590 = vld [vmem:[%s1579 + $0x3c] sm:$0xf]
        %v1591 = vld [vmem:[%s1579 + $0x40] sm:$0xf]
        %v1592 = vld [vmem:[%s1579 + $0x48] sm:$0xf]
        %v1593 = vld [vmem:[%s1579 + $0x4c] sm:$0xf]
        %v1594 = vld [vmem:[%s1579 + $0x54] sm:$0xf]
        %v1595 = vld [vmem:[%s1579 + $0x58] sm:$0xf]
        %v1596 = vld [vmem:[%s1579 + $0x60] sm:$0xf]
        %v1597 = vld [vmem:[%s1579 + $0x64] sm:$0xf]
        %v1598 = vld [vmem:[%s1579 + $0x6c] sm:$0xf]
        %v1599 = vld [vmem:[%s1579 + $0x70] sm:$0xf]
        %v1600 = vld [vmem:[%s1579 + $0x78] sm:$0xf]
        %v1601 = vld [vmem:[%s1579 + $0x7c] sm:$0xf]
        %v1602 = vld [vmem:[%s1579 + $0x84] sm:$0xf]
        %v1603 = vld [vmem:[%s1579 + $0x88] sm:$0xf]
        %v1604 = vld [vmem:[%s1579 + $0x90] sm:$0xf]
        %v1605 = vld [vmem:[%s1579 + $0x94] sm:$0xf]
        %v1606 = vld [vmem:[%s1579 + $0x9c] sm:$0xf]
        %v1607 = vld [vmem:[%s1579 + $0xa0] sm:$0xf]
        %v1608 = vld [vmem:[%s1579 + $0xa8] sm:$0xf]
        %v1609 = vld [vmem:[%s1579 + $0xac] sm:$0xf]
        %v1610 = vld [vmem:[%s1579 + $0xb4] sm:$0xf]
        %v1611 = vld [vmem:[%s1579 + $0xb8] sm:$0xf]
        %v1612 = vld [vmem:[%s219 + $0xc] sm:$0xf]
        %v1645 = vunpack.c.l.b16 %v1580
        %v1646 = vunpack.c.l.b16 %v1581
        %v1647 = vunpack.c.l.b16 %v1582
        %v1648 = vunpack.c.l.b16 %v1583
        %v1649 = vunpack.c.l.b16 %v1584
        %v1650 = vunpack.c.l.b16 %v1585
        %v1651 = vunpack.c.l.b16 %v1586
        %v1652 = vunpack.c.l.b16 %v1587
        %v1653 = vunpack.c.l.b16 %v1588
        %v1654 = vunpack.c.l.b16 %v1589
        %v1655 = vunpack.c.l.b16 %v1590
        %v1656 = vunpack.c.l.b16 %v1591
        %v1657 = vunpack.c.l.b16 %v1592
        %v1658 = vunpack.c.l.b16 %v1593
        %v1659 = vunpack.c.l.b16 %v1594
        %v1660 = vunpack.c.l.b16 %v1595
        %v1661 = vunpack.c.l.b16 %v1596
        %v1662 = vunpack.c.l.b16 %v1597
        %v1663 = vunpack.c.l.b16 %v1598
        %v1664 = vunpack.c.l.b16 %v1599
        %v1665 = vunpack.c.l.b16 %v1600
        %v1666 = vunpack.c.l.b16 %v1601
        %v1667 = vunpack.c.l.b16 %v1602
        %v1668 = vunpack.c.l.b16 %v1603
        %v1669 = vunpack.c.l.b16 %v1604
        %v1670 = vunpack.c.l.b16 %v1605
        %v1671 = vunpack.c.l.b16 %v1606
        %v1672 = vunpack.c.l.b16 %v1607
        %v1673 = vunpack.c.l.b16 %v1608
        %v1674 = vunpack.c.l.b16 %v1609
        %v1675 = vunpack.c.l.b16 %v1610
        %v1676 = vunpack.c.l.b16 %v1611
        %v1677 = vpack.c.b16 %v1646, %v1645
        %v1678 = vpack.c.b16 %v1648, %v1647
        %v1679 = vpack.c.b16 %v1650, %v1649
        %v1680 = vpack.c.b16 %v1652, %v1651
        %v1681 = vpack.c.b16 %v1654, %v1653
        %v1682 = vpack.c.b16 %v1656, %v1655
        %v1683 = vpack.c.b16 %v1658, %v1657
        %v1684 = vpack.c.b16 %v1660, %v1659
        %v1685 = vpack.c.b16 %v1662, %v1661
        %v1686 = vpack.c.b16 %v1664, %v1663
        %v1687 = vpack.c.b16 %v1666, %v1665
        %v1688 = vpack.c.b16 %v1668, %v1667
        %v1689 = vpack.c.b16 %v1670, %v1669
        %v1690 = vpack.c.b16 %v1672, %v1671
        %v1691 = vpack.c.b16 %v1674, %v1673
        %v1692 = vpack.c.b16 %v1676, %v1675
        %v1694 = vsel %vm346, %v1677, 0
        %v1697 = vsel %vm346, %v1678, 0
        %v1700 = vsel %vm346, %v1679, 0
        %v1703 = vsel %vm346, %v1680, 0
        %v1706 = vsel %vm346, %v1681, 0
        %v1709 = vsel %vm346, %v1682, 0
        %v1712 = vsel %vm346, %v1683, 0
        %v1715 = vsel %vm346, %v1684, 0
        %v1718 = vsel %vm346, %v1685, 0
        %v1721 = vsel %vm346, %v1686, 0
        %v1724 = vsel %vm346, %v1687, 0
        %v1727 = vsel %vm346, %v1688, 0
        %v1730 = vsel %vm346, %v1689, 0
        %v1733 = vsel %vm346, %v1690, 0
        %v1736 = vsel %vm346, %v1691, 0
        %v1739 = vsel %vm346, %v1692, 0
        %v1742 = vsel %vm395, %v1612, 0
        %1744 = vmatpush.bf16.msra.mxu0 0
        %1745 = vmatpush.bf16.msra.mxu0 0
        %1746 = vmatpush.bf16.msra.mxu0 0
        %1747 = vmatpush.bf16.msra.mxu0 0
        %1748 = vmatpush.bf16.msra.mxu0 0
        %1749 = vmatpush.bf16.msra.mxu0 0
        %1750 = vmatpush.bf16.msra.mxu0 0
        %1751 = vmatpush.bf16.msra.mxu0 %v1742
        %1752 = vmatmul.bf16.gmra.mxu0 %v1694
        %v1753 = vpop.f32.mrf.mxu0
        %v1754 = vadd.f32 0.0, %v1753
        %v1755 = vpop.f32.mrf.mxu0
        %v1756 = vadd.f32 0.0, %v1755
        %1757 = vmatmul.bf16.gmra.mxu0 %v1697
        %v1758 = vpop.f32.mrf.mxu0
        %v1759 = vadd.f32 0.0, %v1758
        %v1760 = vpop.f32.mrf.mxu0
        %v1761 = vadd.f32 0.0, %v1760
        %1762 = vmatmul.bf16.gmra.mxu0 %v1700
        %v1763 = vpop.f32.mrf.mxu0
        %v1764 = vadd.f32 0.0, %v1763
        %v1765 = vpop.f32.mrf.mxu0
        %v1766 = vadd.f32 0.0, %v1765
        %1767 = vmatmul.bf16.gmra.mxu0 %v1703
        %v1768 = vpop.f32.mrf.mxu0
        %v1769 = vadd.f32 0.0, %v1768
        %v1770 = vpop.f32.mrf.mxu0
        %v1771 = vadd.f32 0.0, %v1770
        %1772 = vmatmul.bf16.gmra.mxu0 %v1706
        %v1773 = vpop.f32.mrf.mxu0
        %v1774 = vadd.f32 0.0, %v1773
        %v1775 = vpop.f32.mrf.mxu0
        %v1776 = vadd.f32 0.0, %v1775
        %1777 = vmatmul.bf16.gmra.mxu0 %v1709
        %v1778 = vpop.f32.mrf.mxu0
        %v1779 = vadd.f32 0.0, %v1778
        %v1780 = vpop.f32.mrf.mxu0
        %v1781 = vadd.f32 0.0, %v1780
        %1782 = vmatmul.bf16.gmra.mxu0 %v1712
        %v1783 = vpop.f32.mrf.mxu0
        %v1784 = vadd.f32 0.0, %v1783
        %v1785 = vpop.f32.mrf.mxu0
        %v1786 = vadd.f32 0.0, %v1785
        %1787 = vmatmul.bf16.gmra.mxu0 %v1715
        %v1788 = vpop.f32.mrf.mxu0
        %v1789 = vadd.f32 0.0, %v1788
        %v1790 = vpop.f32.mrf.mxu0
        %v1791 = vadd.f32 0.0, %v1790
        %1792 = vmatmul.bf16.gmra.mxu0 %v1718
        %v1793 = vpop.f32.mrf.mxu0
        %v1794 = vadd.f32 0.0, %v1793
        %v1795 = vpop.f32.mrf.mxu0
        %v1796 = vadd.f32 0.0, %v1795
        %1797 = vmatmul.bf16.gmra.mxu0 %v1721
        %v1798 = vpop.f32.mrf.mxu0
        %v1799 = vadd.f32 0.0, %v1798
        %v1800 = vpop.f32.mrf.mxu0
        %v1801 = vadd.f32 0.0, %v1800
        %1802 = vmatmul.bf16.gmra.mxu0 %v1724
        %v1803 = vpop.f32.mrf.mxu0
        %v1804 = vadd.f32 0.0, %v1803
        %v1805 = vpop.f32.mrf.mxu0
        %v1806 = vadd.f32 0.0, %v1805
        %1807 = vmatmul.bf16.gmra.mxu0 %v1727
        %v1808 = vpop.f32.mrf.mxu0
        %v1809 = vadd.f32 0.0, %v1808
        %v1810 = vpop.f32.mrf.mxu0
        %v1811 = vadd.f32 0.0, %v1810
        %1812 = vmatmul.bf16.gmra.mxu0 %v1730
        %v1813 = vpop.f32.mrf.mxu0
        %v1814 = vadd.f32 0.0, %v1813
        %v1815 = vpop.f32.mrf.mxu0
        %v1816 = vadd.f32 0.0, %v1815
        %1817 = vmatmul.bf16.gmra.mxu0 %v1733
        %v1818 = vpop.f32.mrf.mxu0
        %v1819 = vadd.f32 0.0, %v1818
        %v1820 = vpop.f32.mrf.mxu0
        %v1821 = vadd.f32 0.0, %v1820
        %1822 = vmatmul.bf16.gmra.mxu0 %v1736
        %v1823 = vpop.f32.mrf.mxu0
        %v1824 = vadd.f32 0.0, %v1823
        %v1825 = vpop.f32.mrf.mxu0
        %v1826 = vadd.f32 0.0, %v1825
        %1827 = vmatmul.bf16.gmra.mxu0 %v1739
        %v1828 = vpop.f32.mrf.mxu0
        %v1829 = vadd.f32 0.0, %v1828
        %v1830 = vpop.f32.mrf.mxu0
        %v1831 = vadd.f32 0.0, %v1830
        %1832 = vdwg.mxu0
        %v1833 = vadd.f32 %v1544, %v1754
        %v1834 = vadd.f32 %v1545, %v1756
        %v1835 = vadd.f32 %v1546, %v1759
        %v1836 = vadd.f32 %v1547, %v1761
        %v1837 = vadd.f32 %v1548, %v1764
        %v1838 = vadd.f32 %v1549, %v1766
        %v1839 = vadd.f32 %v1550, %v1769
        %v1840 = vadd.f32 %v1551, %v1771
        %v1841 = vadd.f32 %v1552, %v1774
        %v1842 = vadd.f32 %v1553, %v1776
        %v1843 = vadd.f32 %v1554, %v1779
        %v1844 = vadd.f32 %v1555, %v1781
        %v1845 = vadd.f32 %v1556, %v1784
        %v1846 = vadd.f32 %v1557, %v1786
        %v1847 = vadd.f32 %v1558, %v1789
        %v1848 = vadd.f32 %v1559, %v1791
        %v1849 = vadd.f32 %v1560, %v1794
        %v1850 = vadd.f32 %v1561, %v1796
        %v1851 = vadd.f32 %v1562, %v1799
        %v1852 = vadd.f32 %v1563, %v1801
        %v1853 = vadd.f32 %v1564, %v1804
        %v1854 = vadd.f32 %v1565, %v1806
        %v1855 = vadd.f32 %v1566, %v1809
        %v1856 = vadd.f32 %v1567, %v1811
        %v1857 = vadd.f32 %v1568, %v1814
        %v1858 = vadd.f32 %v1569, %v1816
        %v1859 = vadd.f32 %v1570, %v1819
        %v1860 = vadd.f32 %v1571, %v1821
        %v1861 = vadd.f32 %v1572, %v1824
        %v1862 = vadd.f32 %v1573, %v1826
        %v1863 = vadd.f32 %v1574, %v1829
        %v1864 = vadd.f32 %v1575, %v1831
        %v1865 = vld [vmem:[%s1579] sm:$0xf]
        %v1866 = vld [vmem:[%s1579 + $0x4] sm:$0xf]
        %v1867 = vld [vmem:[%s1579 + $0x8] sm:$0x1]
        %v1868 = vld [vmem:[%s1579 + $0xc] sm:$0xf]
        %v1869 = vld [vmem:[%s1579 + $0x10] sm:$0xf]
        %v1870 = vld [vmem:[%s1579 + $0x14] sm:$0x1]
        %v1871 = vld [vmem:[%s1579 + $0x18] sm:$0xf]
        %v1872 = vld [vmem:[%s1579 + $0x1c] sm:$0xf]
        %v1873 = vld [vmem:[%s1579 + $0x20] sm:$0x1]
        %v1874 = vld [vmem:[%s1579 + $0x24] sm:$0xf]
        %v1875 = vld [vmem:[%s1579 + $0x28] sm:$0xf]
        %v1876 = vld [vmem:[%s1579 + $0x2c] sm:$0x1]
        %v1877 = vld [vmem:[%s1579 + $0x30] sm:$0xf]
        %v1878 = vld [vmem:[%s1579 + $0x34] sm:$0xf]
        %v1879 = vld [vmem:[%s1579 + $0x38] sm:$0x1]
        %v1880 = vld [vmem:[%s1579 + $0x3c] sm:$0xf]
        %v1881 = vld [vmem:[%s1579 + $0x40] sm:$0xf]
        %v1882 = vld [vmem:[%s1579 + $0x44] sm:$0x1]
        %v1883 = vld [vmem:[%s1579 + $0x48] sm:$0xf]
        %v1884 = vld [vmem:[%s1579 + $0x4c] sm:$0xf]
        %v1885 = vld [vmem:[%s1579 + $0x50] sm:$0x1]
        %v1886 = vld [vmem:[%s1579 + $0x54] sm:$0xf]
        %v1887 = vld [vmem:[%s1579 + $0x58] sm:$0xf]
        %v1888 = vld [vmem:[%s1579 + $0x5c] sm:$0x1]
        %v1889 = vld [vmem:[%s1579 + $0x60] sm:$0xf]
        %v1890 = vld [vmem:[%s1579 + $0x64] sm:$0xf]
        %v1891 = vld [vmem:[%s1579 + $0x68] sm:$0x1]
        %v1892 = vld [vmem:[%s1579 + $0x6c] sm:$0xf]
        %v1893 = vld [vmem:[%s1579 + $0x70] sm:$0xf]
        %v1894 = vld [vmem:[%s1579 + $0x74] sm:$0x1]
        %v1895 = vld [vmem:[%s1579 + $0x78] sm:$0xf]
        %v1896 = vld [vmem:[%s1579 + $0x7c] sm:$0xf]
        %v1897 = vld [vmem:[%s1579 + $0x80] sm:$0x1]
        %v1898 = vld [vmem:[%s1579 + $0x84] sm:$0xf]
        %v1899 = vld [vmem:[%s1579 + $0x88] sm:$0xf]
        %v1900 = vld [vmem:[%s1579 + $0x8c] sm:$0x1]
        %v1901 = vld [vmem:[%s1579 + $0x90] sm:$0xf]
        %v1902 = vld [vmem:[%s1579 + $0x94] sm:$0xf]
        %v1903 = vld [vmem:[%s1579 + $0x98] sm:$0x1]
        %v1904 = vld [vmem:[%s1579 + $0x9c] sm:$0xf]
        %v1905 = vld [vmem:[%s1579 + $0xa0] sm:$0xf]
        %v1906 = vld [vmem:[%s1579 + $0xa4] sm:$0x1]
        %v1907 = vld [vmem:[%s1579 + $0xa8] sm:$0xf]
        %v1908 = vld [vmem:[%s1579 + $0xac] sm:$0xf]
        %v1909 = vld [vmem:[%s1579 + $0xb0] sm:$0x1]
        %v1910 = vld [vmem:[%s1579 + $0xb4] sm:$0xf]
        %v1911 = vld [vmem:[%s1579 + $0xb8] sm:$0xf]
        %v1912 = vld [vmem:[%s1579 + $0xbc] sm:$0x1]
        %v1914 = vshrl.u32 %v1865, 16
        %v1916 = vrot.slane %v1914, 4
        %v1917 = vshll.u32 %v1865, 16
        %v1919 = vrot.slane %v1917, 5
        %v1920 = vor.u32 %v1916, %v1919
        %v1921 = vrot.slane %v1920, 4
        %v1923 = vshll.u32 %v1866, 16
        %v1925 = vrot.slane %v1923, 5
        %v1926 = vsel %vm570, %v1921, %v1925
        %v1927 = vshrl.u32 %v1866, 16
        %v1929 = vrot.slane %v1927, 4
        %v1930 = vor.u32 %v1929, %v1925
        %v1931 = vrot.slane %v1930, 4
        %v1933 = vshll.u32 %v1867, 16
        %v1935 = vrot.slane %v1933, 5
        %v1936 = vsel %vm570, %v1931, %v1935
        %v1938 = vshrl.u32 %v1868, 16
        %v1940 = vrot.slane %v1938, 4
        %v1941 = vshll.u32 %v1868, 16
        %v1943 = vrot.slane %v1941, 5
        %v1944 = vor.u32 %v1940, %v1943
        %v1945 = vrot.slane %v1944, 4
        %v1947 = vshll.u32 %v1869, 16
        %v1949 = vrot.slane %v1947, 5
        %v1950 = vsel %vm570, %v1945, %v1949
        %v1951 = vshrl.u32 %v1869, 16
        %v1953 = vrot.slane %v1951, 4
        %v1954 = vor.u32 %v1953, %v1949
        %v1955 = vrot.slane %v1954, 4
        %v1957 = vshll.u32 %v1870, 16
        %v1959 = vrot.slane %v1957, 5
        %v1960 = vsel %vm570, %v1955, %v1959
        %v1962 = vshrl.u32 %v1871, 16
        %v1964 = vrot.slane %v1962, 4
        %v1965 = vshll.u32 %v1871, 16
        %v1967 = vrot.slane %v1965, 5
        %v1968 = vor.u32 %v1964, %v1967
        %v1969 = vrot.slane %v1968, 4
        %v1971 = vshll.u32 %v1872, 16
        %v1973 = vrot.slane %v1971, 5
        %v1974 = vsel %vm570, %v1969, %v1973
        %v1975 = vshrl.u32 %v1872, 16
        %v1977 = vrot.slane %v1975, 4
        %v1978 = vor.u32 %v1977, %v1973
        %v1979 = vrot.slane %v1978, 4
        %v1981 = vshll.u32 %v1873, 16
        %v1983 = vrot.slane %v1981, 5
        %v1984 = vsel %vm570, %v1979, %v1983
        %v1986 = vshrl.u32 %v1874, 16
        %v1988 = vrot.slane %v1986, 4
        %v1989 = vshll.u32 %v1874, 16
        %v1991 = vrot.slane %v1989, 5
        %v1992 = vor.u32 %v1988, %v1991
        %v1993 = vrot.slane %v1992, 4
        %v1995 = vshll.u32 %v1875, 16
        %v1997 = vrot.slane %v1995, 5
        %v1998 = vsel %vm570, %v1993, %v1997
        %v1999 = vshrl.u32 %v1875, 16
        %v2001 = vrot.slane %v1999, 4
        %v2002 = vor.u32 %v2001, %v1997
        %v2003 = vrot.slane %v2002, 4
        %v2005 = vshll.u32 %v1876, 16
        %v2007 = vrot.slane %v2005, 5
        %v2008 = vsel %vm570, %v2003, %v2007
        %v2010 = vshrl.u32 %v1877, 16
        %v2012 = vrot.slane %v2010, 4
        %v2013 = vshll.u32 %v1877, 16
        %v2015 = vrot.slane %v2013, 5
        %v2016 = vor.u32 %v2012, %v2015
        %v2017 = vrot.slane %v2016, 4
        %v2019 = vshll.u32 %v1878, 16
        %v2021 = vrot.slane %v2019, 5
        %v2022 = vsel %vm570, %v2017, %v2021
        %v2023 = vshrl.u32 %v1878, 16
        %v2025 = vrot.slane %v2023, 4
        %v2026 = vor.u32 %v2025, %v2021
        %v2027 = vrot.slane %v2026, 4
        %v2029 = vshll.u32 %v1879, 16
        %v2031 = vrot.slane %v2029, 5
        %v2032 = vsel %vm570, %v2027, %v2031
        %v2034 = vshrl.u32 %v1880, 16
        %v2036 = vrot.slane %v2034, 4
        %v2037 = vshll.u32 %v1880, 16
        %v2039 = vrot.slane %v2037, 5
        %v2040 = vor.u32 %v2036, %v2039
        %v2041 = vrot.slane %v2040, 4
        %v2043 = vshll.u32 %v1881, 16
        %v2045 = vrot.slane %v2043, 5
        %v2046 = vsel %vm570, %v2041, %v2045
        %v2047 = vshrl.u32 %v1881, 16
        %v2049 = vrot.slane %v2047, 4
        %v2050 = vor.u32 %v2049, %v2045
        %v2051 = vrot.slane %v2050, 4
        %v2053 = vshll.u32 %v1882, 16
        %v2055 = vrot.slane %v2053, 5
        %v2056 = vsel %vm570, %v2051, %v2055
        %v2058 = vshrl.u32 %v1883, 16
        %v2060 = vrot.slane %v2058, 4
        %v2061 = vshll.u32 %v1883, 16
        %v2063 = vrot.slane %v2061, 5
        %v2064 = vor.u32 %v2060, %v2063
        %v2065 = vrot.slane %v2064, 4
        %v2067 = vshll.u32 %v1884, 16
        %v2069 = vrot.slane %v2067, 5
        %v2070 = vsel %vm570, %v2065, %v2069
        %v2071 = vshrl.u32 %v1884, 16
        %v2073 = vrot.slane %v2071, 4
        %v2074 = vor.u32 %v2073, %v2069
        %v2075 = vrot.slane %v2074, 4
        %v2077 = vshll.u32 %v1885, 16
        %v2079 = vrot.slane %v2077, 5
        %v2080 = vsel %vm570, %v2075, %v2079
        %v2082 = vshrl.u32 %v1886, 16
        %v2084 = vrot.slane %v2082, 4
        %v2085 = vshll.u32 %v1886, 16
        %v2087 = vrot.slane %v2085, 5
        %v2088 = vor.u32 %v2084, %v2087
        %v2089 = vrot.slane %v2088, 4
        %v2091 = vshll.u32 %v1887, 16
        %v2093 = vrot.slane %v2091, 5
        %v2094 = vsel %vm570, %v2089, %v2093
        %v2095 = vshrl.u32 %v1887, 16
        %v2097 = vrot.slane %v2095, 4
        %v2098 = vor.u32 %v2097, %v2093
        %v2099 = vrot.slane %v2098, 4
        %v2101 = vshll.u32 %v1888, 16
        %v2103 = vrot.slane %v2101, 5
        %v2104 = vsel %vm570, %v2099, %v2103
        %v2106 = vshrl.u32 %v1889, 16
        %v2108 = vrot.slane %v2106, 4
        %v2109 = vshll.u32 %v1889, 16
        %v2111 = vrot.slane %v2109, 5
        %v2112 = vor.u32 %v2108, %v2111
        %v2113 = vrot.slane %v2112, 4
        %v2115 = vshll.u32 %v1890, 16
        %v2117 = vrot.slane %v2115, 5
        %v2118 = vsel %vm570, %v2113, %v2117
        %v2119 = vshrl.u32 %v1890, 16
        %v2121 = vrot.slane %v2119, 4
        %v2122 = vor.u32 %v2121, %v2117
        %v2123 = vrot.slane %v2122, 4
        %v2125 = vshll.u32 %v1891, 16
        %v2127 = vrot.slane %v2125, 5
        %v2128 = vsel %vm570, %v2123, %v2127
        %v2130 = vshrl.u32 %v1892, 16
        %v2132 = vrot.slane %v2130, 4
        %v2133 = vshll.u32 %v1892, 16
        %v2135 = vrot.slane %v2133, 5
        %v2136 = vor.u32 %v2132, %v2135
        %v2137 = vrot.slane %v2136, 4
        %v2139 = vshll.u32 %v1893, 16
        %v2141 = vrot.slane %v2139, 5
        %v2142 = vsel %vm570, %v2137, %v2141
        %v2143 = vshrl.u32 %v1893, 16
        %v2145 = vrot.slane %v2143, 4
        %v2146 = vor.u32 %v2145, %v2141
        %v2147 = vrot.slane %v2146, 4
        %v2149 = vshll.u32 %v1894, 16
        %v2151 = vrot.slane %v2149, 5
        %v2152 = vsel %vm570, %v2147, %v2151
        %v2154 = vshrl.u32 %v1895, 16
        %v2156 = vrot.slane %v2154, 4
        %v2157 = vshll.u32 %v1895, 16
        %v2159 = vrot.slane %v2157, 5
        %v2160 = vor.u32 %v2156, %v2159
        %v2161 = vrot.slane %v2160, 4
        %v2163 = vshll.u32 %v1896, 16
        %v2165 = vrot.slane %v2163, 5
        %v2166 = vsel %vm570, %v2161, %v2165
        %v2167 = vshrl.u32 %v1896, 16
        %v2169 = vrot.slane %v2167, 4
        %v2170 = vor.u32 %v2169, %v2165
        %v2171 = vrot.slane %v2170, 4
        %v2173 = vshll.u32 %v1897, 16
        %v2175 = vrot.slane %v2173, 5
        %v2176 = vsel %vm570, %v2171, %v2175
        %v2178 = vshrl.u32 %v1898, 16
        %v2180 = vrot.slane %v2178, 4
        %v2181 = vshll.u32 %v1898, 16
        %v2183 = vrot.slane %v2181, 5
        %v2184 = vor.u32 %v2180, %v2183
        %v2185 = vrot.slane %v2184, 4
        %v2187 = vshll.u32 %v1899, 16
        %v2189 = vrot.slane %v2187, 5
        %v2190 = vsel %vm570, %v2185, %v2189
        %v2191 = vshrl.u32 %v1899, 16
        %v2193 = vrot.slane %v2191, 4
        %v2194 = vor.u32 %v2193, %v2189
        %v2195 = vrot.slane %v2194, 4
        %v2197 = vshll.u32 %v1900, 16
        %v2199 = vrot.slane %v2197, 5
        %v2200 = vsel %vm570, %v2195, %v2199
        %v2202 = vshrl.u32 %v1901, 16
        %v2204 = vrot.slane %v2202, 4
        %v2205 = vshll.u32 %v1901, 16
        %v2207 = vrot.slane %v2205, 5
        %v2208 = vor.u32 %v2204, %v2207
        %v2209 = vrot.slane %v2208, 4
        %v2211 = vshll.u32 %v1902, 16
        %v2213 = vrot.slane %v2211, 5
        %v2214 = vsel %vm570, %v2209, %v2213
        %v2215 = vshrl.u32 %v1902, 16
        %v2217 = vrot.slane %v2215, 4
        %v2218 = vor.u32 %v2217, %v2213
        %v2219 = vrot.slane %v2218, 4
        %v2221 = vshll.u32 %v1903, 16
        %v2223 = vrot.slane %v2221, 5
        %v2224 = vsel %vm570, %v2219, %v2223
        %v2226 = vshrl.u32 %v1904, 16
        %v2228 = vrot.slane %v2226, 4
        %v2229 = vshll.u32 %v1904, 16
        %v2231 = vrot.slane %v2229, 5
        %v2232 = vor.u32 %v2228, %v2231
        %v2233 = vrot.slane %v2232, 4
        %v2235 = vshll.u32 %v1905, 16
        %v2237 = vrot.slane %v2235, 5
        %v2238 = vsel %vm570, %v2233, %v2237
        %v2239 = vshrl.u32 %v1905, 16
        %v2241 = vrot.slane %v2239, 4
        %v2242 = vor.u32 %v2241, %v2237
        %v2243 = vrot.slane %v2242, 4
        %v2245 = vshll.u32 %v1906, 16
        %v2247 = vrot.slane %v2245, 5
        %v2248 = vsel %vm570, %v2243, %v2247
        %v2250 = vshrl.u32 %v1907, 16
        %v2252 = vrot.slane %v2250, 4
        %v2253 = vshll.u32 %v1907, 16
        %v2255 = vrot.slane %v2253, 5
        %v2256 = vor.u32 %v2252, %v2255
        %v2257 = vrot.slane %v2256, 4
        %v2259 = vshll.u32 %v1908, 16
        %v2261 = vrot.slane %v2259, 5
        %v2262 = vsel %vm570, %v2257, %v2261
        %v2263 = vshrl.u32 %v1908, 16
        %v2265 = vrot.slane %v2263, 4
        %v2266 = vor.u32 %v2265, %v2261
        %v2267 = vrot.slane %v2266, 4
        %v2269 = vshll.u32 %v1909, 16
        %v2271 = vrot.slane %v2269, 5
        %v2272 = vsel %vm570, %v2267, %v2271
        %v2274 = vshrl.u32 %v1910, 16
        %v2276 = vrot.slane %v2274, 4
        %v2277 = vshll.u32 %v1910, 16
        %v2279 = vrot.slane %v2277, 5
        %v2280 = vor.u32 %v2276, %v2279
        %v2281 = vrot.slane %v2280, 4
        %v2283 = vshll.u32 %v1911, 16
        %v2285 = vrot.slane %v2283, 5
        %v2286 = vsel %vm570, %v2281, %v2285
        %v2287 = vshrl.u32 %v1911, 16
        %v2289 = vrot.slane %v2287, 4
        %v2290 = vor.u32 %v2289, %v2285
        %v2291 = vrot.slane %v2290, 4
        %v2293 = vshll.u32 %v1912, 16
        %v2295 = vrot.slane %v2293, 5
        %v2296 = vsel %vm570, %v2291, %v2295
        %v2297 = vld [vmem:[%s219 + $0x10] sm:$0xf]
        %v2298 = vunpack.c.l.b16 %v1926
        %v2299 = vunpack.c.l.b16 %v1936
        %v2300 = vunpack.c.l.b16 %v1950
        %v2301 = vunpack.c.l.b16 %v1960
        %v2302 = vunpack.c.l.b16 %v1974
        %v2303 = vunpack.c.l.b16 %v1984
        %v2304 = vunpack.c.l.b16 %v1998
        %v2305 = vunpack.c.l.b16 %v2008
        %v2306 = vunpack.c.l.b16 %v2022
        %v2307 = vunpack.c.l.b16 %v2032
        %v2308 = vunpack.c.l.b16 %v2046
        %v2309 = vunpack.c.l.b16 %v2056
        %v2310 = vunpack.c.l.b16 %v2070
        %v2311 = vunpack.c.l.b16 %v2080
        %v2312 = vunpack.c.l.b16 %v2094
        %v2313 = vunpack.c.l.b16 %v2104
        %v2314 = vunpack.c.l.b16 %v2118
        %v2315 = vunpack.c.l.b16 %v2128
        %v2316 = vunpack.c.l.b16 %v2142
        %v2317 = vunpack.c.l.b16 %v2152
        %v2318 = vunpack.c.l.b16 %v2166
        %v2319 = vunpack.c.l.b16 %v2176
        %v2320 = vunpack.c.l.b16 %v2190
        %v2321 = vunpack.c.l.b16 %v2200
        %v2322 = vunpack.c.l.b16 %v2214
        %v2323 = vunpack.c.l.b16 %v2224
        %v2324 = vunpack.c.l.b16 %v2238
        %v2325 = vunpack.c.l.b16 %v2248
        %v2326 = vunpack.c.l.b16 %v2262
        %v2327 = vunpack.c.l.b16 %v2272
        %v2328 = vunpack.c.l.b16 %v2286
        %v2329 = vunpack.c.l.b16 %v2296
        %v2330 = vpack.c.b16 %v2299, %v2298
        %v2331 = vpack.c.b16 %v2301, %v2300
        %v2332 = vpack.c.b16 %v2303, %v2302
        %v2333 = vpack.c.b16 %v2305, %v2304
        %v2334 = vpack.c.b16 %v2307, %v2306
        %v2335 = vpack.c.b16 %v2309, %v2308
        %v2336 = vpack.c.b16 %v2311, %v2310
        %v2337 = vpack.c.b16 %v2313, %v2312
        %v2338 = vpack.c.b16 %v2315, %v2314
        %v2339 = vpack.c.b16 %v2317, %v2316
        %v2340 = vpack.c.b16 %v2319, %v2318
        %v2341 = vpack.c.b16 %v2321, %v2320
        %v2342 = vpack.c.b16 %v2323, %v2322
        %v2343 = vpack.c.b16 %v2325, %v2324
        %v2344 = vpack.c.b16 %v2327, %v2326
        %v2345 = vpack.c.b16 %v2329, %v2328
        %v2347 = vsel %vm346, %v2330, 0
        %v2350 = vsel %vm346, %v2331, 0
        %v2353 = vsel %vm346, %v2332, 0
        %v2356 = vsel %vm346, %v2333, 0
        %v2359 = vsel %vm346, %v2334, 0
        %v2362 = vsel %vm346, %v2335, 0
        %v2365 = vsel %vm346, %v2336, 0
        %v2368 = vsel %vm346, %v2337, 0
        %v2371 = vsel %vm346, %v2338, 0
        %v2374 = vsel %vm346, %v2339, 0
        %v2377 = vsel %vm346, %v2340, 0
        %v2380 = vsel %vm346, %v2341, 0
        %v2383 = vsel %vm346, %v2342, 0
        %v2386 = vsel %vm346, %v2343, 0
        %v2389 = vsel %vm346, %v2344, 0
        %v2392 = vsel %vm346, %v2345, 0
        %v2395 = vsel %vm395, %v2297, 0
        %2397 = vmatpush.bf16.msra.mxu0 0
        %2398 = vmatpush.bf16.msra.mxu0 0
        %2399 = vmatpush.bf16.msra.mxu0 0
        %2400 = vmatpush.bf16.msra.mxu0 0
        %2401 = vmatpush.bf16.msra.mxu0 0
        %2402 = vmatpush.bf16.msra.mxu0 0
        %2403 = vmatpush.bf16.msra.mxu0 0
        %2404 = vmatpush.bf16.msra.mxu0 %v2395
        %2405 = vmatmul.bf16.gmra.mxu0 %v2347
        %v2406 = vpop.f32.mrf.mxu0
        %v2407 = vadd.f32 0.0, %v2406
        %v2408 = vpop.f32.mrf.mxu0
        %v2409 = vadd.f32 0.0, %v2408
        %2410 = vmatmul.bf16.gmra.mxu0 %v2350
        %v2411 = vpop.f32.mrf.mxu0
        %v2412 = vadd.f32 0.0, %v2411
        %v2413 = vpop.f32.mrf.mxu0
        %v2414 = vadd.f32 0.0, %v2413
        %2415 = vmatmul.bf16.gmra.mxu0 %v2353
        %v2416 = vpop.f32.mrf.mxu0
        %v2417 = vadd.f32 0.0, %v2416
        %v2418 = vpop.f32.mrf.mxu0
        %v2419 = vadd.f32 0.0, %v2418
        %2420 = vmatmul.bf16.gmra.mxu0 %v2356
        %v2421 = vpop.f32.mrf.mxu0
        %v2422 = vadd.f32 0.0, %v2421
        %v2423 = vpop.f32.mrf.mxu0
        %v2424 = vadd.f32 0.0, %v2423
        %2425 = vmatmul.bf16.gmra.mxu0 %v2359
        %v2426 = vpop.f32.mrf.mxu0
        %v2427 = vadd.f32 0.0, %v2426
        %v2428 = vpop.f32.mrf.mxu0
        %v2429 = vadd.f32 0.0, %v2428
        %2430 = vmatmul.bf16.gmra.mxu0 %v2362
        %v2431 = vpop.f32.mrf.mxu0
        %v2432 = vadd.f32 0.0, %v2431
        %v2433 = vpop.f32.mrf.mxu0
        %v2434 = vadd.f32 0.0, %v2433
        %2435 = vmatmul.bf16.gmra.mxu0 %v2365
        %v2436 = vpop.f32.mrf.mxu0
        %v2437 = vadd.f32 0.0, %v2436
        %v2438 = vpop.f32.mrf.mxu0
        %v2439 = vadd.f32 0.0, %v2438
        %2440 = vmatmul.bf16.gmra.mxu0 %v2368
        %v2441 = vpop.f32.mrf.mxu0
        %v2442 = vadd.f32 0.0, %v2441
        %v2443 = vpop.f32.mrf.mxu0
        %v2444 = vadd.f32 0.0, %v2443
        %2445 = vmatmul.bf16.gmra.mxu0 %v2371
        %v2446 = vpop.f32.mrf.mxu0
        %v2447 = vadd.f32 0.0, %v2446
        %v2448 = vpop.f32.mrf.mxu0
        %v2449 = vadd.f32 0.0, %v2448
        %2450 = vmatmul.bf16.gmra.mxu0 %v2374
        %v2451 = vpop.f32.mrf.mxu0
        %v2452 = vadd.f32 0.0, %v2451
        %v2453 = vpop.f32.mrf.mxu0
        %v2454 = vadd.f32 0.0, %v2453
        %2455 = vmatmul.bf16.gmra.mxu0 %v2377
        %v2456 = vpop.f32.mrf.mxu0
        %v2457 = vadd.f32 0.0, %v2456
        %v2458 = vpop.f32.mrf.mxu0
        %v2459 = vadd.f32 0.0, %v2458
        %2460 = vmatmul.bf16.gmra.mxu0 %v2380
        %v2461 = vpop.f32.mrf.mxu0
        %v2462 = vadd.f32 0.0, %v2461
        %v2463 = vpop.f32.mrf.mxu0
        %v2464 = vadd.f32 0.0, %v2463
        %2465 = vmatmul.bf16.gmra.mxu0 %v2383
        %v2466 = vpop.f32.mrf.mxu0
        %v2467 = vadd.f32 0.0, %v2466
        %v2468 = vpop.f32.mrf.mxu0
        %v2469 = vadd.f32 0.0, %v2468
        %2470 = vmatmul.bf16.gmra.mxu0 %v2386
        %v2471 = vpop.f32.mrf.mxu0
        %v2472 = vadd.f32 0.0, %v2471
        %v2473 = vpop.f32.mrf.mxu0
        %v2474 = vadd.f32 0.0, %v2473
        %2475 = vmatmul.bf16.gmra.mxu0 %v2389
        %v2476 = vpop.f32.mrf.mxu0
        %v2477 = vadd.f32 0.0, %v2476
        %v2478 = vpop.f32.mrf.mxu0
        %v2479 = vadd.f32 0.0, %v2478
        %2480 = vmatmul.bf16.gmra.mxu0 %v2392
        %v2481 = vpop.f32.mrf.mxu0
        %v2482 = vadd.f32 0.0, %v2481
        %v2483 = vpop.f32.mrf.mxu0
        %v2484 = vadd.f32 0.0, %v2483
        %2485 = vdwg.mxu0
        %v2486 = vadd.f32 %v1833, %v2407
        %v2487 = vadd.f32 %v1834, %v2409
        %v2488 = vadd.f32 %v1835, %v2412
        %v2489 = vadd.f32 %v1836, %v2414
        %v2490 = vadd.f32 %v1837, %v2417
        %v2491 = vadd.f32 %v1838, %v2419
        %v2492 = vadd.f32 %v1839, %v2422
        %v2493 = vadd.f32 %v1840, %v2424
        %v2494 = vadd.f32 %v1841, %v2427
        %v2495 = vadd.f32 %v1842, %v2429
        %v2496 = vadd.f32 %v1843, %v2432
        %v2497 = vadd.f32 %v1844, %v2434
        %v2498 = vadd.f32 %v1845, %v2437
        %v2499 = vadd.f32 %v1846, %v2439
        %v2500 = vadd.f32 %v1847, %v2442
        %v2501 = vadd.f32 %v1848, %v2444
        %v2502 = vadd.f32 %v1849, %v2447
        %v2503 = vadd.f32 %v1850, %v2449
        %v2504 = vadd.f32 %v1851, %v2452
        %v2505 = vadd.f32 %v1852, %v2454
        %v2506 = vadd.f32 %v1853, %v2457
        %v2507 = vadd.f32 %v1854, %v2459
        %v2508 = vadd.f32 %v1855, %v2462
        %v2509 = vadd.f32 %v1856, %v2464
        %v2510 = vadd.f32 %v1857, %v2467
        %v2511 = vadd.f32 %v1858, %v2469
        %v2512 = vadd.f32 %v1859, %v2472
        %v2513 = vadd.f32 %v1860, %v2474
        %v2514 = vadd.f32 %v1861, %v2477
        %v2515 = vadd.f32 %v1862, %v2479
        %v2516 = vadd.f32 %v1863, %v2482
        %v2517 = vadd.f32 %v1864, %v2484
        %v2518 = vld [vmem:[%s1579] sm:$0xe]
        %v2519 = vld [vmem:[%s1579 + $0xc] sm:$0xe]
        %v2520 = vld [vmem:[%s1579 + $0x18] sm:$0xe]
        %v2521 = vld [vmem:[%s1579 + $0x24] sm:$0xe]
        %v2522 = vld [vmem:[%s1579 + $0x30] sm:$0xe]
        %v2523 = vld [vmem:[%s1579 + $0x3c] sm:$0xe]
        %v2524 = vld [vmem:[%s1579 + $0x48] sm:$0xe]
        %v2525 = vld [vmem:[%s1579 + $0x54] sm:$0xe]
        %v2526 = vld [vmem:[%s1579 + $0x60] sm:$0xe]
        %v2527 = vld [vmem:[%s1579 + $0x6c] sm:$0xe]
        %v2528 = vld [vmem:[%s1579 + $0x78] sm:$0xe]
        %v2529 = vld [vmem:[%s1579 + $0x84] sm:$0xe]
        %v2530 = vld [vmem:[%s1579 + $0x90] sm:$0xe]
        %v2531 = vld [vmem:[%s1579 + $0x9c] sm:$0xe]
        %v2532 = vld [vmem:[%s1579 + $0xa8] sm:$0xe]
        %v2533 = vld [vmem:[%s1579 + $0xb4] sm:$0xe]
        %v2582 = vrot.slane %v2518, 5
        %v2583 = vrot.slane %v2582, 4
        %v2584 = vrot.slane %v1866, 5
        %v2585 = vsel %vm1242, %v2583, %v2584
        %v2586 = vrot.slane %v2584, 4
        %v2587 = vrot.slane %v1867, 5
        %v2588 = vsel %vm1242, %v2586, %v2587
        %v2589 = vrot.slane %v2519, 5
        %v2590 = vrot.slane %v2589, 4
        %v2591 = vrot.slane %v1869, 5
        %v2592 = vsel %vm1242, %v2590, %v2591
        %v2593 = vrot.slane %v2591, 4
        %v2594 = vrot.slane %v1870, 5
        %v2595 = vsel %vm1242, %v2593, %v2594
        %v2596 = vrot.slane %v2520, 5
        %v2597 = vrot.slane %v2596, 4
        %v2598 = vrot.slane %v1872, 5
        %v2599 = vsel %vm1242, %v2597, %v2598
        %v2600 = vrot.slane %v2598, 4
        %v2601 = vrot.slane %v1873, 5
        %v2602 = vsel %vm1242, %v2600, %v2601
        %v2603 = vrot.slane %v2521, 5
        %v2604 = vrot.slane %v2603, 4
        %v2605 = vrot.slane %v1875, 5
        %v2606 = vsel %vm1242, %v2604, %v2605
        %v2607 = vrot.slane %v2605, 4
        %v2608 = vrot.slane %v1876, 5
        %v2609 = vsel %vm1242, %v2607, %v2608
        %v2610 = vrot.slane %v2522, 5
        %v2611 = vrot.slane %v2610, 4
        %v2612 = vrot.slane %v1878, 5
        %v2613 = vsel %vm1242, %v2611, %v2612
        %v2614 = vrot.slane %v2612, 4
        %v2615 = vrot.slane %v1879, 5
        %v2616 = vsel %vm1242, %v2614, %v2615
        %v2617 = vrot.slane %v2523, 5
        %v2618 = vrot.slane %v2617, 4
        %v2619 = vrot.slane %v1881, 5
        %v2620 = vsel %vm1242, %v2618, %v2619
        %v2621 = vrot.slane %v2619, 4
        %v2622 = vrot.slane %v1882, 5
        %v2623 = vsel %vm1242, %v2621, %v2622
        %v2624 = vrot.slane %v2524, 5
        %v2625 = vrot.slane %v2624, 4
        %v2626 = vrot.slane %v1884, 5
        %v2627 = vsel %vm1242, %v2625, %v2626
        %v2628 = vrot.slane %v2626, 4
        %v2629 = vrot.slane %v1885, 5
        %v2630 = vsel %vm1242, %v2628, %v2629
        %v2631 = vrot.slane %v2525, 5
        %v2632 = vrot.slane %v2631, 4
        %v2633 = vrot.slane %v1887, 5
        %v2634 = vsel %vm1242, %v2632, %v2633
        %v2635 = vrot.slane %v2633, 4
        %v2636 = vrot.slane %v1888, 5
        %v2637 = vsel %vm1242, %v2635, %v2636
        %v2638 = vrot.slane %v2526, 5
        %v2639 = vrot.slane %v2638, 4
        %v2640 = vrot.slane %v1890, 5
        %v2641 = vsel %vm1242, %v2639, %v2640
        %v2642 = vrot.slane %v2640, 4
        %v2643 = vrot.slane %v1891, 5
        %v2644 = vsel %vm1242, %v2642, %v2643
        %v2645 = vrot.slane %v2527, 5
        %v2646 = vrot.slane %v2645, 4
        %v2647 = vrot.slane %v1893, 5
        %v2648 = vsel %vm1242, %v2646, %v2647
        %v2649 = vrot.slane %v2647, 4
        %v2650 = vrot.slane %v1894, 5
        %v2651 = vsel %vm1242, %v2649, %v2650
        %v2652 = vrot.slane %v2528, 5
        %v2653 = vrot.slane %v2652, 4
        %v2654 = vrot.slane %v1896, 5
        %v2655 = vsel %vm1242, %v2653, %v2654
        %v2656 = vrot.slane %v2654, 4
        %v2657 = vrot.slane %v1897, 5
        %v2658 = vsel %vm1242, %v2656, %v2657
        %v2659 = vrot.slane %v2529, 5
        %v2660 = vrot.slane %v2659, 4
        %v2661 = vrot.slane %v1899, 5
        %v2662 = vsel %vm1242, %v2660, %v2661
        %v2663 = vrot.slane %v2661, 4
        %v2664 = vrot.slane %v1900, 5
        %v2665 = vsel %vm1242, %v2663, %v2664
        %v2666 = vrot.slane %v2530, 5
        %v2667 = vrot.slane %v2666, 4
        %v2668 = vrot.slane %v1902, 5
        %v2669 = vsel %vm1242, %v2667, %v2668
        %v2670 = vrot.slane %v2668, 4
        %v2671 = vrot.slane %v1903, 5
        %v2672 = vsel %vm1242, %v2670, %v2671
        %v2673 = vrot.slane %v2531, 5
        %v2674 = vrot.slane %v2673, 4
        %v2675 = vrot.slane %v1905, 5
        %v2676 = vsel %vm1242, %v2674, %v2675
        %v2677 = vrot.slane %v2675, 4
        %v2678 = vrot.slane %v1906, 5
        %v2679 = vsel %vm1242, %v2677, %v2678
        %v2680 = vrot.slane %v2532, 5
        %v2681 = vrot.slane %v2680, 4
        %v2682 = vrot.slane %v1908, 5
        %v2683 = vsel %vm1242, %v2681, %v2682
        %v2684 = vrot.slane %v2682, 4
        %v2685 = vrot.slane %v1909, 5
        %v2686 = vsel %vm1242, %v2684, %v2685
        %v2687 = vrot.slane %v2533, 5
        %v2688 = vrot.slane %v2687, 4
        %v2689 = vrot.slane %v1911, 5
        %v2690 = vsel %vm1242, %v2688, %v2689
        %v2691 = vrot.slane %v2689, 4
        %v2692 = vrot.slane %v1912, 5
        %v2693 = vsel %vm1242, %v2691, %v2692
        %v2694 = vld [vmem:[%s219 + $0x14] sm:$0xf]
        %v2695 = vunpack.c.l.b16 %v2585
        %v2696 = vunpack.c.l.b16 %v2588
        %v2697 = vunpack.c.l.b16 %v2592
        %v2698 = vunpack.c.l.b16 %v2595
        %v2699 = vunpack.c.l.b16 %v2599
        %v2700 = vunpack.c.l.b16 %v2602
        %v2701 = vunpack.c.l.b16 %v2606
        %v2702 = vunpack.c.l.b16 %v2609
        %v2703 = vunpack.c.l.b16 %v2613
        %v2704 = vunpack.c.l.b16 %v2616
        %v2705 = vunpack.c.l.b16 %v2620
        %v2706 = vunpack.c.l.b16 %v2623
        %v2707 = vunpack.c.l.b16 %v2627
        %v2708 = vunpack.c.l.b16 %v2630
        %v2709 = vunpack.c.l.b16 %v2634
        %v2710 = vunpack.c.l.b16 %v2637
        %v2711 = vunpack.c.l.b16 %v2641
        %v2712 = vunpack.c.l.b16 %v2644
        %v2713 = vunpack.c.l.b16 %v2648
        %v2714 = vunpack.c.l.b16 %v2651
        %v2715 = vunpack.c.l.b16 %v2655
        %v2716 = vunpack.c.l.b16 %v2658
        %v2717 = vunpack.c.l.b16 %v2662
        %v2718 = vunpack.c.l.b16 %v2665
        %v2719 = vunpack.c.l.b16 %v2669
        %v2720 = vunpack.c.l.b16 %v2672
        %v2721 = vunpack.c.l.b16 %v2676
        %v2722 = vunpack.c.l.b16 %v2679
        %v2723 = vunpack.c.l.b16 %v2683
        %v2724 = vunpack.c.l.b16 %v2686
        %v2725 = vunpack.c.l.b16 %v2690
        %v2726 = vunpack.c.l.b16 %v2693
        %v2727 = vpack.c.b16 %v2696, %v2695
        %v2728 = vpack.c.b16 %v2698, %v2697
        %v2729 = vpack.c.b16 %v2700, %v2699
        %v2730 = vpack.c.b16 %v2702, %v2701
        %v2731 = vpack.c.b16 %v2704, %v2703
        %v2732 = vpack.c.b16 %v2706, %v2705
        %v2733 = vpack.c.b16 %v2708, %v2707
        %v2734 = vpack.c.b16 %v2710, %v2709
        %v2735 = vpack.c.b16 %v2712, %v2711
        %v2736 = vpack.c.b16 %v2714, %v2713
        %v2737 = vpack.c.b16 %v2716, %v2715
        %v2738 = vpack.c.b16 %v2718, %v2717
        %v2739 = vpack.c.b16 %v2720, %v2719
        %v2740 = vpack.c.b16 %v2722, %v2721
        %v2741 = vpack.c.b16 %v2724, %v2723
        %v2742 = vpack.c.b16 %v2726, %v2725
        %v2744 = vsel %vm346, %v2727, 0
        %v2747 = vsel %vm346, %v2728, 0
        %v2750 = vsel %vm346, %v2729, 0
        %v2753 = vsel %vm346, %v2730, 0
        %v2756 = vsel %vm346, %v2731, 0
        %v2759 = vsel %vm346, %v2732, 0
        %v2762 = vsel %vm346, %v2733, 0
        %v2765 = vsel %vm346, %v2734, 0
        %v2768 = vsel %vm346, %v2735, 0
        %v2771 = vsel %vm346, %v2736, 0
        %v2774 = vsel %vm346, %v2737, 0
        %v2777 = vsel %vm346, %v2738, 0
        %v2780 = vsel %vm346, %v2739, 0
        %v2783 = vsel %vm346, %v2740, 0
        %v2786 = vsel %vm346, %v2741, 0
        %v2789 = vsel %vm346, %v2742, 0
        %v2792 = vsel %vm395, %v2694, 0
        %2794 = vmatpush.bf16.msra.mxu0 0
        %2795 = vmatpush.bf16.msra.mxu0 0
        %2796 = vmatpush.bf16.msra.mxu0 0
        %2797 = vmatpush.bf16.msra.mxu0 0
        %2798 = vmatpush.bf16.msra.mxu0 0
        %2799 = vmatpush.bf16.msra.mxu0 0
        %2800 = vmatpush.bf16.msra.mxu0 0
        %2801 = vmatpush.bf16.msra.mxu0 %v2792
        %2802 = vmatmul.bf16.gmra.mxu0 %v2744
        %v2803 = vpop.f32.mrf.mxu0
        %v2804 = vadd.f32 0.0, %v2803
        %v2805 = vpop.f32.mrf.mxu0
        %v2806 = vadd.f32 0.0, %v2805
        %2807 = vmatmul.bf16.gmra.mxu0 %v2747
        %v2808 = vpop.f32.mrf.mxu0
        %v2809 = vadd.f32 0.0, %v2808
        %v2810 = vpop.f32.mrf.mxu0
        %v2811 = vadd.f32 0.0, %v2810
        %2812 = vmatmul.bf16.gmra.mxu0 %v2750
        %v2813 = vpop.f32.mrf.mxu0
        %v2814 = vadd.f32 0.0, %v2813
        %v2815 = vpop.f32.mrf.mxu0
        %v2816 = vadd.f32 0.0, %v2815
        %2817 = vmatmul.bf16.gmra.mxu0 %v2753
        %v2818 = vpop.f32.mrf.mxu0
        %v2819 = vadd.f32 0.0, %v2818
        %v2820 = vpop.f32.mrf.mxu0
        %v2821 = vadd.f32 0.0, %v2820
        %2822 = vmatmul.bf16.gmra.mxu0 %v2756
        %v2823 = vpop.f32.mrf.mxu0
        %v2824 = vadd.f32 0.0, %v2823
        %v2825 = vpop.f32.mrf.mxu0
        %v2826 = vadd.f32 0.0, %v2825
        %2827 = vmatmul.bf16.gmra.mxu0 %v2759
        %v2828 = vpop.f32.mrf.mxu0
        %v2829 = vadd.f32 0.0, %v2828
        %v2830 = vpop.f32.mrf.mxu0
        %v2831 = vadd.f32 0.0, %v2830
        %2832 = vmatmul.bf16.gmra.mxu0 %v2762
        %v2833 = vpop.f32.mrf.mxu0
        %v2834 = vadd.f32 0.0, %v2833
        %v2835 = vpop.f32.mrf.mxu0
        %v2836 = vadd.f32 0.0, %v2835
        %2837 = vmatmul.bf16.gmra.mxu0 %v2765
        %v2838 = vpop.f32.mrf.mxu0
        %v2839 = vadd.f32 0.0, %v2838
        %v2840 = vpop.f32.mrf.mxu0
        %v2841 = vadd.f32 0.0, %v2840
        %2842 = vmatmul.bf16.gmra.mxu0 %v2768
        %v2843 = vpop.f32.mrf.mxu0
        %v2844 = vadd.f32 0.0, %v2843
        %v2845 = vpop.f32.mrf.mxu0
        %v2846 = vadd.f32 0.0, %v2845
        %2847 = vmatmul.bf16.gmra.mxu0 %v2771
        %v2848 = vpop.f32.mrf.mxu0
        %v2849 = vadd.f32 0.0, %v2848
        %v2850 = vpop.f32.mrf.mxu0
        %v2851 = vadd.f32 0.0, %v2850
        %2852 = vmatmul.bf16.gmra.mxu0 %v2774
        %v2853 = vpop.f32.mrf.mxu0
        %v2854 = vadd.f32 0.0, %v2853
        %v2855 = vpop.f32.mrf.mxu0
        %v2856 = vadd.f32 0.0, %v2855
        %2857 = vmatmul.bf16.gmra.mxu0 %v2777
        %v2858 = vpop.f32.mrf.mxu0
        %v2859 = vadd.f32 0.0, %v2858
        %v2860 = vpop.f32.mrf.mxu0
        %v2861 = vadd.f32 0.0, %v2860
        %2862 = vmatmul.bf16.gmra.mxu0 %v2780
        %v2863 = vpop.f32.mrf.mxu0
        %v2864 = vadd.f32 0.0, %v2863
        %v2865 = vpop.f32.mrf.mxu0
        %v2866 = vadd.f32 0.0, %v2865
        %2867 = vmatmul.bf16.gmra.mxu0 %v2783
        %v2868 = vpop.f32.mrf.mxu0
        %v2869 = vadd.f32 0.0, %v2868
        %v2870 = vpop.f32.mrf.mxu0
        %v2871 = vadd.f32 0.0, %v2870
        %2872 = vmatmul.bf16.gmra.mxu0 %v2786
        %v2873 = vpop.f32.mrf.mxu0
        %v2874 = vadd.f32 0.0, %v2873
        %v2875 = vpop.f32.mrf.mxu0
        %v2876 = vadd.f32 0.0, %v2875
        %2877 = vmatmul.bf16.gmra.mxu0 %v2789
        %v2878 = vpop.f32.mrf.mxu0
        %v2879 = vadd.f32 0.0, %v2878
        %v2880 = vpop.f32.mrf.mxu0
        %v2881 = vadd.f32 0.0, %v2880
        %2882 = vdwg.mxu0
        %v2883 = vadd.f32 %v2486, %v2804
        %v2884 = vadd.f32 %v2487, %v2806
        %v2885 = vadd.f32 %v2488, %v2809
        %v2886 = vadd.f32 %v2489, %v2811
        %v2887 = vadd.f32 %v2490, %v2814
        %v2888 = vadd.f32 %v2491, %v2816
        %v2889 = vadd.f32 %v2492, %v2819
        %v2890 = vadd.f32 %v2493, %v2821
        %v2891 = vadd.f32 %v2494, %v2824
        %v2892 = vadd.f32 %v2495, %v2826
        %v2893 = vadd.f32 %v2496, %v2829
        %v2894 = vadd.f32 %v2497, %v2831
        %v2895 = vadd.f32 %v2498, %v2834
        %v2896 = vadd.f32 %v2499, %v2836
        %v2897 = vadd.f32 %v2500, %v2839
        %v2898 = vadd.f32 %v2501, %v2841
        %v2899 = vadd.f32 %v2502, %v2844
        %v2900 = vadd.f32 %v2503, %v2846
        %v2901 = vadd.f32 %v2504, %v2849
        %v2902 = vadd.f32 %v2505, %v2851
        %v2903 = vadd.f32 %v2506, %v2854
        %v2904 = vadd.f32 %v2507, %v2856
        %v2905 = vadd.f32 %v2508, %v2859
        %v2906 = vadd.f32 %v2509, %v2861
        %v2907 = vadd.f32 %v2510, %v2864
        %v2908 = vadd.f32 %v2511, %v2866
        %v2909 = vadd.f32 %v2512, %v2869
        %v2910 = vadd.f32 %v2513, %v2871
        %v2911 = vadd.f32 %v2514, %v2874
        %v2912 = vadd.f32 %v2515, %v2876
        %v2913 = vadd.f32 %v2516, %v2879
        %v2914 = vadd.f32 %v2517, %v2881
        %s2915 = sadd.s32 %s225, 2
        %s2916 = smul.u32 %s2915, 3
        %s2917 = smul.addr %s2916, 4
        %s2918 = scalar_lea.vmem %s215, %s2917
        %v2919 = vld [vmem:[%s2918] sm:$0xf]
        %v2920 = vld [vmem:[%s2918 + $0x4] sm:$0xf]
        %v2921 = vld [vmem:[%s2918 + $0xc] sm:$0xf]
        %v2922 = vld [vmem:[%s2918 + $0x10] sm:$0xf]
        %v2923 = vld [vmem:[%s2918 + $0x18] sm:$0xf]
        %v2924 = vld [vmem:[%s2918 + $0x1c] sm:$0xf]
        %v2925 = vld [vmem:[%s2918 + $0x24] sm:$0xf]
        %v2926 = vld [vmem:[%s2918 + $0x28] sm:$0xf]
        %v2927 = vld [vmem:[%s2918 + $0x30] sm:$0xf]
        %v2928 = vld [vmem:[%s2918 + $0x34] sm:$0xf]
        %v2929 = vld [vmem:[%s2918 + $0x3c] sm:$0xf]
        %v2930 = vld [vmem:[%s2918 + $0x40] sm:$0xf]
        %v2931 = vld [vmem:[%s2918 + $0x48] sm:$0xf]
        %v2932 = vld [vmem:[%s2918 + $0x4c] sm:$0xf]
        %v2933 = vld [vmem:[%s2918 + $0x54] sm:$0xf]
        %v2934 = vld [vmem:[%s2918 + $0x58] sm:$0xf]
        %v2935 = vld [vmem:[%s2918 + $0x60] sm:$0xf]
        %v2936 = vld [vmem:[%s2918 + $0x64] sm:$0xf]
        %v2937 = vld [vmem:[%s2918 + $0x6c] sm:$0xf]
        %v2938 = vld [vmem:[%s2918 + $0x70] sm:$0xf]
        %v2939 = vld [vmem:[%s2918 + $0x78] sm:$0xf]
        %v2940 = vld [vmem:[%s2918 + $0x7c] sm:$0xf]
        %v2941 = vld [vmem:[%s2918 + $0x84] sm:$0xf]
        %v2942 = vld [vmem:[%s2918 + $0x88] sm:$0xf]
        %v2943 = vld [vmem:[%s2918 + $0x90] sm:$0xf]
        %v2944 = vld [vmem:[%s2918 + $0x94] sm:$0xf]
        %v2945 = vld [vmem:[%s2918 + $0x9c] sm:$0xf]
        %v2946 = vld [vmem:[%s2918 + $0xa0] sm:$0xf]
        %v2947 = vld [vmem:[%s2918 + $0xa8] sm:$0xf]
        %v2948 = vld [vmem:[%s2918 + $0xac] sm:$0xf]
        %v2949 = vld [vmem:[%s2918 + $0xb4] sm:$0xf]
        %v2950 = vld [vmem:[%s2918 + $0xb8] sm:$0xf]
        %v2951 = vld [vmem:[%s219 + $0x18] sm:$0xf]
        %v2984 = vunpack.c.l.b16 %v2919
        %v2985 = vunpack.c.l.b16 %v2920
        %v2986 = vunpack.c.l.b16 %v2921
        %v2987 = vunpack.c.l.b16 %v2922
        %v2988 = vunpack.c.l.b16 %v2923
        %v2989 = vunpack.c.l.b16 %v2924
        %v2990 = vunpack.c.l.b16 %v2925
        %v2991 = vunpack.c.l.b16 %v2926
        %v2992 = vunpack.c.l.b16 %v2927
        %v2993 = vunpack.c.l.b16 %v2928
        %v2994 = vunpack.c.l.b16 %v2929
        %v2995 = vunpack.c.l.b16 %v2930
        %v2996 = vunpack.c.l.b16 %v2931
        %v2997 = vunpack.c.l.b16 %v2932
        %v2998 = vunpack.c.l.b16 %v2933
        %v2999 = vunpack.c.l.b16 %v2934
        %v3000 = vunpack.c.l.b16 %v2935
        %v3001 = vunpack.c.l.b16 %v2936
        %v3002 = vunpack.c.l.b16 %v2937
        %v3003 = vunpack.c.l.b16 %v2938
        %v3004 = vunpack.c.l.b16 %v2939
        %v3005 = vunpack.c.l.b16 %v2940
        %v3006 = vunpack.c.l.b16 %v2941
        %v3007 = vunpack.c.l.b16 %v2942
        %v3008 = vunpack.c.l.b16 %v2943
        %v3009 = vunpack.c.l.b16 %v2944
        %v3010 = vunpack.c.l.b16 %v2945
        %v3011 = vunpack.c.l.b16 %v2946
        %v3012 = vunpack.c.l.b16 %v2947
        %v3013 = vunpack.c.l.b16 %v2948
        %v3014 = vunpack.c.l.b16 %v2949
        %v3015 = vunpack.c.l.b16 %v2950
        %v3016 = vpack.c.b16 %v2985, %v2984
        %v3017 = vpack.c.b16 %v2987, %v2986
        %v3018 = vpack.c.b16 %v2989, %v2988
        %v3019 = vpack.c.b16 %v2991, %v2990
        %v3020 = vpack.c.b16 %v2993, %v2992
        %v3021 = vpack.c.b16 %v2995, %v2994
        %v3022 = vpack.c.b16 %v2997, %v2996
        %v3023 = vpack.c.b16 %v2999, %v2998
        %v3024 = vpack.c.b16 %v3001, %v3000
        %v3025 = vpack.c.b16 %v3003, %v3002
        %v3026 = vpack.c.b16 %v3005, %v3004
        %v3027 = vpack.c.b16 %v3007, %v3006
        %v3028 = vpack.c.b16 %v3009, %v3008
        %v3029 = vpack.c.b16 %v3011, %v3010
        %v3030 = vpack.c.b16 %v3013, %v3012
        %v3031 = vpack.c.b16 %v3015, %v3014
        %v3033 = vsel %vm346, %v3016, 0
        %v3036 = vsel %vm346, %v3017, 0
        %v3039 = vsel %vm346, %v3018, 0
        %v3042 = vsel %vm346, %v3019, 0
        %v3045 = vsel %vm346, %v3020, 0
        %v3048 = vsel %vm346, %v3021, 0
        %v3051 = vsel %vm346, %v3022, 0
        %v3054 = vsel %vm346, %v3023, 0
        %v3057 = vsel %vm346, %v3024, 0
        %v3060 = vsel %vm346, %v3025, 0
        %v3063 = vsel %vm346, %v3026, 0
        %v3066 = vsel %vm346, %v3027, 0
        %v3069 = vsel %vm346, %v3028, 0
        %v3072 = vsel %vm346, %v3029, 0
        %v3075 = vsel %vm346, %v3030, 0
        %v3078 = vsel %vm346, %v3031, 0
        %v3081 = vsel %vm395, %v2951, 0
        %3083 = vmatpush.bf16.msra.mxu0 0
        %3084 = vmatpush.bf16.msra.mxu0 0
        %3085 = vmatpush.bf16.msra.mxu0 0
        %3086 = vmatpush.bf16.msra.mxu0 0
        %3087 = vmatpush.bf16.msra.mxu0 0
        %3088 = vmatpush.bf16.msra.mxu0 0
        %3089 = vmatpush.bf16.msra.mxu0 0
        %3090 = vmatpush.bf16.msra.mxu0 %v3081
        %3091 = vmatmul.bf16.gmra.mxu0 %v3033
        %v3092 = vpop.f32.mrf.mxu0
        %v3093 = vadd.f32 0.0, %v3092
        %v3094 = vpop.f32.mrf.mxu0
        %v3095 = vadd.f32 0.0, %v3094
        %3096 = vmatmul.bf16.gmra.mxu0 %v3036
        %v3097 = vpop.f32.mrf.mxu0
        %v3098 = vadd.f32 0.0, %v3097
        %v3099 = vpop.f32.mrf.mxu0
        %v3100 = vadd.f32 0.0, %v3099
        %3101 = vmatmul.bf16.gmra.mxu0 %v3039
        %v3102 = vpop.f32.mrf.mxu0
        %v3103 = vadd.f32 0.0, %v3102
        %v3104 = vpop.f32.mrf.mxu0
        %v3105 = vadd.f32 0.0, %v3104
        %3106 = vmatmul.bf16.gmra.mxu0 %v3042
        %v3107 = vpop.f32.mrf.mxu0
        %v3108 = vadd.f32 0.0, %v3107
        %v3109 = vpop.f32.mrf.mxu0
        %v3110 = vadd.f32 0.0, %v3109
        %3111 = vmatmul.bf16.gmra.mxu0 %v3045
        %v3112 = vpop.f32.mrf.mxu0
        %v3113 = vadd.f32 0.0, %v3112
        %v3114 = vpop.f32.mrf.mxu0
        %v3115 = vadd.f32 0.0, %v3114
        %3116 = vmatmul.bf16.gmra.mxu0 %v3048
        %v3117 = vpop.f32.mrf.mxu0
        %v3118 = vadd.f32 0.0, %v3117
        %v3119 = vpop.f32.mrf.mxu0
        %v3120 = vadd.f32 0.0, %v3119
        %3121 = vmatmul.bf16.gmra.mxu0 %v3051
        %v3122 = vpop.f32.mrf.mxu0
        %v3123 = vadd.f32 0.0, %v3122
        %v3124 = vpop.f32.mrf.mxu0
        %v3125 = vadd.f32 0.0, %v3124
        %3126 = vmatmul.bf16.gmra.mxu0 %v3054
        %v3127 = vpop.f32.mrf.mxu0
        %v3128 = vadd.f32 0.0, %v3127
        %v3129 = vpop.f32.mrf.mxu0
        %v3130 = vadd.f32 0.0, %v3129
        %3131 = vmatmul.bf16.gmra.mxu0 %v3057
        %v3132 = vpop.f32.mrf.mxu0
        %v3133 = vadd.f32 0.0, %v3132
        %v3134 = vpop.f32.mrf.mxu0
        %v3135 = vadd.f32 0.0, %v3134
        %3136 = vmatmul.bf16.gmra.mxu0 %v3060
        %v3137 = vpop.f32.mrf.mxu0
        %v3138 = vadd.f32 0.0, %v3137
        %v3139 = vpop.f32.mrf.mxu0
        %v3140 = vadd.f32 0.0, %v3139
        %3141 = vmatmul.bf16.gmra.mxu0 %v3063
        %v3142 = vpop.f32.mrf.mxu0
        %v3143 = vadd.f32 0.0, %v3142
        %v3144 = vpop.f32.mrf.mxu0
        %v3145 = vadd.f32 0.0, %v3144
        %3146 = vmatmul.bf16.gmra.mxu0 %v3066
        %v3147 = vpop.f32.mrf.mxu0
        %v3148 = vadd.f32 0.0, %v3147
        %v3149 = vpop.f32.mrf.mxu0
        %v3150 = vadd.f32 0.0, %v3149
        %3151 = vmatmul.bf16.gmra.mxu0 %v3069
        %v3152 = vpop.f32.mrf.mxu0
        %v3153 = vadd.f32 0.0, %v3152
        %v3154 = vpop.f32.mrf.mxu0
        %v3155 = vadd.f32 0.0, %v3154
        %3156 = vmatmul.bf16.gmra.mxu0 %v3072
        %v3157 = vpop.f32.mrf.mxu0
        %v3158 = vadd.f32 0.0, %v3157
        %v3159 = vpop.f32.mrf.mxu0
        %v3160 = vadd.f32 0.0, %v3159
        %3161 = vmatmul.bf16.gmra.mxu0 %v3075
        %v3162 = vpop.f32.mrf.mxu0
        %v3163 = vadd.f32 0.0, %v3162
        %v3164 = vpop.f32.mrf.mxu0
        %v3165 = vadd.f32 0.0, %v3164
        %3166 = vmatmul.bf16.gmra.mxu0 %v3078
        %v3167 = vpop.f32.mrf.mxu0
        %v3168 = vadd.f32 0.0, %v3167
        %v3169 = vpop.f32.mrf.mxu0
        %v3170 = vadd.f32 0.0, %v3169
        %3171 = vdwg.mxu0
        %v3172 = vadd.f32 %v2883, %v3093
        %v3173 = vadd.f32 %v2884, %v3095
        %v3174 = vadd.f32 %v2885, %v3098
        %v3175 = vadd.f32 %v2886, %v3100
        %v3176 = vadd.f32 %v2887, %v3103
        %v3177 = vadd.f32 %v2888, %v3105
        %v3178 = vadd.f32 %v2889, %v3108
        %v3179 = vadd.f32 %v2890, %v3110
        %v3180 = vadd.f32 %v2891, %v3113
        %v3181 = vadd.f32 %v2892, %v3115
        %v3182 = vadd.f32 %v2893, %v3118
        %v3183 = vadd.f32 %v2894, %v3120
        %v3184 = vadd.f32 %v2895, %v3123
        %v3185 = vadd.f32 %v2896, %v3125
        %v3186 = vadd.f32 %v2897, %v3128
        %v3187 = vadd.f32 %v2898, %v3130
        %v3188 = vadd.f32 %v2899, %v3133
        %v3189 = vadd.f32 %v2900, %v3135
        %v3190 = vadd.f32 %v2901, %v3138
        %v3191 = vadd.f32 %v2902, %v3140
        %v3192 = vadd.f32 %v2903, %v3143
        %v3193 = vadd.f32 %v2904, %v3145
        %v3194 = vadd.f32 %v2905, %v3148
        %v3195 = vadd.f32 %v2906, %v3150
        %v3196 = vadd.f32 %v2907, %v3153
        %v3197 = vadd.f32 %v2908, %v3155
        %v3198 = vadd.f32 %v2909, %v3158
        %v3199 = vadd.f32 %v2910, %v3160
        %v3200 = vadd.f32 %v2911, %v3163
        %v3201 = vadd.f32 %v2912, %v3165
        %v3202 = vadd.f32 %v2913, %v3168
        %v3203 = vadd.f32 %v2914, %v3170
        %v3204 = vld [vmem:[%s2918] sm:$0xf]
        %v3205 = vld [vmem:[%s2918 + $0x4] sm:$0xf]
        %v3206 = vld [vmem:[%s2918 + $0x8] sm:$0x1]
        %v3207 = vld [vmem:[%s2918 + $0xc] sm:$0xf]
        %v3208 = vld [vmem:[%s2918 + $0x10] sm:$0xf]
        %v3209 = vld [vmem:[%s2918 + $0x14] sm:$0x1]
        %v3210 = vld [vmem:[%s2918 + $0x18] sm:$0xf]
        %v3211 = vld [vmem:[%s2918 + $0x1c] sm:$0xf]
        %v3212 = vld [vmem:[%s2918 + $0x20] sm:$0x1]
        %v3213 = vld [vmem:[%s2918 + $0x24] sm:$0xf]
        %v3214 = vld [vmem:[%s2918 + $0x28] sm:$0xf]
        %v3215 = vld [vmem:[%s2918 + $0x2c] sm:$0x1]
        %v3216 = vld [vmem:[%s2918 + $0x30] sm:$0xf]
        %v3217 = vld [vmem:[%s2918 + $0x34] sm:$0xf]
        %v3218 = vld [vmem:[%s2918 + $0x38] sm:$0x1]
        %v3219 = vld [vmem:[%s2918 + $0x3c] sm:$0xf]
        %v3220 = vld [vmem:[%s2918 + $0x40] sm:$0xf]
        %v3221 = vld [vmem:[%s2918 + $0x44] sm:$0x1]
        %v3222 = vld [vmem:[%s2918 + $0x48] sm:$0xf]
        %v3223 = vld [vmem:[%s2918 + $0x4c] sm:$0xf]
        %v3224 = vld [vmem:[%s2918 + $0x50] sm:$0x1]
        %v3225 = vld [vmem:[%s2918 + $0x54] sm:$0xf]
        %v3226 = vld [vmem:[%s2918 + $0x58] sm:$0xf]
        %v3227 = vld [vmem:[%s2918 + $0x5c] sm:$0x1]
        %v3228 = vld [vmem:[%s2918 + $0x60] sm:$0xf]
        %v3229 = vld [vmem:[%s2918 + $0x64] sm:$0xf]
        %v3230 = vld [vmem:[%s2918 + $0x68] sm:$0x1]
        %v3231 = vld [vmem:[%s2918 + $0x6c] sm:$0xf]
        %v3232 = vld [vmem:[%s2918 + $0x70] sm:$0xf]
        %v3233 = vld [vmem:[%s2918 + $0x74] sm:$0x1]
        %v3234 = vld [vmem:[%s2918 + $0x78] sm:$0xf]
        %v3235 = vld [vmem:[%s2918 + $0x7c] sm:$0xf]
        %v3236 = vld [vmem:[%s2918 + $0x80] sm:$0x1]
        %v3237 = vld [vmem:[%s2918 + $0x84] sm:$0xf]
        %v3238 = vld [vmem:[%s2918 + $0x88] sm:$0xf]
        %v3239 = vld [vmem:[%s2918 + $0x8c] sm:$0x1]
        %v3240 = vld [vmem:[%s2918 + $0x90] sm:$0xf]
        %v3241 = vld [vmem:[%s2918 + $0x94] sm:$0xf]
        %v3242 = vld [vmem:[%s2918 + $0x98] sm:$0x1]
        %v3243 = vld [vmem:[%s2918 + $0x9c] sm:$0xf]
        %v3244 = vld [vmem:[%s2918 + $0xa0] sm:$0xf]
        %v3245 = vld [vmem:[%s2918 + $0xa4] sm:$0x1]
        %v3246 = vld [vmem:[%s2918 + $0xa8] sm:$0xf]
        %v3247 = vld [vmem:[%s2918 + $0xac] sm:$0xf]
        %v3248 = vld [vmem:[%s2918 + $0xb0] sm:$0x1]
        %v3249 = vld [vmem:[%s2918 + $0xb4] sm:$0xf]
        %v3250 = vld [vmem:[%s2918 + $0xb8] sm:$0xf]
        %v3251 = vld [vmem:[%s2918 + $0xbc] sm:$0x1]
        %v3253 = vshrl.u32 %v3204, 16
        %v3255 = vrot.slane %v3253, 4
        %v3256 = vshll.u32 %v3204, 16
        %v3258 = vrot.slane %v3256, 5
        %v3259 = vor.u32 %v3255, %v3258
        %v3260 = vrot.slane %v3259, 4
        %v3262 = vshll.u32 %v3205, 16
        %v3264 = vrot.slane %v3262, 5
        %v3265 = vsel %vm570, %v3260, %v3264
        %v3266 = vshrl.u32 %v3205, 16
        %v3268 = vrot.slane %v3266, 4
        %v3269 = vor.u32 %v3268, %v3264
        %v3270 = vrot.slane %v3269, 4
        %v3272 = vshll.u32 %v3206, 16
        %v3274 = vrot.slane %v3272, 5
        %v3275 = vsel %vm570, %v3270, %v3274
        %v3277 = vshrl.u32 %v3207, 16
        %v3279 = vrot.slane %v3277, 4
        %v3280 = vshll.u32 %v3207, 16
        %v3282 = vrot.slane %v3280, 5
        %v3283 = vor.u32 %v3279, %v3282
        %v3284 = vrot.slane %v3283, 4
        %v3286 = vshll.u32 %v3208, 16
        %v3288 = vrot.slane %v3286, 5
        %v3289 = vsel %vm570, %v3284, %v3288
        %v3290 = vshrl.u32 %v3208, 16
        %v3292 = vrot.slane %v3290, 4
        %v3293 = vor.u32 %v3292, %v3288
        %v3294 = vrot.slane %v3293, 4
        %v3296 = vshll.u32 %v3209, 16
        %v3298 = vrot.slane %v3296, 5
        %v3299 = vsel %vm570, %v3294, %v3298
        %v3301 = vshrl.u32 %v3210, 16
        %v3303 = vrot.slane %v3301, 4
        %v3304 = vshll.u32 %v3210, 16
        %v3306 = vrot.slane %v3304, 5
        %v3307 = vor.u32 %v3303, %v3306
        %v3308 = vrot.slane %v3307, 4
        %v3310 = vshll.u32 %v3211, 16
        %v3312 = vrot.slane %v3310, 5
        %v3313 = vsel %vm570, %v3308, %v3312
        %v3314 = vshrl.u32 %v3211, 16
        %v3316 = vrot.slane %v3314, 4
        %v3317 = vor.u32 %v3316, %v3312
        %v3318 = vrot.slane %v3317, 4
        %v3320 = vshll.u32 %v3212, 16
        %v3322 = vrot.slane %v3320, 5
        %v3323 = vsel %vm570, %v3318, %v3322
        %v3325 = vshrl.u32 %v3213, 16
        %v3327 = vrot.slane %v3325, 4
        %v3328 = vshll.u32 %v3213, 16
        %v3330 = vrot.slane %v3328, 5
        %v3331 = vor.u32 %v3327, %v3330
        %v3332 = vrot.slane %v3331, 4
        %v3334 = vshll.u32 %v3214, 16
        %v3336 = vrot.slane %v3334, 5
        %v3337 = vsel %vm570, %v3332, %v3336
        %v3338 = vshrl.u32 %v3214, 16
        %v3340 = vrot.slane %v3338, 4
        %v3341 = vor.u32 %v3340, %v3336
        %v3342 = vrot.slane %v3341, 4
        %v3344 = vshll.u32 %v3215, 16
        %v3346 = vrot.slane %v3344, 5
        %v3347 = vsel %vm570, %v3342, %v3346
        %v3349 = vshrl.u32 %v3216, 16
        %v3351 = vrot.slane %v3349, 4
        %v3352 = vshll.u32 %v3216, 16
        %v3354 = vrot.slane %v3352, 5
        %v3355 = vor.u32 %v3351, %v3354
        %v3356 = vrot.slane %v3355, 4
        %v3358 = vshll.u32 %v3217, 16
        %v3360 = vrot.slane %v3358, 5
        %v3361 = vsel %vm570, %v3356, %v3360
        %v3362 = vshrl.u32 %v3217, 16
        %v3364 = vrot.slane %v3362, 4
        %v3365 = vor.u32 %v3364, %v3360
        %v3366 = vrot.slane %v3365, 4
        %v3368 = vshll.u32 %v3218, 16
        %v3370 = vrot.slane %v3368, 5
        %v3371 = vsel %vm570, %v3366, %v3370
        %v3373 = vshrl.u32 %v3219, 16
        %v3375 = vrot.slane %v3373, 4
        %v3376 = vshll.u32 %v3219, 16
        %v3378 = vrot.slane %v3376, 5
        %v3379 = vor.u32 %v3375, %v3378
        %v3380 = vrot.slane %v3379, 4
        %v3382 = vshll.u32 %v3220, 16
        %v3384 = vrot.slane %v3382, 5
        %v3385 = vsel %vm570, %v3380, %v3384
        %v3386 = vshrl.u32 %v3220, 16
        %v3388 = vrot.slane %v3386, 4
        %v3389 = vor.u32 %v3388, %v3384
        %v3390 = vrot.slane %v3389, 4
        %v3392 = vshll.u32 %v3221, 16
        %v3394 = vrot.slane %v3392, 5
        %v3395 = vsel %vm570, %v3390, %v3394
        %v3397 = vshrl.u32 %v3222, 16
        %v3399 = vrot.slane %v3397, 4
        %v3400 = vshll.u32 %v3222, 16
        %v3402 = vrot.slane %v3400, 5
        %v3403 = vor.u32 %v3399, %v3402
        %v3404 = vrot.slane %v3403, 4
        %v3406 = vshll.u32 %v3223, 16
        %v3408 = vrot.slane %v3406, 5
        %v3409 = vsel %vm570, %v3404, %v3408
        %v3410 = vshrl.u32 %v3223, 16
        %v3412 = vrot.slane %v3410, 4
        %v3413 = vor.u32 %v3412, %v3408
        %v3414 = vrot.slane %v3413, 4
        %v3416 = vshll.u32 %v3224, 16
        %v3418 = vrot.slane %v3416, 5
        %v3419 = vsel %vm570, %v3414, %v3418
        %v3421 = vshrl.u32 %v3225, 16
        %v3423 = vrot.slane %v3421, 4
        %v3424 = vshll.u32 %v3225, 16
        %v3426 = vrot.slane %v3424, 5
        %v3427 = vor.u32 %v3423, %v3426
        %v3428 = vrot.slane %v3427, 4
        %v3430 = vshll.u32 %v3226, 16
        %v3432 = vrot.slane %v3430, 5
        %v3433 = vsel %vm570, %v3428, %v3432
        %v3434 = vshrl.u32 %v3226, 16
        %v3436 = vrot.slane %v3434, 4
        %v3437 = vor.u32 %v3436, %v3432
        %v3438 = vrot.slane %v3437, 4
        %v3440 = vshll.u32 %v3227, 16
        %v3442 = vrot.slane %v3440, 5
        %v3443 = vsel %vm570, %v3438, %v3442
        %v3445 = vshrl.u32 %v3228, 16
        %v3447 = vrot.slane %v3445, 4
        %v3448 = vshll.u32 %v3228, 16
        %v3450 = vrot.slane %v3448, 5
        %v3451 = vor.u32 %v3447, %v3450
        %v3452 = vrot.slane %v3451, 4
        %v3454 = vshll.u32 %v3229, 16
        %v3456 = vrot.slane %v3454, 5
        %v3457 = vsel %vm570, %v3452, %v3456
        %v3458 = vshrl.u32 %v3229, 16
        %v3460 = vrot.slane %v3458, 4
        %v3461 = vor.u32 %v3460, %v3456
        %v3462 = vrot.slane %v3461, 4
        %v3464 = vshll.u32 %v3230, 16
        %v3466 = vrot.slane %v3464, 5
        %v3467 = vsel %vm570, %v3462, %v3466
        %v3469 = vshrl.u32 %v3231, 16
        %v3471 = vrot.slane %v3469, 4
        %v3472 = vshll.u32 %v3231, 16
        %v3474 = vrot.slane %v3472, 5
        %v3475 = vor.u32 %v3471, %v3474
        %v3476 = vrot.slane %v3475, 4
        %v3478 = vshll.u32 %v3232, 16
        %v3480 = vrot.slane %v3478, 5
        %v3481 = vsel %vm570, %v3476, %v3480
        %v3482 = vshrl.u32 %v3232, 16
        %v3484 = vrot.slane %v3482, 4
        %v3485 = vor.u32 %v3484, %v3480
        %v3486 = vrot.slane %v3485, 4
        %v3488 = vshll.u32 %v3233, 16
        %v3490 = vrot.slane %v3488, 5
        %v3491 = vsel %vm570, %v3486, %v3490
        %v3493 = vshrl.u32 %v3234, 16
        %v3495 = vrot.slane %v3493, 4
        %v3496 = vshll.u32 %v3234, 16
        %v3498 = vrot.slane %v3496, 5
        %v3499 = vor.u32 %v3495, %v3498
        %v3500 = vrot.slane %v3499, 4
        %v3502 = vshll.u32 %v3235, 16
        %v3504 = vrot.slane %v3502, 5
        %v3505 = vsel %vm570, %v3500, %v3504
        %v3506 = vshrl.u32 %v3235, 16
        %v3508 = vrot.slane %v3506, 4
        %v3509 = vor.u32 %v3508, %v3504
        %v3510 = vrot.slane %v3509, 4
        %v3512 = vshll.u32 %v3236, 16
        %v3514 = vrot.slane %v3512, 5
        %v3515 = vsel %vm570, %v3510, %v3514
        %v3517 = vshrl.u32 %v3237, 16
        %v3519 = vrot.slane %v3517, 4
        %v3520 = vshll.u32 %v3237, 16
        %v3522 = vrot.slane %v3520, 5
        %v3523 = vor.u32 %v3519, %v3522
        %v3524 = vrot.slane %v3523, 4
        %v3526 = vshll.u32 %v3238, 16
        %v3528 = vrot.slane %v3526, 5
        %v3529 = vsel %vm570, %v3524, %v3528
        %v3530 = vshrl.u32 %v3238, 16
        %v3532 = vrot.slane %v3530, 4
        %v3533 = vor.u32 %v3532, %v3528
        %v3534 = vrot.slane %v3533, 4
        %v3536 = vshll.u32 %v3239, 16
        %v3538 = vrot.slane %v3536, 5
        %v3539 = vsel %vm570, %v3534, %v3538
        %v3541 = vshrl.u32 %v3240, 16
        %v3543 = vrot.slane %v3541, 4
        %v3544 = vshll.u32 %v3240, 16
        %v3546 = vrot.slane %v3544, 5
        %v3547 = vor.u32 %v3543, %v3546
        %v3548 = vrot.slane %v3547, 4
        %v3550 = vshll.u32 %v3241, 16
        %v3552 = vrot.slane %v3550, 5
        %v3553 = vsel %vm570, %v3548, %v3552
        %v3554 = vshrl.u32 %v3241, 16
        %v3556 = vrot.slane %v3554, 4
        %v3557 = vor.u32 %v3556, %v3552
        %v3558 = vrot.slane %v3557, 4
        %v3560 = vshll.u32 %v3242, 16
        %v3562 = vrot.slane %v3560, 5
        %v3563 = vsel %vm570, %v3558, %v3562
        %v3565 = vshrl.u32 %v3243, 16
        %v3567 = vrot.slane %v3565, 4
        %v3568 = vshll.u32 %v3243, 16
        %v3570 = vrot.slane %v3568, 5
        %v3571 = vor.u32 %v3567, %v3570
        %v3572 = vrot.slane %v3571, 4
        %v3574 = vshll.u32 %v3244, 16
        %v3576 = vrot.slane %v3574, 5
        %v3577 = vsel %vm570, %v3572, %v3576
        %v3578 = vshrl.u32 %v3244, 16
        %v3580 = vrot.slane %v3578, 4
        %v3581 = vor.u32 %v3580, %v3576
        %v3582 = vrot.slane %v3581, 4
        %v3584 = vshll.u32 %v3245, 16
        %v3586 = vrot.slane %v3584, 5
        %v3587 = vsel %vm570, %v3582, %v3586
        %v3589 = vshrl.u32 %v3246, 16
        %v3591 = vrot.slane %v3589, 4
        %v3592 = vshll.u32 %v3246, 16
        %v3594 = vrot.slane %v3592, 5
        %v3595 = vor.u32 %v3591, %v3594
        %v3596 = vrot.slane %v3595, 4
        %v3598 = vshll.u32 %v3247, 16
        %v3600 = vrot.slane %v3598, 5
        %v3601 = vsel %vm570, %v3596, %v3600
        %v3602 = vshrl.u32 %v3247, 16
        %v3604 = vrot.slane %v3602, 4
        %v3605 = vor.u32 %v3604, %v3600
        %v3606 = vrot.slane %v3605, 4
        %v3608 = vshll.u32 %v3248, 16
        %v3610 = vrot.slane %v3608, 5
        %v3611 = vsel %vm570, %v3606, %v3610
        %v3613 = vshrl.u32 %v3249, 16
        %v3615 = vrot.slane %v3613, 4
        %v3616 = vshll.u32 %v3249, 16
        %v3618 = vrot.slane %v3616, 5
        %v3619 = vor.u32 %v3615, %v3618
        %v3620 = vrot.slane %v3619, 4
        %v3622 = vshll.u32 %v3250, 16
        %v3624 = vrot.slane %v3622, 5
        %v3625 = vsel %vm570, %v3620, %v3624
        %v3626 = vshrl.u32 %v3250, 16
        %v3628 = vrot.slane %v3626, 4
        %v3629 = vor.u32 %v3628, %v3624
        %v3630 = vrot.slane %v3629, 4
        %v3632 = vshll.u32 %v3251, 16
        %v3634 = vrot.slane %v3632, 5
        %v3635 = vsel %vm570, %v3630, %v3634
        %v3636 = vld [vmem:[%s219 + $0x1c] sm:$0xf]
        %v3637 = vunpack.c.l.b16 %v3265
        %v3638 = vunpack.c.l.b16 %v3275
        %v3639 = vunpack.c.l.b16 %v3289
        %v3640 = vunpack.c.l.b16 %v3299
        %v3641 = vunpack.c.l.b16 %v3313
        %v3642 = vunpack.c.l.b16 %v3323
        %v3643 = vunpack.c.l.b16 %v3337
        %v3644 = vunpack.c.l.b16 %v3347
        %v3645 = vunpack.c.l.b16 %v3361
        %v3646 = vunpack.c.l.b16 %v3371
        %v3647 = vunpack.c.l.b16 %v3385
        %v3648 = vunpack.c.l.b16 %v3395
        %v3649 = vunpack.c.l.b16 %v3409
        %v3650 = vunpack.c.l.b16 %v3419
        %v3651 = vunpack.c.l.b16 %v3433
        %v3652 = vunpack.c.l.b16 %v3443
        %v3653 = vunpack.c.l.b16 %v3457
        %v3654 = vunpack.c.l.b16 %v3467
        %v3655 = vunpack.c.l.b16 %v3481
        %v3656 = vunpack.c.l.b16 %v3491
        %v3657 = vunpack.c.l.b16 %v3505
        %v3658 = vunpack.c.l.b16 %v3515
        %v3659 = vunpack.c.l.b16 %v3529
        %v3660 = vunpack.c.l.b16 %v3539
        %v3661 = vunpack.c.l.b16 %v3553
        %v3662 = vunpack.c.l.b16 %v3563
        %v3663 = vunpack.c.l.b16 %v3577
        %v3664 = vunpack.c.l.b16 %v3587
        %v3665 = vunpack.c.l.b16 %v3601
        %v3666 = vunpack.c.l.b16 %v3611
        %v3667 = vunpack.c.l.b16 %v3625
        %v3668 = vunpack.c.l.b16 %v3635
        %v3669 = vpack.c.b16 %v3638, %v3637
        %v3670 = vpack.c.b16 %v3640, %v3639
        %v3671 = vpack.c.b16 %v3642, %v3641
        %v3672 = vpack.c.b16 %v3644, %v3643
        %v3673 = vpack.c.b16 %v3646, %v3645
        %v3674 = vpack.c.b16 %v3648, %v3647
        %v3675 = vpack.c.b16 %v3650, %v3649
        %v3676 = vpack.c.b16 %v3652, %v3651
        %v3677 = vpack.c.b16 %v3654, %v3653
        %v3678 = vpack.c.b16 %v3656, %v3655
        %v3679 = vpack.c.b16 %v3658, %v3657
        %v3680 = vpack.c.b16 %v3660, %v3659
        %v3681 = vpack.c.b16 %v3662, %v3661
        %v3682 = vpack.c.b16 %v3664, %v3663
        %v3683 = vpack.c.b16 %v3666, %v3665
        %v3684 = vpack.c.b16 %v3668, %v3667
        %v3686 = vsel %vm346, %v3669, 0
        %v3689 = vsel %vm346, %v3670, 0
        %v3692 = vsel %vm346, %v3671, 0
        %v3695 = vsel %vm346, %v3672, 0
        %v3698 = vsel %vm346, %v3673, 0
        %v3701 = vsel %vm346, %v3674, 0
        %v3704 = vsel %vm346, %v3675, 0
        %v3707 = vsel %vm346, %v3676, 0
        %v3710 = vsel %vm346, %v3677, 0
        %v3713 = vsel %vm346, %v3678, 0
        %v3716 = vsel %vm346, %v3679, 0
        %v3719 = vsel %vm346, %v3680, 0
        %v3722 = vsel %vm346, %v3681, 0
        %v3725 = vsel %vm346, %v3682, 0
        %v3728 = vsel %vm346, %v3683, 0
        %v3731 = vsel %vm346, %v3684, 0
        %v3734 = vsel %vm395, %v3636, 0
        %3736 = vmatpush.bf16.msra.mxu0 0
        %3737 = vmatpush.bf16.msra.mxu0 0
        %3738 = vmatpush.bf16.msra.mxu0 0
        %3739 = vmatpush.bf16.msra.mxu0 0
        %3740 = vmatpush.bf16.msra.mxu0 0
        %3741 = vmatpush.bf16.msra.mxu0 0
        %3742 = vmatpush.bf16.msra.mxu0 0
        %3743 = vmatpush.bf16.msra.mxu0 %v3734
        %3744 = vmatmul.bf16.gmra.mxu0 %v3686
        %v3745 = vpop.f32.mrf.mxu0
        %v3746 = vadd.f32 0.0, %v3745
        %v3747 = vpop.f32.mrf.mxu0
        %v3748 = vadd.f32 0.0, %v3747
        %3749 = vmatmul.bf16.gmra.mxu0 %v3689
        %v3750 = vpop.f32.mrf.mxu0
        %v3751 = vadd.f32 0.0, %v3750
        %v3752 = vpop.f32.mrf.mxu0
        %v3753 = vadd.f32 0.0, %v3752
        %3754 = vmatmul.bf16.gmra.mxu0 %v3692
        %v3755 = vpop.f32.mrf.mxu0
        %v3756 = vadd.f32 0.0, %v3755
        %v3757 = vpop.f32.mrf.mxu0
        %v3758 = vadd.f32 0.0, %v3757
        %3759 = vmatmul.bf16.gmra.mxu0 %v3695
        %v3760 = vpop.f32.mrf.mxu0
        %v3761 = vadd.f32 0.0, %v3760
        %v3762 = vpop.f32.mrf.mxu0
        %v3763 = vadd.f32 0.0, %v3762
        %3764 = vmatmul.bf16.gmra.mxu0 %v3698
        %v3765 = vpop.f32.mrf.mxu0
        %v3766 = vadd.f32 0.0, %v3765
        %v3767 = vpop.f32.mrf.mxu0
        %v3768 = vadd.f32 0.0, %v3767
        %3769 = vmatmul.bf16.gmra.mxu0 %v3701
        %v3770 = vpop.f32.mrf.mxu0
        %v3771 = vadd.f32 0.0, %v3770
        %v3772 = vpop.f32.mrf.mxu0
        %v3773 = vadd.f32 0.0, %v3772
        %3774 = vmatmul.bf16.gmra.mxu0 %v3704
        %v3775 = vpop.f32.mrf.mxu0
        %v3776 = vadd.f32 0.0, %v3775
        %v3777 = vpop.f32.mrf.mxu0
        %v3778 = vadd.f32 0.0, %v3777
        %3779 = vmatmul.bf16.gmra.mxu0 %v3707
        %v3780 = vpop.f32.mrf.mxu0
        %v3781 = vadd.f32 0.0, %v3780
        %v3782 = vpop.f32.mrf.mxu0
        %v3783 = vadd.f32 0.0, %v3782
        %3784 = vmatmul.bf16.gmra.mxu0 %v3710
        %v3785 = vpop.f32.mrf.mxu0
        %v3786 = vadd.f32 0.0, %v3785
        %v3787 = vpop.f32.mrf.mxu0
        %v3788 = vadd.f32 0.0, %v3787
        %3789 = vmatmul.bf16.gmra.mxu0 %v3713
        %v3790 = vpop.f32.mrf.mxu0
        %v3791 = vadd.f32 0.0, %v3790
        %v3792 = vpop.f32.mrf.mxu0
        %v3793 = vadd.f32 0.0, %v3792
        %3794 = vmatmul.bf16.gmra.mxu0 %v3716
        %v3795 = vpop.f32.mrf.mxu0
        %v3796 = vadd.f32 0.0, %v3795
        %v3797 = vpop.f32.mrf.mxu0
        %v3798 = vadd.f32 0.0, %v3797
        %3799 = vmatmul.bf16.gmra.mxu0 %v3719
        %v3800 = vpop.f32.mrf.mxu0
        %v3801 = vadd.f32 0.0, %v3800
        %v3802 = vpop.f32.mrf.mxu0
        %v3803 = vadd.f32 0.0, %v3802
        %3804 = vmatmul.bf16.gmra.mxu0 %v3722
        %v3805 = vpop.f32.mrf.mxu0
        %v3806 = vadd.f32 0.0, %v3805
        %v3807 = vpop.f32.mrf.mxu0
        %v3808 = vadd.f32 0.0, %v3807
        %3809 = vmatmul.bf16.gmra.mxu0 %v3725
        %v3810 = vpop.f32.mrf.mxu0
        %v3811 = vadd.f32 0.0, %v3810
        %v3812 = vpop.f32.mrf.mxu0
        %v3813 = vadd.f32 0.0, %v3812
        %3814 = vmatmul.bf16.gmra.mxu0 %v3728
        %v3815 = vpop.f32.mrf.mxu0
        %v3816 = vadd.f32 0.0, %v3815
        %v3817 = vpop.f32.mrf.mxu0
        %v3818 = vadd.f32 0.0, %v3817
        %3819 = vmatmul.bf16.gmra.mxu0 %v3731
        %v3820 = vpop.f32.mrf.mxu0
        %v3821 = vadd.f32 0.0, %v3820
        %v3822 = vpop.f32.mrf.mxu0
        %v3823 = vadd.f32 0.0, %v3822
        %3824 = vdwg.mxu0
        %v3825 = vadd.f32 %v3172, %v3746
        %v3826 = vadd.f32 %v3173, %v3748
        %v3827 = vadd.f32 %v3174, %v3751
        %v3828 = vadd.f32 %v3175, %v3753
        %v3829 = vadd.f32 %v3176, %v3756
        %v3830 = vadd.f32 %v3177, %v3758
        %v3831 = vadd.f32 %v3178, %v3761
        %v3832 = vadd.f32 %v3179, %v3763
        %v3833 = vadd.f32 %v3180, %v3766
        %v3834 = vadd.f32 %v3181, %v3768
        %v3835 = vadd.f32 %v3182, %v3771
        %v3836 = vadd.f32 %v3183, %v3773
        %v3837 = vadd.f32 %v3184, %v3776
        %v3838 = vadd.f32 %v3185, %v3778
        %v3839 = vadd.f32 %v3186, %v3781
        %v3840 = vadd.f32 %v3187, %v3783
        %v3841 = vadd.f32 %v3188, %v3786
        %v3842 = vadd.f32 %v3189, %v3788
        %v3843 = vadd.f32 %v3190, %v3791
        %v3844 = vadd.f32 %v3191, %v3793
        %v3845 = vadd.f32 %v3192, %v3796
        %v3846 = vadd.f32 %v3193, %v3798
        %v3847 = vadd.f32 %v3194, %v3801
        %v3848 = vadd.f32 %v3195, %v3803
        %v3849 = vadd.f32 %v3196, %v3806
        %v3850 = vadd.f32 %v3197, %v3808
        %v3851 = vadd.f32 %v3198, %v3811
        %v3852 = vadd.f32 %v3199, %v3813
        %v3853 = vadd.f32 %v3200, %v3816
        %v3854 = vadd.f32 %v3201, %v3818
        %v3855 = vadd.f32 %v3202, %v3821
        %v3856 = vadd.f32 %v3203, %v3823
        %v3857 = vld [vmem:[%s2918] sm:$0xe]
        %v3858 = vld [vmem:[%s2918 + $0xc] sm:$0xe]
        %v3859 = vld [vmem:[%s2918 + $0x18] sm:$0xe]
        %v3860 = vld [vmem:[%s2918 + $0x24] sm:$0xe]
        %v3861 = vld [vmem:[%s2918 + $0x30] sm:$0xe]
        %v3862 = vld [vmem:[%s2918 + $0x3c] sm:$0xe]
        %v3863 = vld [vmem:[%s2918 + $0x48] sm:$0xe]
        %v3864 = vld [vmem:[%s2918 + $0x54] sm:$0xe]
        %v3865 = vld [vmem:[%s2918 + $0x60] sm:$0xe]
        %v3866 = vld [vmem:[%s2918 + $0x6c] sm:$0xe]
        %v3867 = vld [vmem:[%s2918 + $0x78] sm:$0xe]
        %v3868 = vld [vmem:[%s2918 + $0x84] sm:$0xe]
        %v3869 = vld [vmem:[%s2918 + $0x90] sm:$0xe]
        %v3870 = vld [vmem:[%s2918 + $0x9c] sm:$0xe]
        %v3871 = vld [vmem:[%s2918 + $0xa8] sm:$0xe]
        %v3872 = vld [vmem:[%s2918 + $0xb4] sm:$0xe]
        %v3921 = vrot.slane %v3857, 5
        %v3922 = vrot.slane %v3921, 4
        %v3923 = vrot.slane %v3205, 5
        %v3924 = vsel %vm1242, %v3922, %v3923
        %v3925 = vrot.slane %v3923, 4
        %v3926 = vrot.slane %v3206, 5
        %v3927 = vsel %vm1242, %v3925, %v3926
        %v3928 = vrot.slane %v3858, 5
        %v3929 = vrot.slane %v3928, 4
        %v3930 = vrot.slane %v3208, 5
        %v3931 = vsel %vm1242, %v3929, %v3930
        %v3932 = vrot.slane %v3930, 4
        %v3933 = vrot.slane %v3209, 5
        %v3934 = vsel %vm1242, %v3932, %v3933
        %v3935 = vrot.slane %v3859, 5
        %v3936 = vrot.slane %v3935, 4
        %v3937 = vrot.slane %v3211, 5
        %v3938 = vsel %vm1242, %v3936, %v3937
        %v3939 = vrot.slane %v3937, 4
        %v3940 = vrot.slane %v3212, 5
        %v3941 = vsel %vm1242, %v3939, %v3940
        %v3942 = vrot.slane %v3860, 5
        %v3943 = vrot.slane %v3942, 4
        %v3944 = vrot.slane %v3214, 5
        %v3945 = vsel %vm1242, %v3943, %v3944
        %v3946 = vrot.slane %v3944, 4
        %v3947 = vrot.slane %v3215, 5
        %v3948 = vsel %vm1242, %v3946, %v3947
        %v3949 = vrot.slane %v3861, 5
        %v3950 = vrot.slane %v3949, 4
        %v3951 = vrot.slane %v3217, 5
        %v3952 = vsel %vm1242, %v3950, %v3951
        %v3953 = vrot.slane %v3951, 4
        %v3954 = vrot.slane %v3218, 5
        %v3955 = vsel %vm1242, %v3953, %v3954
        %v3956 = vrot.slane %v3862, 5
        %v3957 = vrot.slane %v3956, 4
        %v3958 = vrot.slane %v3220, 5
        %v3959 = vsel %vm1242, %v3957, %v3958
        %v3960 = vrot.slane %v3958, 4
        %v3961 = vrot.slane %v3221, 5
        %v3962 = vsel %vm1242, %v3960, %v3961
        %v3963 = vrot.slane %v3863, 5
        %v3964 = vrot.slane %v3963, 4
        %v3965 = vrot.slane %v3223, 5
        %v3966 = vsel %vm1242, %v3964, %v3965
        %v3967 = vrot.slane %v3965, 4
        %v3968 = vrot.slane %v3224, 5
        %v3969 = vsel %vm1242, %v3967, %v3968
        %v3970 = vrot.slane %v3864, 5
        %v3971 = vrot.slane %v3970, 4
        %v3972 = vrot.slane %v3226, 5
        %v3973 = vsel %vm1242, %v3971, %v3972
        %v3974 = vrot.slane %v3972, 4
        %v3975 = vrot.slane %v3227, 5
        %v3976 = vsel %vm1242, %v3974, %v3975
        %v3977 = vrot.slane %v3865, 5
        %v3978 = vrot.slane %v3977, 4
        %v3979 = vrot.slane %v3229, 5
        %v3980 = vsel %vm1242, %v3978, %v3979
        %v3981 = vrot.slane %v3979, 4
        %v3982 = vrot.slane %v3230, 5
        %v3983 = vsel %vm1242, %v3981, %v3982
        %v3984 = vrot.slane %v3866, 5
        %v3985 = vrot.slane %v3984, 4
        %v3986 = vrot.slane %v3232, 5
        %v3987 = vsel %vm1242, %v3985, %v3986
        %v3988 = vrot.slane %v3986, 4
        %v3989 = vrot.slane %v3233, 5
        %v3990 = vsel %vm1242, %v3988, %v3989
        %v3991 = vrot.slane %v3867, 5
        %v3992 = vrot.slane %v3991, 4
        %v3993 = vrot.slane %v3235, 5
        %v3994 = vsel %vm1242, %v3992, %v3993
        %v3995 = vrot.slane %v3993, 4
        %v3996 = vrot.slane %v3236, 5
        %v3997 = vsel %vm1242, %v3995, %v3996
        %v3998 = vrot.slane %v3868, 5
        %v3999 = vrot.slane %v3998, 4
        %v4000 = vrot.slane %v3238, 5
        %v4001 = vsel %vm1242, %v3999, %v4000
        %v4002 = vrot.slane %v4000, 4
        %v4003 = vrot.slane %v3239, 5
        %v4004 = vsel %vm1242, %v4002, %v4003
        %v4005 = vrot.slane %v3869, 5
        %v4006 = vrot.slane %v4005, 4
        %v4007 = vrot.slane %v3241, 5
        %v4008 = vsel %vm1242, %v4006, %v4007
        %v4009 = vrot.slane %v4007, 4
        %v4010 = vrot.slane %v3242, 5
        %v4011 = vsel %vm1242, %v4009, %v4010
        %v4012 = vrot.slane %v3870, 5
        %v4013 = vrot.slane %v4012, 4
        %v4014 = vrot.slane %v3244, 5
        %v4015 = vsel %vm1242, %v4013, %v4014
        %v4016 = vrot.slane %v4014, 4
        %v4017 = vrot.slane %v3245, 5
        %v4018 = vsel %vm1242, %v4016, %v4017
        %v4019 = vrot.slane %v3871, 5
        %v4020 = vrot.slane %v4019, 4
        %v4021 = vrot.slane %v3247, 5
        %v4022 = vsel %vm1242, %v4020, %v4021
        %v4023 = vrot.slane %v4021, 4
        %v4024 = vrot.slane %v3248, 5
        %v4025 = vsel %vm1242, %v4023, %v4024
        %v4026 = vrot.slane %v3872, 5
        %v4027 = vrot.slane %v4026, 4
        %v4028 = vrot.slane %v3250, 5
        %v4029 = vsel %vm1242, %v4027, %v4028
        %v4030 = vrot.slane %v4028, 4
        %v4031 = vrot.slane %v3251, 5
        %v4032 = vsel %vm1242, %v4030, %v4031
        %v4033 = vld [vmem:[%s219 + $0x20] sm:$0xf]
        %v4034 = vunpack.c.l.b16 %v3924
        %v4035 = vunpack.c.l.b16 %v3927
        %v4036 = vunpack.c.l.b16 %v3931
        %v4037 = vunpack.c.l.b16 %v3934
        %v4038 = vunpack.c.l.b16 %v3938
        %v4039 = vunpack.c.l.b16 %v3941
        %v4040 = vunpack.c.l.b16 %v3945
        %v4041 = vunpack.c.l.b16 %v3948
        %v4042 = vunpack.c.l.b16 %v3952
        %v4043 = vunpack.c.l.b16 %v3955
        %v4044 = vunpack.c.l.b16 %v3959
        %v4045 = vunpack.c.l.b16 %v3962
        %v4046 = vunpack.c.l.b16 %v3966
        %v4047 = vunpack.c.l.b16 %v3969
        %v4048 = vunpack.c.l.b16 %v3973
        %v4049 = vunpack.c.l.b16 %v3976
        %v4050 = vunpack.c.l.b16 %v3980
        %v4051 = vunpack.c.l.b16 %v3983
        %v4052 = vunpack.c.l.b16 %v3987
        %v4053 = vunpack.c.l.b16 %v3990
        %v4054 = vunpack.c.l.b16 %v3994
        %v4055 = vunpack.c.l.b16 %v3997
        %v4056 = vunpack.c.l.b16 %v4001
        %v4057 = vunpack.c.l.b16 %v4004
        %v4058 = vunpack.c.l.b16 %v4008
        %v4059 = vunpack.c.l.b16 %v4011
        %v4060 = vunpack.c.l.b16 %v4015
        %v4061 = vunpack.c.l.b16 %v4018
        %v4062 = vunpack.c.l.b16 %v4022
        %v4063 = vunpack.c.l.b16 %v4025
        %v4064 = vunpack.c.l.b16 %v4029
        %v4065 = vunpack.c.l.b16 %v4032
        %v4066 = vpack.c.b16 %v4035, %v4034
        %v4067 = vpack.c.b16 %v4037, %v4036
        %v4068 = vpack.c.b16 %v4039, %v4038
        %v4069 = vpack.c.b16 %v4041, %v4040
        %v4070 = vpack.c.b16 %v4043, %v4042
        %v4071 = vpack.c.b16 %v4045, %v4044
        %v4072 = vpack.c.b16 %v4047, %v4046
        %v4073 = vpack.c.b16 %v4049, %v4048
        %v4074 = vpack.c.b16 %v4051, %v4050
        %v4075 = vpack.c.b16 %v4053, %v4052
        %v4076 = vpack.c.b16 %v4055, %v4054
        %v4077 = vpack.c.b16 %v4057, %v4056
        %v4078 = vpack.c.b16 %v4059, %v4058
        %v4079 = vpack.c.b16 %v4061, %v4060
        %v4080 = vpack.c.b16 %v4063, %v4062
        %v4081 = vpack.c.b16 %v4065, %v4064
        %v4083 = vsel %vm346, %v4066, 0
        %v4086 = vsel %vm346, %v4067, 0
        %v4089 = vsel %vm346, %v4068, 0
        %v4092 = vsel %vm346, %v4069, 0
        %v4095 = vsel %vm346, %v4070, 0
        %v4098 = vsel %vm346, %v4071, 0
        %v4101 = vsel %vm346, %v4072, 0
        %v4104 = vsel %vm346, %v4073, 0
        %v4107 = vsel %vm346, %v4074, 0
        %v4110 = vsel %vm346, %v4075, 0
        %v4113 = vsel %vm346, %v4076, 0
        %v4116 = vsel %vm346, %v4077, 0
        %v4119 = vsel %vm346, %v4078, 0
        %v4122 = vsel %vm346, %v4079, 0
        %v4125 = vsel %vm346, %v4080, 0
        %v4128 = vsel %vm346, %v4081, 0
        %v4131 = vsel %vm395, %v4033, 0
        %4133 = vmatpush.bf16.msra.mxu0 0
        %4134 = vmatpush.bf16.msra.mxu0 0
        %4135 = vmatpush.bf16.msra.mxu0 0
        %4136 = vmatpush.bf16.msra.mxu0 0
        %4137 = vmatpush.bf16.msra.mxu0 0
        %4138 = vmatpush.bf16.msra.mxu0 0
        %4139 = vmatpush.bf16.msra.mxu0 0
        %4140 = vmatpush.bf16.msra.mxu0 %v4131
        %4141 = vmatmul.bf16.gmra.mxu0 %v4083
        %v4142 = vpop.f32.mrf.mxu0
        %v4143 = vadd.f32 0.0, %v4142
        %v4144 = vpop.f32.mrf.mxu0
        %v4145 = vadd.f32 0.0, %v4144
        %4146 = vmatmul.bf16.gmra.mxu0 %v4086
        %v4147 = vpop.f32.mrf.mxu0
        %v4148 = vadd.f32 0.0, %v4147
        %v4149 = vpop.f32.mrf.mxu0
        %v4150 = vadd.f32 0.0, %v4149
        %4151 = vmatmul.bf16.gmra.mxu0 %v4089
        %v4152 = vpop.f32.mrf.mxu0
        %v4153 = vadd.f32 0.0, %v4152
        %v4154 = vpop.f32.mrf.mxu0
        %v4155 = vadd.f32 0.0, %v4154
        %4156 = vmatmul.bf16.gmra.mxu0 %v4092
        %v4157 = vpop.f32.mrf.mxu0
        %v4158 = vadd.f32 0.0, %v4157
        %v4159 = vpop.f32.mrf.mxu0
        %v4160 = vadd.f32 0.0, %v4159
        %4161 = vmatmul.bf16.gmra.mxu0 %v4095
        %v4162 = vpop.f32.mrf.mxu0
        %v4163 = vadd.f32 0.0, %v4162
        %v4164 = vpop.f32.mrf.mxu0
        %v4165 = vadd.f32 0.0, %v4164
        %4166 = vmatmul.bf16.gmra.mxu0 %v4098
        %v4167 = vpop.f32.mrf.mxu0
        %v4168 = vadd.f32 0.0, %v4167
        %v4169 = vpop.f32.mrf.mxu0
        %v4170 = vadd.f32 0.0, %v4169
        %4171 = vmatmul.bf16.gmra.mxu0 %v4101
        %v4172 = vpop.f32.mrf.mxu0
        %v4173 = vadd.f32 0.0, %v4172
        %v4174 = vpop.f32.mrf.mxu0
        %v4175 = vadd.f32 0.0, %v4174
        %4176 = vmatmul.bf16.gmra.mxu0 %v4104
        %v4177 = vpop.f32.mrf.mxu0
        %v4178 = vadd.f32 0.0, %v4177
        %v4179 = vpop.f32.mrf.mxu0
        %v4180 = vadd.f32 0.0, %v4179
        %4181 = vmatmul.bf16.gmra.mxu0 %v4107
        %v4182 = vpop.f32.mrf.mxu0
        %v4183 = vadd.f32 0.0, %v4182
        %v4184 = vpop.f32.mrf.mxu0
        %v4185 = vadd.f32 0.0, %v4184
        %4186 = vmatmul.bf16.gmra.mxu0 %v4110
        %v4187 = vpop.f32.mrf.mxu0
        %v4188 = vadd.f32 0.0, %v4187
        %v4189 = vpop.f32.mrf.mxu0
        %v4190 = vadd.f32 0.0, %v4189
        %4191 = vmatmul.bf16.gmra.mxu0 %v4113
        %v4192 = vpop.f32.mrf.mxu0
        %v4193 = vadd.f32 0.0, %v4192
        %v4194 = vpop.f32.mrf.mxu0
        %v4195 = vadd.f32 0.0, %v4194
        %4196 = vmatmul.bf16.gmra.mxu0 %v4116
        %v4197 = vpop.f32.mrf.mxu0
        %v4198 = vadd.f32 0.0, %v4197
        %v4199 = vpop.f32.mrf.mxu0
        %v4200 = vadd.f32 0.0, %v4199
        %4201 = vmatmul.bf16.gmra.mxu0 %v4119
        %v4202 = vpop.f32.mrf.mxu0
        %v4203 = vadd.f32 0.0, %v4202
        %v4204 = vpop.f32.mrf.mxu0
        %v4205 = vadd.f32 0.0, %v4204
        %4206 = vmatmul.bf16.gmra.mxu0 %v4122
        %v4207 = vpop.f32.mrf.mxu0
        %v4208 = vadd.f32 0.0, %v4207
        %v4209 = vpop.f32.mrf.mxu0
        %v4210 = vadd.f32 0.0, %v4209
        %4211 = vmatmul.bf16.gmra.mxu0 %v4125
        %v4212 = vpop.f32.mrf.mxu0
        %v4213 = vadd.f32 0.0, %v4212
        %v4214 = vpop.f32.mrf.mxu0
        %v4215 = vadd.f32 0.0, %v4214
        %4216 = vmatmul.bf16.gmra.mxu0 %v4128
        %v4217 = vpop.f32.mrf.mxu0
        %v4218 = vadd.f32 0.0, %v4217
        %v4219 = vpop.f32.mrf.mxu0
        %v4220 = vadd.f32 0.0, %v4219
        %4221 = vdwg.mxu0
        %v4222 = vadd.f32 %v3825, %v4143
        %v4223 = vadd.f32 %v3826, %v4145
        %v4224 = vadd.f32 %v3827, %v4148
        %v4225 = vadd.f32 %v3828, %v4150
        %v4226 = vadd.f32 %v3829, %v4153
        %v4227 = vadd.f32 %v3830, %v4155
        %v4228 = vadd.f32 %v3831, %v4158
        %v4229 = vadd.f32 %v3832, %v4160
        %v4230 = vadd.f32 %v3833, %v4163
        %v4231 = vadd.f32 %v3834, %v4165
        %v4232 = vadd.f32 %v3835, %v4168
        %v4233 = vadd.f32 %v3836, %v4170
        %v4234 = vadd.f32 %v3837, %v4173
        %v4235 = vadd.f32 %v3838, %v4175
        %v4236 = vadd.f32 %v3839, %v4178
        %v4237 = vadd.f32 %v3840, %v4180
        %v4238 = vadd.f32 %v3841, %v4183
        %v4239 = vadd.f32 %v3842, %v4185
        %v4240 = vadd.f32 %v3843, %v4188
        %v4241 = vadd.f32 %v3844, %v4190
        %v4242 = vadd.f32 %v3845, %v4193
        %v4243 = vadd.f32 %v3846, %v4195
        %v4244 = vadd.f32 %v3847, %v4198
        %v4245 = vadd.f32 %v3848, %v4200
        %v4246 = vadd.f32 %v3849, %v4203
        %v4247 = vadd.f32 %v3850, %v4205
        %v4248 = vadd.f32 %v3851, %v4208
        %v4249 = vadd.f32 %v3852, %v4210
        %v4250 = vadd.f32 %v3853, %v4213
        %v4251 = vadd.f32 %v3854, %v4215
        %v4252 = vadd.f32 %v3855, %v4218
        %v4253 = vadd.f32 %v3856, %v4220
        %4254 = vst [vmem:[%s210] sm:$0xff] %v4222
        %4255 = vst [vmem:[%s210 + $0x8] sm:$0xff] %v4223
        %4256 = vst [vmem:[%s210 + $0x10] sm:$0xff] %v4224
        %4257 = vst [vmem:[%s210 + $0x18] sm:$0xff] %v4225
        %4258 = vst [vmem:[%s210 + $0x20] sm:$0xff] %v4226
        %4259 = vst [vmem:[%s210 + $0x28] sm:$0xff] %v4227
        %4260 = vst [vmem:[%s210 + $0x30] sm:$0xff] %v4228
        %4261 = vst [vmem:[%s210 + $0x38] sm:$0xff] %v4229
        %4262 = vst [vmem:[%s210 + $0x40] sm:$0xff] %v4230
        %4263 = vst [vmem:[%s210 + $0x48] sm:$0xff] %v4231
        %4264 = vst [vmem:[%s210 + $0x50] sm:$0xff] %v4232
        %4265 = vst [vmem:[%s210 + $0x58] sm:$0xff] %v4233
        %4266 = vst [vmem:[%s210 + $0x60] sm:$0xff] %v4234
        %4267 = vst [vmem:[%s210 + $0x68] sm:$0xff] %v4235
        %4268 = vst [vmem:[%s210 + $0x70] sm:$0xff] %v4236
        %4269 = vst [vmem:[%s210 + $0x78] sm:$0xff] %v4237
        %4270 = vst [vmem:[%s210 + $0x80] sm:$0xff] %v4238
        %4271 = vst [vmem:[%s210 + $0x88] sm:$0xff] %v4239
        %4272 = vst [vmem:[%s210 + $0x90] sm:$0xff] %v4240
        %4273 = vst [vmem:[%s210 + $0x98] sm:$0xff] %v4241
        %4274 = vst [vmem:[%s210 + $0xa0] sm:$0xff] %v4242
        %4275 = vst [vmem:[%s210 + $0xa8] sm:$0xff] %v4243
        %4276 = vst [vmem:[%s210 + $0xb0] sm:$0xff] %v4244
        %4277 = vst [vmem:[%s210 + $0xb8] sm:$0xff] %v4245
        %4278 = vst [vmem:[%s210 + $0xc0] sm:$0xff] %v4246
        %4279 = vst [vmem:[%s210 + $0xc8] sm:$0xff] %v4247
        %4280 = vst [vmem:[%s210 + $0xd0] sm:$0xff] %v4248
        %4281 = vst [vmem:[%s210 + $0xd8] sm:$0xff] %v4249
        %4282 = vst [vmem:[%s210 + $0xe0] sm:$0xff] %v4250
        %4283 = vst [vmem:[%s210 + $0xe8] sm:$0xff] %v4251
        %4284 = vst [vmem:[%s210 + $0xf0] sm:$0xff] %v4252
        %4285 = vst [vmem:[%s210 + $0xf8] sm:$0xff] %v4253
        %s4286 = sand.u32 %s126, 1
        %s4287 = scalar_lea.sflag [#allocation3], %s4286
        %s4288 = sand.u32 %s126, 1
        %s4289 = smul.addr %s4288, 256
        %s4290 = scalar_lea.vmem [#allocation2], %s4289
        // Predicated region
        $region33: #{tpu_custom_call.1} parent=31 // pred_check
          %p4291 = pneg %p136
        $region34: #{tpu_custom_call.1} parent=31 // pred_check_branch
          %4293 = sbr.rel (%p4291) target = $region36
        $region35: #{tpu_custom_call.1} parent=31 // pred_region
          %s4294 = smul.u32 32, %s24
          %4296 = vsyncadd %s4287, 0
          %s4297 = sadd.s32 %s23, %s4294
          %s4298 = smul.addr %s22, 32
          %s4299 = sadd.s32 %s4297, %s4298
          %s4300 = smul.addr %s4299, 8
          %s4301 = scalar_lea.hbm %s3, %s4300
          %s4302 = sshll.u32 %s4290, 4
          %s4303 = int_to_ptr.vmem [resolvable:$true] %s4302
          %s4304 = sshll.u32 %s4301, 4
          %s4305 = int_to_ptr.hbm [resolvable:$true] %s4304
          %4310 = dma.vmem_to_hbm [thread:$0]  %s4303, 4096, %s4305, %s4287, 128, 128, 8
        $region36: #{tpu_custom_call.1} parent=31 // pred_fallthru
          _
      $region32: #{tpu_custom_call.1} parent=5 // pred_fallthru
        _
      %p4311 = scmp.le.s32.totalorder 2, %s12
      // Predicated region
      $region37: #{tpu_custom_call.1} parent=5 // pred_check
        %p4312 = pneg %p4311
      $region38: #{tpu_custom_call.1} parent=5 // pred_check_branch
        %4314 = sbr.rel (%p4312) target = $region40
      $region39: #{tpu_custom_call.1} parent=5 // pred_region
        %s4315 = ssub.s32 %s12, 2
        // Predicated region
        $region41: #{tpu_custom_call.1} parent=39 // pred_check
          %p4316 = pneg %p142
        $region42: #{tpu_custom_call.1} parent=39 // pred_check_branch
          %4318 = sbr.rel (%p4316) target = $region44
        $region43: #{tpu_custom_call.1} parent=39 // pred_region
          %s4319 = sand.u32 %s127, 1
          %s4320 = scalar_lea.sflag [#allocation3], %s4319
          %s4321 = sand.u32 %s127, 1
          %s4322 = smul.addr %s4321, 256
          %s4323 = scalar_lea.vmem [#allocation2], %s4322
          %4325 = dma.done %s4320, 4096
        $region44: #{tpu_custom_call.1} parent=39 // pred_fallthru
          _
      $region40: #{tpu_custom_call.1} parent=5 // pred_fallthru
        _
    $region6: #{tpu_custom_call.1} parent=1 // loop_footer
      %s16 = sadd.s32 1, %s12
    $region7: #{tpu_custom_call.1} parent=1 // loop_footer_branch
      %11 = sbr.rel target = $region3
    $region8: #{tpu_custom_call.1} parent=1 // loop_exit
      _
    %4326 = vsyncpa [#allocation3], 1
    %s4327 = scalar_lea.sflag [#allocation3], 1
    %4328 = vsyncpa %s4327, 1

</llo_original>
